<compile_context>
chip_gen: v5e
topology: v5e:2x2
jax: 0.10.0
libtpu: 0.0.40
codegen_flags: <defaults>
</compile_context>

<pallas_src>
import jax
import jax.numpy as jnp
from jax.experimental import pallas as pl
from jax.experimental.pallas import tpu as pltpu

C_PAD = 128    # lane-aligned channel width used for all internal layers
K1_PAD = 32    # conv1 contraction: 9 taps * 3 cin = 27, padded to 32


def fused_net_kernel(xcol_ref, w1_ref, b1_ref, w2_ref, b2_ref, w3_ref, b3_ref,
                     o_ref, a1p_ref, a2p_ref, col_ref):
    """Fused conv1+relu -> conv2+relu -> conv3+relu for ONE batch element.

    xcol_ref: (H*W, 32)       im2col of the 3-channel input (K padded 27->32)
    w1_ref:   (32, 128)       conv1 weights, taps folded into K
    w2_ref:   (1152, 128)     conv2 weights, taps folded into K, Cout 64->128
    w3_ref:   (1152, 128)     conv3 weights, taps folded into K (cin 64->128),
                              Cout padded 3->128
    b*_ref:   (1, 128)        biases (zero padded)
    o_ref:    (3, H*W)        output: NCHW with spatial flattened (lane-dense)
    a1p_ref:  (H+2, W+2, 128) VMEM scratch: zero-halo padded conv1 activation
    a2p_ref:  (H+2, W+2, 128) VMEM scratch: zero-halo padded conv2 activation
    col_ref:  (H*W, 1152)     VMEM scratch: shared im2col buffer (conv2/conv3)
    """
    Hp, Wp, C = a1p_ref.shape
    H, W = Hp - 2, Wp - 2
    M = H * W
    Cout = o_ref.shape[0]

    # ---------------- conv1: single matmul, K = 9*3 (padded to 32) ----------
    a1 = jnp.dot(xcol_ref[...], w1_ref[...], preferred_element_type=jnp.float32)
    a1 = jnp.maximum(a1 + b1_ref[...], 0.0)                       # (M, 128)

    # Zero the halo once, then write the interior (padding done in-kernel).
    a1p_ref[...] = jnp.zeros_like(a1p_ref)
    a1p_ref[1:H + 1, 1:W + 1, :] = a1.reshape(H, W, C)

    # ---------------- conv2: im2col into VMEM scratch, single matmul --------
    for dy in range(3):
        for dx in range(3):
            t = dy * 3 + dx
            col_ref[:, t * C:(t + 1) * C] = (
                a1p_ref[dy:dy + H, dx:dx + W, :].reshape(M, C))
    a2 = jnp.dot(col_ref[...], w2_ref[...], preferred_element_type=jnp.float32)
    a2 = jnp.maximum(a2 + b2_ref[...], 0.0)        # (M, 128); lanes >= 64 are 0

    a2p_ref[...] = jnp.zeros_like(a2p_ref)
    a2p_ref[1:H + 1, 1:W + 1, :] = a2.reshape(H, W, C)

    # ---------------- conv3: reuse the same im2col scratch ------------------
    for dy in range(3):
        for dx in range(3):
            t = dy * 3 + dx
            col_ref[:, t * C:(t + 1) * C] = (
                a2p_ref[dy:dy + H, dx:dx + W, :].reshape(M, C))
    a3 = jnp.dot(col_ref[...], w3_ref[...], preferred_element_type=jnp.float32)
    a3 = jnp.maximum(a3 + b3_ref[...], 0.0)        # (M, 128); only first 3 valid

    # -------- emit NCHW directly, lane-dense (3, H*W) with H*W = 256 --------
    o_ref[...] = jnp.transpose(a3, (1, 0))[:Cout, :].astype(o_ref.dtype)


def net_forward(x_nchw, params):
    """Full Net forward. Input/output NCHW (PyTorch convention)."""
    (w1, b1), (w2, b2), (w3, b3) = params
    N, Cin, H, W = x_nchw.shape
    C = C_PAD
    M = H * W
    K1 = 9 * Cin                                                   # 27

    # --- one-time im2col of the tiny raw input (avoids K=3 / Cin=3 layout) --
    x = jnp.transpose(x_nchw, (0, 2, 3, 1))                        # NHWC
    xp = jnp.pad(x, ((0, 0), (1, 1), (1, 1), (0, 0)))
    cols = [xp[:, dy:dy + H, dx:dx + W, :]
            for dy in range(3) for dx in range(3)]
    xcol = jnp.concatenate(cols, axis=-1).reshape(N, M, K1)
    xcol = jnp.pad(xcol, ((0, 0), (0, 0), (0, K1_PAD - K1)))       # (N, M, 32)

    # --- weights: fold taps into K, pad K / Cin / Cout to lane widths -------
    w1c = jnp.pad(w1.reshape(K1, C), ((0, K1_PAD - K1), (0, 0)))   # (32, 128)
    b1c = b1.reshape(1, C)

    w2c = jnp.pad(w2.reshape(9 * 128, 64), ((0, 0), (0, C - 64)))  # (1152, 128)
    b2c = jnp.pad(b2, (0, C - 64)).reshape(1, C)

    w3p = jnp.pad(w3, ((0, 0), (0, 0), (0, C - 64), (0, 0)))       # (3,3,128,3)
    w3c = jnp.pad(w3p.reshape(9 * C, 3), ((0, 0), (0, C - 3)))     # (1152, 128)
    b3c = jnp.pad(b3, (0, C - 3)).reshape(1, C)

    out = pl.pallas_call(
        fused_net_kernel,
        out_shape=jax.ShapeDtypeStruct((N, 3, M), x_nchw.dtype),
        grid=(N,),
        in_specs=[
            pl.BlockSpec((None, M, K1_PAD), lambda n: (n, 0, 0)),  # xcol
            pl.BlockSpec((K1_PAD, C), lambda n: (0, 0)),           # w1
            pl.BlockSpec((1, C), lambda n: (0, 0)),                # b1
            pl.BlockSpec((9 * C, C), lambda n: (0, 0)),            # w2
            pl.BlockSpec((1, C), lambda n: (0, 0)),                # b2
            pl.BlockSpec((9 * C, C), lambda n: (0, 0)),            # w3
            pl.BlockSpec((1, C), lambda n: (0, 0)),                # b3
        ],
        out_specs=pl.BlockSpec((None, 3, M), lambda n: (n, 0, 0)),
        scratch_shapes=[
            pltpu.VMEM((H + 2, W + 2, C), jnp.float32),   # padded conv1 act
            pltpu.VMEM((H + 2, W + 2, C), jnp.float32),   # padded conv2 act
            pltpu.VMEM((M, 9 * C), jnp.float32),          # shared im2col buf
        ],
        compiler_params=pltpu.CompilerParams(
            dimension_semantics=("parallel",)),
    )(xcol, w1c, b1c, w2c, b2c, w3c, b3c)

    return out.reshape(N, 3, H, W)


def init_params(key):
    """Deterministic params matching the PyTorch module's shapes (HWIO)."""
    shapes = [
        (3, 3, 3, 128),    # conv1 weight (H, W, Cin, Cout)
        (3, 3, 128, 64),   # conv2 weight
        (3, 3, 64, 3),     # conv3 weight
    ]
    params = []
    for shp in shapes:
        key, kw, kb = jax.random.split(key, 3)
        fan_in = shp[0] * shp[1] * shp[2]
        bound = 1.0 / jnp.sqrt(fan_in)
        w = jax.random.uniform(kw, shp, jnp.float32, -bound, bound)
        b = jax.random.uniform(kb, (shp[3],), jnp.float32, -bound, bound)
        params.append((w, b))
    return params


def _reference_forward(x_nchw, params):
    """Pure-JAX reference (lax conv) for correctness checking."""
    x = x_nchw
    for w, b in params:
        y = jax.lax.conv_general_dilated(
            x, w, window_strides=(1, 1), padding="SAME",
            dimension_numbers=("NCHW", "HWIO", "NCHW"))
        x = jnp.maximum(y + b[None, :, None, None], 0.0)
    return x


if __name__ == "__main__":
    key = jax.random.PRNGKey(0)
    key, kx = jax.random.split(key)
    # Small input consistent with the module: batch=2, 3 channels, 16x16.
    x = jax.random.normal(kx, (2, 3, 16, 16), jnp.float32)
    params = init_params(key)

    out = jax.jit(net_forward)(x, params)
    out = jax.block_until_ready(out)

    ref = _reference_forward(x, params)
    assert out.shape == (2, 3, 16, 16)
    assert jnp.allclose(out, ref, atol=1e-3, rtol=1e-3), "mismatch vs reference"

    print("KERNEL_OK")
</pallas_src>

<mosaic_0001>
module attributes {stable_mosaic.version = 11 : i64} {
  func.func @fused_net_kernel(%arg0: i32, %arg1: memref<1x256x32xf32, #tpu.memory_space<vmem>>, %arg2: memref<32x128xf32, #tpu.memory_space<vmem>>, %arg3: memref<1x128xf32, #tpu.memory_space<vmem>>, %arg4: memref<1152x128xf32, #tpu.memory_space<vmem>>, %arg5: memref<1x128xf32, #tpu.memory_space<vmem>>, %arg6: memref<1152x128xf32, #tpu.memory_space<vmem>>, %arg7: memref<1x128xf32, #tpu.memory_space<vmem>>, %arg8: memref<1x3x256xf32, #tpu.memory_space<vmem>>, %arg9: memref<18x18x128xf32, #tpu.memory_space<vmem>>, %arg10: memref<18x18x128xf32, #tpu.memory_space<vmem>>, %arg11: memref<256x1152xf32, #tpu.memory_space<vmem>>) attributes {dimension_semantics = [#tpu.dimension_semantics<parallel>], iteration_bounds = array<i64: 2>, scalar_prefetch = 0 : i64, scratch_operands = 3 : i64, tpu.core_type = #tpu.core_type<tc>, window_params = [{transform_indices = @transform_0, window_bounds = array<i64: 1, 256, 32>}, {pipeline_mode = #tpu.pipeline_mode<synchronous>, transform_indices = @transform_1, window_bounds = array<i64: 32, 128>}, {pipeline_mode = #tpu.pipeline_mode<synchronous>, transform_indices = @transform_2, window_bounds = array<i64: 1, 128>}, {pipeline_mode = #tpu.pipeline_mode<synchronous>, transform_indices = @transform_3, window_bounds = array<i64: 1152, 128>}, {pipeline_mode = #tpu.pipeline_mode<synchronous>, transform_indices = @transform_4, window_bounds = array<i64: 1, 128>}, {pipeline_mode = #tpu.pipeline_mode<synchronous>, transform_indices = @transform_5, window_bounds = array<i64: 1152, 128>}, {pipeline_mode = #tpu.pipeline_mode<synchronous>, transform_indices = @transform_6, window_bounds = array<i64: 1, 128>}, {transform_indices = @transform_7, window_bounds = array<i64: 1, 3, 256>}]} {
    %c0 = arith.constant 0 : index
    %c0_0 = arith.constant 0 : index
    %c0_1 = arith.constant 0 : index
    %0 = vector.load %arg1[%c0, %c0_0, %c0_1] : memref<1x256x32xf32, #tpu.memory_space<vmem>>, vector<1x256x32xf32>
    %1 = vector.shape_cast %0 : vector<1x256x32xf32> to vector<256x32xf32>
    %c0_2 = arith.constant 0 : index
    %c0_3 = arith.constant 0 : index
    %2 = vector.load %arg2[%c0_2, %c0_3] : memref<32x128xf32, #tpu.memory_space<vmem>>, vector<32x128xf32>
    %cst = arith.constant dense<0.000000e+00> : vector<256x128xf32>
    %3 = tpu.matmul %1, %2, %cst {dimension_numbers = #tpu.dot_dimension_numbers<[1], [0], [0], [1], [0, 0, 1, 1], [], []>} : vector<256x32xf32>, vector<32x128xf32>, vector<256x128xf32> -> vector<256x128xf32>
    %c0_4 = arith.constant 0 : index
    %c0_5 = arith.constant 0 : index
    %4 = vector.load %arg3[%c0_4, %c0_5] : memref<1x128xf32, #tpu.memory_space<vmem>>, vector<1x128xf32>
    %5 = vector.broadcast %4 : vector<1x128xf32> to vector<256x128xf32>
    %6 = arith.addf %3, %5 : vector<256x128xf32>
    %cst_6 = arith.constant 0.000000e+00 : f32
    %7 = vector.broadcast %cst_6 : f32 to vector<256x128xf32>
    %8 = arith.maximumf %6, %7 : vector<256x128xf32>
    %cst_7 = arith.constant 0.000000e+00 : f32
    %9 = vector.broadcast %cst_7 : f32 to vector<18x18x128xf32>
    %c0_8 = arith.constant 0 : index
    %c0_9 = arith.constant 0 : index
    %c0_10 = arith.constant 0 : index
    %10 = vector.load %arg9[%c0_8, %c0_9, %c0_10] : memref<18x18x128xf32, #tpu.memory_space<vmem>>, vector<18x18x128xf32>
    tpu.vector_store %arg9[%c0_8, %c0_9, %c0_10], %9 {strides = array<i32>} : memref<18x18x128xf32, #tpu.memory_space<vmem>>, vector<18x18x128xf32>,
    %11 = vector.shape_cast %8 : vector<256x128xf32> to vector<16x16x128xf32>
    %c1 = arith.constant 1 : index
    %c1_11 = arith.constant 1 : index
    %c0_12 = arith.constant 0 : index
    %12 = vector.load %arg9[%c1, %c1_11, %c0_12] : memref<18x18x128xf32, #tpu.memory_space<vmem>>, vector<16x16x128xf32>
    tpu.vector_store %arg9[%c1, %c1_11, %c0_12], %11 {strides = array<i32>} : memref<18x18x128xf32, #tpu.memory_space<vmem>>, vector<16x16x128xf32>,
    %c0_13 = arith.constant 0 : index
    %c0_14 = arith.constant 0 : index
    %c0_15 = arith.constant 0 : index
    %13 = vector.load %arg9[%c0_13, %c0_14, %c0_15] : memref<18x18x128xf32, #tpu.memory_space<vmem>>, vector<16x16x128xf32>
    %14 = vector.shape_cast %13 : vector<16x16x128xf32> to vector<256x128xf32>
    %c0_16 = arith.constant 0 : index
    %c0_17 = arith.constant 0 : index
    %15 = vector.load %arg11[%c0_16, %c0_17] : memref<256x1152xf32, #tpu.memory_space<vmem>>, vector<256x128xf32>
    tpu.vector_store %arg11[%c0_16, %c0_17], %14 {strides = array<i32>} : memref<256x1152xf32, #tpu.memory_space<vmem>>, vector<256x128xf32>,
    %c0_18 = arith.constant 0 : index
    %c1_19 = arith.constant 1 : index
    %c0_20 = arith.constant 0 : index
    %16 = vector.load %arg9[%c0_18, %c1_19, %c0_20] : memref<18x18x128xf32, #tpu.memory_space<vmem>>, vector<16x16x128xf32>
    %17 = vector.shape_cast %16 : vector<16x16x128xf32> to vector<256x128xf32>
    %c0_21 = arith.constant 0 : index
    %c128 = arith.constant 128 : index
    %18 = vector.load %arg11[%c0_21, %c128] : memref<256x1152xf32, #tpu.memory_space<vmem>>, vector<256x128xf32>
    tpu.vector_store %arg11[%c0_21, %c128], %17 {strides = array<i32>} : memref<256x1152xf32, #tpu.memory_space<vmem>>, vector<256x128xf32>,
    %c0_22 = arith.constant 0 : index
    %c2 = arith.constant 2 : index
    %c0_23 = arith.constant 0 : index
    %19 = vector.load %arg9[%c0_22, %c2, %c0_23] : memref<18x18x128xf32, #tpu.memory_space<vmem>>, vector<16x16x128xf32>
    %20 = vector.shape_cast %19 : vector<16x16x128xf32> to vector<256x128xf32>
    %c0_24 = arith.constant 0 : index
    %c256 = arith.constant 256 : index
    %21 = vector.load %arg11[%c0_24, %c256] : memref<256x1152xf32, #tpu.memory_space<vmem>>, vector<256x128xf32>
    tpu.vector_store %arg11[%c0_24, %c256], %20 {strides = array<i32>} : memref<256x1152xf32, #tpu.memory_space<vmem>>, vector<256x128xf32>,
    %c1_25 = arith.constant 1 : index
    %c0_26 = arith.constant 0 : index
    %c0_27 = arith.constant 0 : index
    %22 = vector.load %arg9[%c1_25, %c0_26, %c0_27] : memref<18x18x128xf32, #tpu.memory_space<vmem>>, vector<16x16x128xf32>
    %23 = vector.shape_cast %22 : vector<16x16x128xf32> to vector<256x128xf32>
    %c0_28 = arith.constant 0 : index
    %c384 = arith.constant 384 : index
    %24 = vector.load %arg11[%c0_28, %c384] : memref<256x1152xf32, #tpu.memory_space<vmem>>, vector<256x128xf32>
    tpu.vector_store %arg11[%c0_28, %c384], %23 {strides = array<i32>} : memref<256x1152xf32, #tpu.memory_space<vmem>>, vector<256x128xf32>,
    %c1_29 = arith.constant 1 : index
    %c1_30 = arith.constant 1 : index
    %c0_31 = arith.constant 0 : index
    %25 = vector.load %arg9[%c1_29, %c1_30, %c0_31] : memref<18x18x128xf32, #tpu.memory_space<vmem>>, vector<16x16x128xf32>
    %26 = vector.shape_cast %25 : vector<16x16x128xf32> to vector<256x128xf32>
    %c0_32 = arith.constant 0 : index
    %c512 = arith.constant 512 : index
    %27 = vector.load %arg11[%c0_32, %c512] : memref<256x1152xf32, #tpu.memory_space<vmem>>, vector<256x128xf32>
    tpu.vector_store %arg11[%c0_32, %c512], %26 {strides = array<i32>} : memref<256x1152xf32, #tpu.memory_space<vmem>>, vector<256x128xf32>,
    %c1_33 = arith.constant 1 : index
    %c2_34 = arith.constant 2 : index
    %c0_35 = arith.constant 0 : index
    %28 = vector.load %arg9[%c1_33, %c2_34, %c0_35] : memref<18x18x128xf32, #tpu.memory_space<vmem>>, vector<16x16x128xf32>
    %29 = vector.shape_cast %28 : vector<16x16x128xf32> to vector<256x128xf32>
    %c0_36 = arith.constant 0 : index
    %c640 = arith.constant 640 : index
    %30 = vector.load %arg11[%c0_36, %c640] : memref<256x1152xf32, #tpu.memory_space<vmem>>, vector<256x128xf32>
    tpu.vector_store %arg11[%c0_36, %c640], %29 {strides = array<i32>} : memref<256x1152xf32, #tpu.memory_space<vmem>>, vector<256x128xf32>,
    %c2_37 = arith.constant 2 : index
    %c0_38 = arith.constant 0 : index
    %c0_39 = arith.constant 0 : index
    %31 = vector.load %arg9[%c2_37, %c0_38, %c0_39] : memref<18x18x128xf32, #tpu.memory_space<vmem>>, vector<16x16x128xf32>
    %32 = vector.shape_cast %31 : vector<16x16x128xf32> to vector<256x128xf32>
    %c0_40 = arith.constant 0 : index
    %c768 = arith.constant 768 : index
    %33 = vector.load %arg11[%c0_40, %c768] : memref<256x1152xf32, #tpu.memory_space<vmem>>, vector<256x128xf32>
    tpu.vector_store %arg11[%c0_40, %c768], %32 {strides = array<i32>} : memref<256x1152xf32, #tpu.memory_space<vmem>>, vector<256x128xf32>,
    %c2_41 = arith.constant 2 : index
    %c1_42 = arith.constant 1 : index
    %c0_43 = arith.constant 0 : index
    %34 = vector.load %arg9[%c2_41, %c1_42, %c0_43] : memref<18x18x128xf32, #tpu.memory_space<vmem>>, vector<16x16x128xf32>
    %35 = vector.shape_cast %34 : vector<16x16x128xf32> to vector<256x128xf32>
    %c0_44 = arith.constant 0 : index
    %c896 = arith.constant 896 : index
    %36 = vector.load %arg11[%c0_44, %c896] : memref<256x1152xf32, #tpu.memory_space<vmem>>, vector<256x128xf32>
    tpu.vector_store %arg11[%c0_44, %c896], %35 {strides = array<i32>} : memref<256x1152xf32, #tpu.memory_space<vmem>>, vector<256x128xf32>,
    %c2_45 = arith.constant 2 : index
    %c2_46 = arith.constant 2 : index
    %c0_47 = arith.constant 0 : index
    %37 = vector.load %arg9[%c2_45, %c2_46, %c0_47] : memref<18x18x128xf32, #tpu.memory_space<vmem>>, vector<16x16x128xf32>
    %38 = vector.shape_cast %37 : vector<16x16x128xf32> to vector<256x128xf32>
    %c0_48 = arith.constant 0 : index
    %c1024 = arith.constant 1024 : index
    %39 = vector.load %arg11[%c0_48, %c1024] : memref<256x1152xf32, #tpu.memory_space<vmem>>, vector<256x128xf32>
    tpu.vector_store %arg11[%c0_48, %c1024], %38 {strides = array<i32>} : memref<256x1152xf32, #tpu.memory_space<vmem>>, vector<256x128xf32>,
    %c0_49 = arith.constant 0 : index
    %c0_50 = arith.constant 0 : index
    %40 = vector.load %arg11[%c0_49, %c0_50] : memref<256x1152xf32, #tpu.memory_space<vmem>>, vector<256x1152xf32>
    %c0_51 = arith.constant 0 : index
    %c0_52 = arith.constant 0 : index
    %41 = vector.load %arg4[%c0_51, %c0_52] : memref<1152x128xf32, #tpu.memory_space<vmem>>, vector<1152x128xf32>
    %cst_53 = arith.constant dense<0.000000e+00> : vector<256x128xf32>
    %42 = tpu.matmul %40, %41, %cst_53 {dimension_numbers = #tpu.dot_dimension_numbers<[1], [0], [0], [1], [0, 0, 1, 1], [], []>} : vector<256x1152xf32>, vector<1152x128xf32>, vector<256x128xf32> -> vector<256x128xf32>
    %c0_54 = arith.constant 0 : index
    %c0_55 = arith.constant 0 : index
    %43 = vector.load %arg5[%c0_54, %c0_55] : memref<1x128xf32, #tpu.memory_space<vmem>>, vector<1x128xf32>
    %44 = vector.broadcast %43 : vector<1x128xf32> to vector<256x128xf32>
    %45 = arith.addf %42, %44 : vector<256x128xf32>
    %cst_56 = arith.constant 0.000000e+00 : f32
    %46 = vector.broadcast %cst_56 : f32 to vector<256x128xf32>
    %47 = arith.maximumf %45, %46 : vector<256x128xf32>
    %cst_57 = arith.constant 0.000000e+00 : f32
    %48 = vector.broadcast %cst_57 : f32 to vector<18x18x128xf32>
    %c0_58 = arith.constant 0 : index
    %c0_59 = arith.constant 0 : index
    %c0_60 = arith.constant 0 : index
    %49 = vector.load %arg10[%c0_58, %c0_59, %c0_60] : memref<18x18x128xf32, #tpu.memory_space<vmem>>, vector<18x18x128xf32>
    tpu.vector_store %arg10[%c0_58, %c0_59, %c0_60], %48 {strides = array<i32>} : memref<18x18x128xf32, #tpu.memory_space<vmem>>, vector<18x18x128xf32>,
    %50 = vector.shape_cast %47 : vector<256x128xf32> to vector<16x16x128xf32>
    %c1_61 = arith.constant 1 : index
    %c1_62 = arith.constant 1 : index
    %c0_63 = arith.constant 0 : index
    %51 = vector.load %arg10[%c1_61, %c1_62, %c0_63] : memref<18x18x128xf32, #tpu.memory_space<vmem>>, vector<16x16x128xf32>
    tpu.vector_store %arg10[%c1_61, %c1_62, %c0_63], %50 {strides = array<i32>} : memref<18x18x128xf32, #tpu.memory_space<vmem>>, vector<16x16x128xf32>,
    %c0_64 = arith.constant 0 : index
    %c0_65 = arith.constant 0 : index
    %c0_66 = arith.constant 0 : index
    %52 = vector.load %arg10[%c0_64, %c0_65, %c0_66] : memref<18x18x128xf32, #tpu.memory_space<vmem>>, vector<16x16x128xf32>
    %53 = vector.shape_cast %52 : vector<16x16x128xf32> to vector<256x128xf32>
    %c0_67 = arith.constant 0 : index
    %c0_68 = arith.constant 0 : index
    %54 = vector.load %arg11[%c0_67, %c0_68] : memref<256x1152xf32, #tpu.memory_space<vmem>>, vector<256x128xf32>
    tpu.vector_store %arg11[%c0_67, %c0_68], %53 {strides = array<i32>} : memref<256x1152xf32, #tpu.memory_space<vmem>>, vector<256x128xf32>,
    %c0_69 = arith.constant 0 : index
    %c1_70 = arith.constant 1 : index
    %c0_71 = arith.constant 0 : index
    %55 = vector.load %arg10[%c0_69, %c1_70, %c0_71] : memref<18x18x128xf32, #tpu.memory_space<vmem>>, vector<16x16x128xf32>
    %56 = vector.shape_cast %55 : vector<16x16x128xf32> to vector<256x128xf32>
    %c0_72 = arith.constant 0 : index
    %c128_73 = arith.constant 128 : index
    %57 = vector.load %arg11[%c0_72, %c128_73] : memref<256x1152xf32, #tpu.memory_space<vmem>>, vector<256x128xf32>
    tpu.vector_store %arg11[%c0_72, %c128_73], %56 {strides = array<i32>} : memref<256x1152xf32, #tpu.memory_space<vmem>>, vector<256x128xf32>,
    %c0_74 = arith.constant 0 : index
    %c2_75 = arith.constant 2 : index
    %c0_76 = arith.constant 0 : index
    %58 = vector.load %arg10[%c0_74, %c2_75, %c0_76] : memref<18x18x128xf32, #tpu.memory_space<vmem>>, vector<16x16x128xf32>
    %59 = vector.shape_cast %58 : vector<16x16x128xf32> to vector<256x128xf32>
    %c0_77 = arith.constant 0 : index
    %c256_78 = arith.constant 256 : index
    %60 = vector.load %arg11[%c0_77, %c256_78] : memref<256x1152xf32, #tpu.memory_space<vmem>>, vector<256x128xf32>
    tpu.vector_store %arg11[%c0_77, %c256_78], %59 {strides = array<i32>} : memref<256x1152xf32, #tpu.memory_space<vmem>>, vector<256x128xf32>,
    %c1_79 = arith.constant 1 : index
    %c0_80 = arith.constant 0 : index
    %c0_81 = arith.constant 0 : index
    %61 = vector.load %arg10[%c1_79, %c0_80, %c0_81] : memref<18x18x128xf32, #tpu.memory_space<vmem>>, vector<16x16x128xf32>
    %62 = vector.shape_cast %61 : vector<16x16x128xf32> to vector<256x128xf32>
    %c0_82 = arith.constant 0 : index
    %c384_83 = arith.constant 384 : index
    %63 = vector.load %arg11[%c0_82, %c384_83] : memref<256x1152xf32, #tpu.memory_space<vmem>>, vector<256x128xf32>
    tpu.vector_store %arg11[%c0_82, %c384_83], %62 {strides = array<i32>} : memref<256x1152xf32, #tpu.memory_space<vmem>>, vector<256x128xf32>,
    %c1_84 = arith.constant 1 : index
    %c1_85 = arith.constant 1 : index
    %c0_86 = arith.constant 0 : index
    %64 = vector.load %arg10[%c1_84, %c1_85, %c0_86] : memref<18x18x128xf32, #tpu.memory_space<vmem>>, vector<16x16x128xf32>
    %65 = vector.shape_cast %64 : vector<16x16x128xf32> to vector<256x128xf32>
    %c0_87 = arith.constant 0 : index
    %c512_88 = arith.constant 512 : index
    %66 = vector.load %arg11[%c0_87, %c512_88] : memref<256x1152xf32, #tpu.memory_space<vmem>>, vector<256x128xf32>
    tpu.vector_store %arg11[%c0_87, %c512_88], %65 {strides = array<i32>} : memref<256x1152xf32, #tpu.memory_space<vmem>>, vector<256x128xf32>,
    %c1_89 = arith.constant 1 : index
    %c2_90 = arith.constant 2 : index
    %c0_91 = arith.constant 0 : index
    %67 = vector.load %arg10[%c1_89, %c2_90, %c0_91] : memref<18x18x128xf32, #tpu.memory_space<vmem>>, vector<16x16x128xf32>
    %68 = vector.shape_cast %67 : vector<16x16x128xf32> to vector<256x128xf32>
    %c0_92 = arith.constant 0 : index
    %c640_93 = arith.constant 640 : index
    %69 = vector.load %arg11[%c0_92, %c640_93] : memref<256x1152xf32, #tpu.memory_space<vmem>>, vector<256x128xf32>
    tpu.vector_store %arg11[%c0_92, %c640_93], %68 {strides = array<i32>} : memref<256x1152xf32, #tpu.memory_space<vmem>>, vector<256x128xf32>,
    %c2_94 = arith.constant 2 : index
    %c0_95 = arith.constant 0 : index
    %c0_96 = arith.constant 0 : index
    %70 = vector.load %arg10[%c2_94, %c0_95, %c0_96] : memref<18x18x128xf32, #tpu.memory_space<vmem>>, vector<16x16x128xf32>
    %71 = vector.shape_cast %70 : vector<16x16x128xf32> to vector<256x128xf32>
    %c0_97 = arith.constant 0 : index
    %c768_98 = arith.constant 768 : index
    %72 = vector.load %arg11[%c0_97, %c768_98] : memref<256x1152xf32, #tpu.memory_space<vmem>>, vector<256x128xf32>
    tpu.vector_store %arg11[%c0_97, %c768_98], %71 {strides = array<i32>} : memref<256x1152xf32, #tpu.memory_space<vmem>>, vector<256x128xf32>,
    %c2_99 = arith.constant 2 : index
    %c1_100 = arith.constant 1 : index
    %c0_101 = arith.constant 0 : index
    %73 = vector.load %arg10[%c2_99, %c1_100, %c0_101] : memref<18x18x128xf32, #tpu.memory_space<vmem>>, vector<16x16x128xf32>
    %74 = vector.shape_cast %73 : vector<16x16x128xf32> to vector<256x128xf32>
    %c0_102 = arith.constant 0 : index
    %c896_103 = arith.constant 896 : index
    %75 = vector.load %arg11[%c0_102, %c896_103] : memref<256x1152xf32, #tpu.memory_space<vmem>>, vector<256x128xf32>
    tpu.vector_store %arg11[%c0_102, %c896_103], %74 {strides = array<i32>} : memref<256x1152xf32, #tpu.memory_space<vmem>>, vector<256x128xf32>,
    %c2_104 = arith.constant 2 : index
    %c2_105 = arith.constant 2 : index
    %c0_106 = arith.constant 0 : index
    %76 = vector.load %arg10[%c2_104, %c2_105, %c0_106] : memref<18x18x128xf32, #tpu.memory_space<vmem>>, vector<16x16x128xf32>
    %77 = vector.shape_cast %76 : vector<16x16x128xf32> to vector<256x128xf32>
    %c0_107 = arith.constant 0 : index
    %c1024_108 = arith.constant 1024 : index
    %78 = vector.load %arg11[%c0_107, %c1024_108] : memref<256x1152xf32, #tpu.memory_space<vmem>>, vector<256x128xf32>
    tpu.vector_store %arg11[%c0_107, %c1024_108], %77 {strides = array<i32>} : memref<256x1152xf32, #tpu.memory_space<vmem>>, vector<256x128xf32>,
    %c0_109 = arith.constant 0 : index
    %c0_110 = arith.constant 0 : index
    %79 = vector.load %arg11[%c0_109, %c0_110] : memref<256x1152xf32, #tpu.memory_space<vmem>>, vector<256x1152xf32>
    %c0_111 = arith.constant 0 : index
    %c0_112 = arith.constant 0 : index
    %80 = vector.load %arg6[%c0_111, %c0_112] : memref<1152x128xf32, #tpu.memory_space<vmem>>, vector<1152x128xf32>
    %cst_113 = arith.constant dense<0.000000e+00> : vector<256x128xf32>
    %81 = tpu.matmul %79, %80, %cst_113 {dimension_numbers = #tpu.dot_dimension_numbers<[1], [0], [0], [1], [0, 0, 1, 1], [], []>} : vector<256x1152xf32>, vector<1152x128xf32>, vector<256x128xf32> -> vector<256x128xf32>
    %c0_114 = arith.constant 0 : index
    %c0_115 = arith.constant 0 : index
    %82 = vector.load %arg7[%c0_114, %c0_115] : memref<1x128xf32, #tpu.memory_space<vmem>>, vector<1x128xf32>
    %83 = vector.broadcast %82 : vector<1x128xf32> to vector<256x128xf32>
    %84 = arith.addf %81, %83 : vector<256x128xf32>
    %cst_116 = arith.constant 0.000000e+00 : f32
    %85 = vector.broadcast %cst_116 : f32 to vector<256x128xf32>
    %86 = arith.maximumf %84, %85 : vector<256x128xf32>
    %87 = tpu.transpose %86, [1, 0] : vector<256x128xf32> -> vector<128x256xf32>
    %88 = vector.extract_strided_slice %87 {offsets = [0, 0], sizes = [3, 256], strides = [1, 1]} : vector<128x256xf32> to vector<3x256xf32>
    %c0_117 = arith.constant 0 : index
    %c0_118 = arith.constant 0 : index
    %c0_119 = arith.constant 0 : index
    %89 = vector.load %arg8[%c0_117, %c0_118, %c0_119] : memref<1x3x256xf32, #tpu.memory_space<vmem>>, vector<1x3x256xf32>
    %90 = vector.shape_cast %89 : vector<1x3x256xf32> to vector<3x256xf32>
    %91 = vector.shape_cast %88 : vector<3x256xf32> to vector<1x3x256xf32>
    tpu.vector_store %arg8[%c0_117, %c0_118, %c0_119], %91 {strides = array<i32>} : memref<1x3x256xf32, #tpu.memory_space<vmem>>, vector<1x3x256xf32>,
    return
  }
  func.func @transform_0(%arg0: i32) -> (i32, i32, i32) {
    %c0_i32 = arith.constant 0 : i32
    %c0_i32_0 = arith.constant 0 : i32
    %c0_i32_1 = arith.constant 0 : i32
    return %arg0, %c0_i32, %c0_i32_0 : i32, i32, i32
  }
  func.func @transform_1(%arg0: i32) -> (i32, i32) {
    %c0_i32 = arith.constant 0 : i32
    %c0_i32_0 = arith.constant 0 : i32
    %c0_i32_1 = arith.constant 0 : i32
    return %c0_i32, %c0_i32_0 : i32, i32
  }
  func.func @transform_2(%arg0: i32) -> (i32, i32) {
    %c0_i32 = arith.constant 0 : i32
    %c0_i32_0 = arith.constant 0 : i32
    %c0_i32_1 = arith.constant 0 : i32
    return %c0_i32, %c0_i32_0 : i32, i32
  }
  func.func @transform_3(%arg0: i32) -> (i32, i32) {
    %c0_i32 = arith.constant 0 : i32
    %c0_i32_0 = arith.constant 0 : i32
    %c0_i32_1 = arith.constant 0 : i32
    return %c0_i32, %c0_i32_0 : i32, i32
  }
  func.func @transform_4(%arg0: i32) -> (i32, i32) {
    %c0_i32 = arith.constant 0 : i32
    %c0_i32_0 = arith.constant 0 : i32
    %c0_i32_1 = arith.constant 0 : i32
    return %c0_i32, %c0_i32_0 : i32, i32
  }
  func.func @transform_5(%arg0: i32) -> (i32, i32) {
    %c0_i32 = arith.constant 0 : i32
    %c0_i32_0 = arith.constant 0 : i32
    %c0_i32_1 = arith.constant 0 : i32
    return %c0_i32, %c0_i32_0 : i32, i32
  }
  func.func @transform_6(%arg0: i32) -> (i32, i32) {
    %c0_i32 = arith.constant 0 : i32
    %c0_i32_0 = arith.constant 0 : i32
    %c0_i32_1 = arith.constant 0 : i32
    return %c0_i32, %c0_i32_0 : i32, i32
  }
  func.func @transform_7(%arg0: i32) -> (i32, i32, i32) {
    %c0_i32 = arith.constant 0 : i32
    %c0_i32_0 = arith.constant 0 : i32
    %c0_i32_1 = arith.constant 0 : i32
    return %arg0, %c0_i32, %c0_i32_0 : i32, i32, i32
  }
}

</mosaic_0001>

<llo_original>
// kernel: net_forward.1
$region0: #{net_forward.1}
  #allocation0 [shape = 'u32[]', space=smem, size = 0x4, offset = 0x4, fixed_abs, tag = 'smem constant byte address 0x4 - core index']
  #allocation1 [shape = 'u32[72,128]{1,0:T(1,128)}', space=vmem, size = 0x9000, scoped, tag = 'internal scratch']
  #allocation2 [shape = 'f32[18,18,128]{2,1,0:T(8,128)}', space=vmem, size = 0x36000, scoped, tag = 'scratch operand']
  #allocation3 [shape = 'f32[18,18,128]{2,1,0:T(8,128)}', space=vmem, size = 0x36000, scoped, tag = 'scratch operand']
  #allocation4 [shape = 'f32[256,1152]{1,0:T(8,128)}', space=vmem, size = 0x120000, scoped, tag = 'scratch operand']
  %s0 = inlined_call_operand.vmem [shape: f32[2,256,32], index: 0, kind: input, shape index: {}]
  %s1 = inlined_call_operand.vmem [shape: f32[32,128], index: 1, kind: input, shape index: {}]
  %s2 = inlined_call_operand.vmem [shape: f32[1,128], index: 2, kind: input, shape index: {}]
  %s3 = inlined_call_operand.vmem [shape: f32[1152,128], index: 3, kind: input, shape index: {}]
  %s4 = inlined_call_operand.vmem [shape: f32[1,128], index: 4, kind: input, shape index: {}]
  %s5 = inlined_call_operand.vmem [shape: f32[1152,128], index: 5, kind: input, shape index: {}]
  %s6 = inlined_call_operand.vmem [shape: f32[1,128], index: 6, kind: input, shape index: {}]
  %s7 = inlined_call_operand.vmem [shape: f32[2,3,256], index: 7, kind: output, shape index: {}]
  %s8 = sld [smem:[#allocation0]]
  $region61: #{net_forward.1} parent=0
    _
  %s10 = ssub.s32 1, %s8
  %s11 = scalar_select 0, %s10, %s8
  loop: start=0, step=1, limit=4
  $region2: #{net_forward.1} parent=0 // loop_pre_header
    _
  $region3: #{net_forward.1} parent=0 // loop_header
    %s13 = sphi 0, %s17
    %p14 = scmp.ge.s32.totalorder %s13, 4
    %s23 = sphi 0, %s25
    %s26 = sphi 0, %s23
    %s27 = sphi 0, %s26
    %s43 = sphi 0, %s27
    %s47 = sphi 0, %s47
    %s49 = sphi 0, %s47
    %s50 = sphi 0, %s49
    %s64 = sphi 0, %s50
    %s68 = sphi 0, %s68
    %s70 = sphi 0, %s68
    %s71 = sphi 0, %s70
    %s85 = sphi 0, %s71
    %s89 = sphi 0, %s89
    %s91 = sphi 0, %s89
    %s92 = sphi 0, %s91
    %s106 = sphi 0, %s92
    %s110 = sphi 0, %s110
    %s112 = sphi 0, %s110
    %s113 = sphi 0, %s112
    %s127 = sphi 0, %s113
    %s131 = sphi 0, %s131
    %s133 = sphi 0, %s131
    %s134 = sphi 0, %s133
    %s148 = sphi 0, %s134
    %s152 = sphi 0, %s152
    %s154 = sphi 0, %s152
    %s155 = sphi 0, %s154
    %s169 = sphi 0, %s155
    %s175 = sphi 0, %s177
    %s178 = sphi 0, %s175
    %s179 = sphi 0, %s178
    %s195 = sphi 0, %s179
  $region4: #{net_forward.1} parent=0 // loop_header_branch
    %16 = sbr.rel (%p14) target = $region8
  $region5: #{net_forward.1} parent=0 // loop_body
    %s18 = ssub.s32 %s13, 1
    %s19 = ssub.s32 %s13, 2
    %s20 = sadd.s32 %s13, 1
    %s21 = ssub.s32 %s13, %s20
    %p22 = scmp.eq.s32.totalorder %s21, 0
    %s24 = sadd.s32 %s23, 1
    %s25 = scalar_select %p22, %s23, %s24
    %p28 = pneg %p22
    %p29 = scmp.eq.s32.totalorder %s13, 1
    %p30 = por %p28, %p29
    %p31 = scmp.ne.s32.totalorder %s23, %s26
    %p32 = scmp.eq.s32.totalorder %s13, 0
    %p33 = por %p31, %p32
    %p34 = scmp.ne.s32.totalorder %s23, %s26
    %p35 = scmp.eq.s32.totalorder %s18, 1
    %p36 = por %p34, %p35
    %p37 = scmp.ne.s32.totalorder %s26, %s27
    %p38 = scmp.eq.s32.totalorder %s18, 0
    %p39 = por %p37, %p38
    %p40 = scmp.ne.s32.totalorder %s26, %s27
    %p41 = scmp.eq.s32.totalorder %s19, 1
    %p42 = por %p40, %p41
    %p44 = scmp.ne.s32.totalorder %s27, %s43
    %p45 = scmp.eq.s32.totalorder %s19, 0
    %p46 = por %p44, %p45
    %s48 = sadd.s32 %s47, 1
    %p51 = scmp.eq.s32.totalorder %s13, 1
    %p52 = scmp.ne.s32.totalorder %s47, %s49
    %p53 = scmp.eq.s32.totalorder %s13, 0
    %p54 = por %p52, %p53
    %p55 = scmp.ne.s32.totalorder %s47, %s49
    %p56 = scmp.eq.s32.totalorder %s18, 1
    %p57 = por %p55, %p56
    %p58 = scmp.ne.s32.totalorder %s49, %s50
    %p59 = scmp.eq.s32.totalorder %s18, 0
    %p60 = por %p58, %p59
    %p61 = scmp.ne.s32.totalorder %s49, %s50
    %p62 = scmp.eq.s32.totalorder %s19, 1
    %p63 = por %p61, %p62
    %p65 = scmp.ne.s32.totalorder %s50, %s64
    %p66 = scmp.eq.s32.totalorder %s19, 0
    %p67 = por %p65, %p66
    %s69 = sadd.s32 %s68, 1
    %p72 = scmp.eq.s32.totalorder %s13, 1
    %p73 = scmp.ne.s32.totalorder %s68, %s70
    %p74 = scmp.eq.s32.totalorder %s13, 0
    %p75 = por %p73, %p74
    %p76 = scmp.ne.s32.totalorder %s68, %s70
    %p77 = scmp.eq.s32.totalorder %s18, 1
    %p78 = por %p76, %p77
    %p79 = scmp.ne.s32.totalorder %s70, %s71
    %p80 = scmp.eq.s32.totalorder %s18, 0
    %p81 = por %p79, %p80
    %p82 = scmp.ne.s32.totalorder %s70, %s71
    %p83 = scmp.eq.s32.totalorder %s19, 1
    %p84 = por %p82, %p83
    %p86 = scmp.ne.s32.totalorder %s71, %s85
    %p87 = scmp.eq.s32.totalorder %s19, 0
    %p88 = por %p86, %p87
    %s90 = sadd.s32 %s89, 1
    %p93 = scmp.eq.s32.totalorder %s13, 1
    %p94 = scmp.ne.s32.totalorder %s89, %s91
    %p95 = scmp.eq.s32.totalorder %s13, 0
    %p96 = por %p94, %p95
    %p97 = scmp.ne.s32.totalorder %s89, %s91
    %p98 = scmp.eq.s32.totalorder %s18, 1
    %p99 = por %p97, %p98
    %p100 = scmp.ne.s32.totalorder %s91, %s92
    %p101 = scmp.eq.s32.totalorder %s18, 0
    %p102 = por %p100, %p101
    %p103 = scmp.ne.s32.totalorder %s91, %s92
    %p104 = scmp.eq.s32.totalorder %s19, 1
    %p105 = por %p103, %p104
    %p107 = scmp.ne.s32.totalorder %s92, %s106
    %p108 = scmp.eq.s32.totalorder %s19, 0
    %p109 = por %p107, %p108
    %s111 = sadd.s32 %s110, 1
    %p114 = scmp.eq.s32.totalorder %s13, 1
    %p115 = scmp.ne.s32.totalorder %s110, %s112
    %p116 = scmp.eq.s32.totalorder %s13, 0
    %p117 = por %p115, %p116
    %p118 = scmp.ne.s32.totalorder %s110, %s112
    %p119 = scmp.eq.s32.totalorder %s18, 1
    %p120 = por %p118, %p119
    %p121 = scmp.ne.s32.totalorder %s112, %s113
    %p122 = scmp.eq.s32.totalorder %s18, 0
    %p123 = por %p121, %p122
    %p124 = scmp.ne.s32.totalorder %s112, %s113
    %p125 = scmp.eq.s32.totalorder %s19, 1
    %p126 = por %p124, %p125
    %p128 = scmp.ne.s32.totalorder %s113, %s127
    %p129 = scmp.eq.s32.totalorder %s19, 0
    %p130 = por %p128, %p129
    %s132 = sadd.s32 %s131, 1
    %p135 = scmp.eq.s32.totalorder %s13, 1
    %p136 = scmp.ne.s32.totalorder %s131, %s133
    %p137 = scmp.eq.s32.totalorder %s13, 0
    %p138 = por %p136, %p137
    %p139 = scmp.ne.s32.totalorder %s131, %s133
    %p140 = scmp.eq.s32.totalorder %s18, 1
    %p141 = por %p139, %p140
    %p142 = scmp.ne.s32.totalorder %s133, %s134
    %p143 = scmp.eq.s32.totalorder %s18, 0
    %p144 = por %p142, %p143
    %p145 = scmp.ne.s32.totalorder %s133, %s134
    %p146 = scmp.eq.s32.totalorder %s19, 1
    %p147 = por %p145, %p146
    %p149 = scmp.ne.s32.totalorder %s134, %s148
    %p150 = scmp.eq.s32.totalorder %s19, 0
    %p151 = por %p149, %p150
    %s153 = sadd.s32 %s152, 1
    %p156 = scmp.eq.s32.totalorder %s13, 1
    %p157 = scmp.ne.s32.totalorder %s152, %s154
    %p158 = scmp.eq.s32.totalorder %s13, 0
    %p159 = por %p157, %p158
    %p160 = scmp.ne.s32.totalorder %s152, %s154
    %p161 = scmp.eq.s32.totalorder %s18, 1
    %p162 = por %p160, %p161
    %p163 = scmp.ne.s32.totalorder %s154, %s155
    %p164 = scmp.eq.s32.totalorder %s18, 0
    %p165 = por %p163, %p164
    %p166 = scmp.ne.s32.totalorder %s154, %s155
    %p167 = scmp.eq.s32.totalorder %s19, 1
    %p168 = por %p166, %p167
    %p170 = scmp.ne.s32.totalorder %s155, %s169
    %p171 = scmp.eq.s32.totalorder %s19, 0
    %p172 = por %p170, %p171
    %s173 = ssub.s32 %s13, %s20
    %p174 = scmp.eq.s32.totalorder %s173, 0
    %s176 = sadd.s32 %s175, 1
    %s177 = scalar_select %p174, %s175, %s176
    %p180 = pneg %p174
    %p181 = scmp.eq.s32.totalorder %s13, 1
    %p182 = por %p180, %p181
    %p183 = scmp.ne.s32.totalorder %s175, %s178
    %p184 = scmp.eq.s32.totalorder %s13, 0
    %p185 = por %p183, %p184
    %p186 = scmp.ne.s32.totalorder %s175, %s178
    %p187 = scmp.eq.s32.totalorder %s18, 1
    %p188 = por %p186, %p187
    %p189 = scmp.ne.s32.totalorder %s178, %s179
    %p190 = scmp.eq.s32.totalorder %s18, 0
    %p191 = por %p189, %p190
    %p192 = scmp.ne.s32.totalorder %s178, %s179
    %p193 = scmp.eq.s32.totalorder %s19, 1
    %p194 = por %p192, %p193
    %p196 = scmp.ne.s32.totalorder %s179, %s195
    %p197 = scmp.eq.s32.totalorder %s19, 0
    %p198 = por %p196, %p197
    %p199 = scmp.le.s32.totalorder 1, %s13
    %p200 = scmp.lt.s32.totalorder %s13, 3
    %p201 = pnand %p199, %p200
    %p202 = pneg %p201
    // Predicated region
    $region9: #{net_forward.1} parent=5 // pred_check
      _
    $region10: #{net_forward.1} parent=5 // pred_check_branch
      %204 = sbr.rel (%p201) target = $region12
    $region11: #{net_forward.1} parent=5 // pred_region
      %s205 = ssub.s32 %s13, 1
      // Predicated region
      $region13: #{net_forward.1} parent=11 // pred_check
        %p206 = pneg %p60
      $region14: #{net_forward.1} parent=11 // pred_check_branch
        %208 = sbr.rel (%p206) target = $region16
      $region15: #{net_forward.1} parent=11 // pred_region
        _
      $region16: #{net_forward.1} parent=11 // pred_fallthru
        _
      // Predicated region
      $region17: #{net_forward.1} parent=11 // pred_check
        %p209 = pneg %p81
      $region18: #{net_forward.1} parent=11 // pred_check_branch
        %211 = sbr.rel (%p209) target = $region20
      $region19: #{net_forward.1} parent=11 // pred_region
        _
      $region20: #{net_forward.1} parent=11 // pred_fallthru
        _
      // Predicated region
      $region21: #{net_forward.1} parent=11 // pred_check
        %p212 = pneg %p102
      $region22: #{net_forward.1} parent=11 // pred_check_branch
        %214 = sbr.rel (%p212) target = $region24
      $region23: #{net_forward.1} parent=11 // pred_region
        _
      $region24: #{net_forward.1} parent=11 // pred_fallthru
        _
      // Predicated region
      $region25: #{net_forward.1} parent=11 // pred_check
        %p215 = pneg %p123
      $region26: #{net_forward.1} parent=11 // pred_check_branch
        %217 = sbr.rel (%p215) target = $region28
      $region27: #{net_forward.1} parent=11 // pred_region
        _
      $region28: #{net_forward.1} parent=11 // pred_fallthru
        _
      // Predicated region
      $region29: #{net_forward.1} parent=11 // pred_check
        %p218 = pneg %p144
      $region30: #{net_forward.1} parent=11 // pred_check_branch
        %220 = sbr.rel (%p218) target = $region32
      $region31: #{net_forward.1} parent=11 // pred_region
        _
      $region32: #{net_forward.1} parent=11 // pred_fallthru
        _
      // Predicated region
      $region33: #{net_forward.1} parent=11 // pred_check
        %p221 = pneg %p165
      $region34: #{net_forward.1} parent=11 // pred_check_branch
        %223 = sbr.rel (%p221) target = $region36
      $region35: #{net_forward.1} parent=11 // pred_region
        _
      $region36: #{net_forward.1} parent=11 // pred_fallthru
        _
    $region12: #{net_forward.1} parent=5 // pred_fallthru
      _
    %p224 = scmp.lt.s32.totalorder %s13, 2
    // Predicated region
    $region37: #{net_forward.1} parent=5 // pred_check
      %p225 = pneg %p224
    $region38: #{net_forward.1} parent=5 // pred_check_branch
      %227 = sbr.rel (%p225) target = $region40
    $region39: #{net_forward.1} parent=5 // pred_region
      // Predicated region
      $region41: #{net_forward.1} parent=39 // pred_check
        %p228 = pneg %p33
      $region42: #{net_forward.1} parent=39 // pred_check_branch
        %230 = sbr.rel (%p228) target = $region44
      $region43: #{net_forward.1} parent=39 // pred_region
        %p231 = scmp.lt.s32.totalorder %s13, 1
        %s232 = scalar_select %p231, %s13, 1
        %s233 = smul.addr %s232, 32
        %s234 = smul.addr %s233, 8
        %s235 = scalar_lea.vmem %s0, %s234
      $region44: #{net_forward.1} parent=39 // pred_fallthru
        _
    $region40: #{net_forward.1} parent=5 // pred_fallthru
      _
    %p236 = scmp.le.s32.totalorder 1, %s13
    %p237 = scmp.lt.s32.totalorder %s13, 3
    %p238 = pnand %p236, %p237
    %p239 = pneg %p238
    // Predicated region
    $region45: #{net_forward.1} parent=5 // pred_check
      _
    $region46: #{net_forward.1} parent=5 // pred_check_branch
      %241 = sbr.rel (%p238) target = $region48
    $region47: #{net_forward.1} parent=5 // pred_region
      %s242 = ssub.s32 %s13, 1
      %p243 = scmp.lt.s32.totalorder %s18, 1
      %s244 = scalar_select %p243, %s18, 1
      %s245 = smul.addr %s244, 32
      %s246 = smul.addr %s245, 8
      %s247 = scalar_lea.vmem %s0, %s246
      %p248 = pneg %p39
      %p249 = pneg %p36
      %p250 = pneg %p60
      %p251 = pneg %p57
      %p252 = pneg %p81
      %p253 = pneg %p78
      %p254 = pneg %p102
      %p255 = pneg %p99
      %p256 = pneg %p123
      %p257 = pneg %p120
      %p258 = pneg %p144
      %p259 = pneg %p141
      %p260 = pneg %p165
      %p261 = pneg %p162
      %p262 = pneg %p191
      %p263 = pneg %p188
      %p264 = scmp.lt.s32.totalorder %s18, 1
      %s265 = scalar_select %p264, %s18, 1
      %s266 = smul.addr %s265, 2
      %s267 = smul.addr %s266, 4
      %s268 = scalar_lea.vmem %s7, %s267
      %p269 = scmp.lt.s32.totalorder %s18, 1
      %s270 = scalar_select %p269, %s18, 1
      %s271 = smul.addr %s270, 32
      %s272 = smul.addr %s271, 8
      %s273 = scalar_lea.vmem %s0, %s272
      %p274 = scmp.lt.s32.totalorder %s18, 1
      %s275 = scalar_select %p274, %s18, 1
      %s276 = smul.addr %s275, 2
      %s277 = smul.addr %s276, 4
      %s278 = scalar_lea.vmem %s7, %s277
      %v279 = vld [vmem:[%s273] sm:$0xff]
      %v280 = vld [vmem:[%s273 + $0x8] sm:$0xff]
      %v281 = vld [vmem:[%s273 + $0x10] sm:$0xff]
      %v282 = vld [vmem:[%s273 + $0x18] sm:$0xff]
      %v283 = vld [vmem:[%s273 + $0x20] sm:$0xff]
      %v284 = vld [vmem:[%s273 + $0x28] sm:$0xff]
      %v285 = vld [vmem:[%s273 + $0x30] sm:$0xff]
      %v286 = vld [vmem:[%s273 + $0x38] sm:$0xff]
      %v287 = vld [vmem:[%s273 + $0x40] sm:$0xff]
      %v288 = vld [vmem:[%s273 + $0x48] sm:$0xff]
      %v289 = vld [vmem:[%s273 + $0x50] sm:$0xff]
      %v290 = vld [vmem:[%s273 + $0x58] sm:$0xff]
      %v291 = vld [vmem:[%s273 + $0x60] sm:$0xff]
      %v292 = vld [vmem:[%s273 + $0x68] sm:$0xff]
      %v293 = vld [vmem:[%s273 + $0x70] sm:$0xff]
      %v294 = vld [vmem:[%s273 + $0x78] sm:$0xff]
      %v295 = vld [vmem:[%s273 + $0x80] sm:$0xff]
      %v296 = vld [vmem:[%s273 + $0x88] sm:$0xff]
      %v297 = vld [vmem:[%s273 + $0x90] sm:$0xff]
      %v298 = vld [vmem:[%s273 + $0x98] sm:$0xff]
      %v299 = vld [vmem:[%s273 + $0xa0] sm:$0xff]
      %v300 = vld [vmem:[%s273 + $0xa8] sm:$0xff]
      %v301 = vld [vmem:[%s273 + $0xb0] sm:$0xff]
      %v302 = vld [vmem:[%s273 + $0xb8] sm:$0xff]
      %v303 = vld [vmem:[%s273 + $0xc0] sm:$0xff]
      %v304 = vld [vmem:[%s273 + $0xc8] sm:$0xff]
      %v305 = vld [vmem:[%s273 + $0xd0] sm:$0xff]
      %v306 = vld [vmem:[%s273 + $0xd8] sm:$0xff]
      %v307 = vld [vmem:[%s273 + $0xe0] sm:$0xff]
      %v308 = vld [vmem:[%s273 + $0xe8] sm:$0xff]
      %v309 = vld [vmem:[%s273 + $0xf0] sm:$0xff]
      %v310 = vld [vmem:[%s273 + $0xf8] sm:$0xff]
      %v311 = vld [vmem:[%s1] sm:$0xff]
      %v312 = vld [vmem:[%s1 + $0x8] sm:$0xff]
      %v313 = vld [vmem:[%s1 + $0x10] sm:$0xff]
      %v314 = vld [vmem:[%s1 + $0x18] sm:$0xff]
      %v315 = vld [vmem:[%s2] sm:$0x1]
      %v317 = vperm.slane %v315, 0
      %vm319 = vcmask 261120
      %v321 = vsel %vm319, %v279, 0
      %v324 = vsel %vm319, %v280, 0
      %v327 = vsel %vm319, %v281, 0
      %v330 = vsel %vm319, %v282, 0
      %v333 = vsel %vm319, %v283, 0
      %v336 = vsel %vm319, %v284, 0
      %v339 = vsel %vm319, %v285, 0
      %v342 = vsel %vm319, %v286, 0
      %v345 = vsel %vm319, %v287, 0
      %v348 = vsel %vm319, %v288, 0
      %v351 = vsel %vm319, %v289, 0
      %v354 = vsel %vm319, %v290, 0
      %v357 = vsel %vm319, %v291, 0
      %v360 = vsel %vm319, %v292, 0
      %v363 = vsel %vm319, %v293, 0
      %v366 = vsel %vm319, %v294, 0
      %v369 = vsel %vm319, %v295, 0
      %v372 = vsel %vm319, %v296, 0
      %v375 = vsel %vm319, %v297, 0
      %v378 = vsel %vm319, %v298, 0
      %v381 = vsel %vm319, %v299, 0
      %v384 = vsel %vm319, %v300, 0
      %v387 = vsel %vm319, %v301, 0
      %v390 = vsel %vm319, %v302, 0
      %v393 = vsel %vm319, %v303, 0
      %v396 = vsel %vm319, %v304, 0
      %v399 = vsel %vm319, %v305, 0
      %v402 = vsel %vm319, %v306, 0
      %v405 = vsel %vm319, %v307, 0
      %v408 = vsel %vm319, %v308, 0
      %v411 = vsel %vm319, %v309, 0
      %v414 = vsel %vm319, %v310, 0
      %416 = vmatpush.msra.mxu0 0.0
      %417 = vmatpush.msra.mxu0 0.0
      %418 = vmatpush.msra.mxu0 0.0
      %419 = vmatpush.msra.mxu0 0.0
      %420 = vmatpush.msra.mxu0 0.0
      %421 = vmatpush.msra.mxu0 0.0
      %422 = vmatpush.msra.mxu0 0.0
      %423 = vmatpush.msra.mxu0 0.0
      %424 = vmatpush.msra.mxu0 0.0
      %425 = vmatpush.msra.mxu0 0.0
      %426 = vmatpush.msra.mxu0 0.0
      %427 = vmatpush.msra.mxu0 0.0
      %428 = vmatpush.msra.mxu0 %v314
      %429 = vmatpush.msra.mxu0 %v313
      %430 = vmatpush.msra.mxu0 %v312
      %431 = vmatpush.msra.mxu0 %v311
      %432 = vmatmul.f32.gmra.mxu0 %v321
      %v433 = vpop.f32.mrf.mxu0
      %v434 = vadd.f32 %v317, %v433
      %435 = vmatmul.f32.gmra.mxu0 %v324
      %v436 = vpop.f32.mrf.mxu0
      %v437 = vadd.f32 %v317, %v436
      %438 = vmatmul.f32.gmra.mxu0 %v327
      %v439 = vpop.f32.mrf.mxu0
      %v440 = vadd.f32 %v317, %v439
      %441 = vmatmul.f32.gmra.mxu0 %v330
      %v442 = vpop.f32.mrf.mxu0
      %v443 = vadd.f32 %v317, %v442
      %444 = vmatmul.f32.gmra.mxu0 %v333
      %v445 = vpop.f32.mrf.mxu0
      %v446 = vadd.f32 %v317, %v445
      %447 = vmatmul.f32.gmra.mxu0 %v336
      %v448 = vpop.f32.mrf.mxu0
      %v449 = vadd.f32 %v317, %v448
      %450 = vmatmul.f32.gmra.mxu0 %v339
      %v451 = vpop.f32.mrf.mxu0
      %v452 = vadd.f32 %v317, %v451
      %453 = vmatmul.f32.gmra.mxu0 %v342
      %v454 = vpop.f32.mrf.mxu0
      %v455 = vadd.f32 %v317, %v454
      %456 = vmatmul.f32.gmra.mxu0 %v345
      %v457 = vpop.f32.mrf.mxu0
      %v458 = vadd.f32 %v317, %v457
      %459 = vmatmul.f32.gmra.mxu0 %v348
      %v460 = vpop.f32.mrf.mxu0
      %v461 = vadd.f32 %v317, %v460
      %462 = vmatmul.f32.gmra.mxu0 %v351
      %v463 = vpop.f32.mrf.mxu0
      %v464 = vadd.f32 %v317, %v463
      %465 = vmatmul.f32.gmra.mxu0 %v354
      %v466 = vpop.f32.mrf.mxu0
      %v467 = vadd.f32 %v317, %v466
      %468 = vmatmul.f32.gmra.mxu0 %v357
      %v469 = vpop.f32.mrf.mxu0
      %v470 = vadd.f32 %v317, %v469
      %471 = vmatmul.f32.gmra.mxu0 %v360
      %v472 = vpop.f32.mrf.mxu0
      %v473 = vadd.f32 %v317, %v472
      %474 = vmatmul.f32.gmra.mxu0 %v363
      %v475 = vpop.f32.mrf.mxu0
      %v476 = vadd.f32 %v317, %v475
      %477 = vmatmul.f32.gmra.mxu0 %v366
      %v478 = vpop.f32.mrf.mxu0
      %v479 = vadd.f32 %v317, %v478
      %480 = vmatmul.f32.gmra.mxu0 %v369
      %v481 = vpop.f32.mrf.mxu0
      %v482 = vadd.f32 %v317, %v481
      %483 = vmatmul.f32.gmra.mxu0 %v372
      %v484 = vpop.f32.mrf.mxu0
      %v485 = vadd.f32 %v317, %v484
      %486 = vmatmul.f32.gmra.mxu0 %v375
      %v487 = vpop.f32.mrf.mxu0
      %v488 = vadd.f32 %v317, %v487
      %489 = vmatmul.f32.gmra.mxu0 %v378
      %v490 = vpop.f32.mrf.mxu0
      %v491 = vadd.f32 %v317, %v490
      %492 = vmatmul.f32.gmra.mxu0 %v381
      %v493 = vpop.f32.mrf.mxu0
      %v494 = vadd.f32 %v317, %v493
      %495 = vmatmul.f32.gmra.mxu0 %v384
      %v496 = vpop.f32.mrf.mxu0
      %v497 = vadd.f32 %v317, %v496
      %498 = vmatmul.f32.gmra.mxu0 %v387
      %v499 = vpop.f32.mrf.mxu0
      %v500 = vadd.f32 %v317, %v499
      %501 = vmatmul.f32.gmra.mxu0 %v390
      %v502 = vpop.f32.mrf.mxu0
      %v503 = vadd.f32 %v317, %v502
      %504 = vmatmul.f32.gmra.mxu0 %v393
      %v505 = vpop.f32.mrf.mxu0
      %v506 = vadd.f32 %v317, %v505
      %507 = vmatmul.f32.gmra.mxu0 %v396
      %v508 = vpop.f32.mrf.mxu0
      %v509 = vadd.f32 %v317, %v508
      %510 = vmatmul.f32.gmra.mxu0 %v399
      %v511 = vpop.f32.mrf.mxu0
      %v512 = vadd.f32 %v317, %v511
      %513 = vmatmul.f32.gmra.mxu0 %v402
      %v514 = vpop.f32.mrf.mxu0
      %v515 = vadd.f32 %v317, %v514
      %516 = vmatmul.f32.gmra.mxu0 %v405
      %v517 = vpop.f32.mrf.mxu0
      %v518 = vadd.f32 %v317, %v517
      %519 = vmatmul.f32.gmra.mxu0 %v408
      %v520 = vpop.f32.mrf.mxu0
      %v521 = vadd.f32 %v317, %v520
      %522 = vmatmul.f32.gmra.mxu0 %v411
      %v523 = vpop.f32.mrf.mxu0
      %v524 = vadd.f32 %v317, %v523
      %525 = vmatmul.f32.gmra.mxu0 %v414
      %v526 = vpop.f32.mrf.mxu0
      %v527 = vadd.f32 %v317, %v526
      %528 = vdwg.mxu0
      %v529 = vmax.f32 %v434, 0.0
      %v530 = vmax.f32 %v437, 0.0
      %v531 = vmax.f32 %v440, 0.0
      %v532 = vmax.f32 %v443, 0.0
      %v533 = vmax.f32 %v446, 0.0
      %v534 = vmax.f32 %v449, 0.0
      %v535 = vmax.f32 %v452, 0.0
      %v536 = vmax.f32 %v455, 0.0
      %v537 = vmax.f32 %v458, 0.0
      %v538 = vmax.f32 %v461, 0.0
      %v539 = vmax.f32 %v464, 0.0
      %v540 = vmax.f32 %v467, 0.0
      %v541 = vmax.f32 %v470, 0.0
      %v542 = vmax.f32 %v473, 0.0
      %v543 = vmax.f32 %v476, 0.0
      %v544 = vmax.f32 %v479, 0.0
      %v545 = vmax.f32 %v482, 0.0
      %v546 = vmax.f32 %v485, 0.0
      %v547 = vmax.f32 %v488, 0.0
      %v548 = vmax.f32 %v491, 0.0
      %v549 = vmax.f32 %v494, 0.0
      %v550 = vmax.f32 %v497, 0.0
      %v551 = vmax.f32 %v500, 0.0
      %v552 = vmax.f32 %v503, 0.0
      %v553 = vmax.f32 %v506, 0.0
      %v554 = vmax.f32 %v509, 0.0
      %v555 = vmax.f32 %v512, 0.0
      %v556 = vmax.f32 %v515, 0.0
      %v557 = vmax.f32 %v518, 0.0
      %v558 = vmax.f32 %v521, 0.0
      %v559 = vmax.f32 %v524, 0.0
      %v560 = vmax.f32 %v527, 0.0
      %561 = vst [vmem:[#allocation2] sm:$0xff] 0.0
      %562 = vst [vmem:[#allocation2 + $0x8] sm:$0xff] 0.0
      %563 = vst [vmem:[#allocation2 + $0x10] sm:$0x3] 0.0
      %564 = vst [vmem:[#allocation2 + $0x18] sm:$0xff] 0.0
      %565 = vst [vmem:[#allocation2 + $0x20] sm:$0xff] 0.0
      %566 = vst [vmem:[#allocation2 + $0x28] sm:$0x3] 0.0
      %567 = vst [vmem:[#allocation2 + $0x30] sm:$0xff] 0.0
      %568 = vst [vmem:[#allocation2 + $0x38] sm:$0xff] 0.0
      %569 = vst [vmem:[#allocation2 + $0x40] sm:$0x3] 0.0
      %570 = vst [vmem:[#allocation2 + $0x48] sm:$0xff] 0.0
      %571 = vst [vmem:[#allocation2 + $0x50] sm:$0xff] 0.0
      %572 = vst [vmem:[#allocation2 + $0x58] sm:$0x3] 0.0
      %573 = vst [vmem:[#allocation2 + $0x60] sm:$0xff] 0.0
      %574 = vst [vmem:[#allocation2 + $0x68] sm:$0xff] 0.0
      %575 = vst [vmem:[#allocation2 + $0x70] sm:$0x3] 0.0
      %576 = vst [vmem:[#allocation2 + $0x78] sm:$0xff] 0.0
      %577 = vst [vmem:[#allocation2 + $0x80] sm:$0xff] 0.0
      %578 = vst [vmem:[#allocation2 + $0x88] sm:$0x3] 0.0
      %579 = vst [vmem:[#allocation2 + $0x90] sm:$0xff] 0.0
      %580 = vst [vmem:[#allocation2 + $0x98] sm:$0xff] 0.0
      %581 = vst [vmem:[#allocation2 + $0xa0] sm:$0x3] 0.0
      %582 = vst [vmem:[#allocation2 + $0xa8] sm:$0xff] 0.0
      %583 = vst [vmem:[#allocation2 + $0xb0] sm:$0xff] 0.0
      %584 = vst [vmem:[#allocation2 + $0xb8] sm:$0x3] 0.0
      %585 = vst [vmem:[#allocation2 + $0xc0] sm:$0xff] 0.0
      %586 = vst [vmem:[#allocation2 + $0xc8] sm:$0xff] 0.0
      %587 = vst [vmem:[#allocation2 + $0xd0] sm:$0x3] 0.0
      %588 = vst [vmem:[#allocation2 + $0xd8] sm:$0xff] 0.0
      %589 = vst [vmem:[#allocation2 + $0xe0] sm:$0xff] 0.0
      %590 = vst [vmem:[#allocation2 + $0xe8] sm:$0x3] 0.0
      %591 = vst [vmem:[#allocation2 + $0xf0] sm:$0xff] 0.0
      %592 = vst [vmem:[#allocation2 + $0xf8] sm:$0xff] 0.0
      %593 = vst [vmem:[#allocation2 + $0x100] sm:$0x3] 0.0
      %594 = vst [vmem:[#allocation2 + $0x108] sm:$0xff] 0.0
      %595 = vst [vmem:[#allocation2 + $0x110] sm:$0xff] 0.0
      %596 = vst [vmem:[#allocation2 + $0x118] sm:$0x3] 0.0
      %597 = vst [vmem:[#allocation2 + $0x120] sm:$0xff] 0.0
      %598 = vst [vmem:[#allocation2 + $0x128] sm:$0xff] 0.0
      %599 = vst [vmem:[#allocation2 + $0x130] sm:$0x3] 0.0
      %600 = vst [vmem:[#allocation2 + $0x138] sm:$0xff] 0.0
      %601 = vst [vmem:[#allocation2 + $0x140] sm:$0xff] 0.0
      %602 = vst [vmem:[#allocation2 + $0x148] sm:$0x3] 0.0
      %603 = vst [vmem:[#allocation2 + $0x150] sm:$0xff] 0.0
      %604 = vst [vmem:[#allocation2 + $0x158] sm:$0xff] 0.0
      %605 = vst [vmem:[#allocation2 + $0x160] sm:$0x3] 0.0
      %606 = vst [vmem:[#allocation2 + $0x168] sm:$0xff] 0.0
      %607 = vst [vmem:[#allocation2 + $0x170] sm:$0xff] 0.0
      %608 = vst [vmem:[#allocation2 + $0x178] sm:$0x3] 0.0
      %609 = vst [vmem:[#allocation2 + $0x180] sm:$0xff] 0.0
      %610 = vst [vmem:[#allocation2 + $0x188] sm:$0xff] 0.0
      %611 = vst [vmem:[#allocation2 + $0x190] sm:$0x3] 0.0
      %612 = vst [vmem:[#allocation2 + $0x198] sm:$0xff] 0.0
      %613 = vst [vmem:[#allocation2 + $0x1a0] sm:$0xff] 0.0
      %614 = vst [vmem:[#allocation2 + $0x1a8] sm:$0x3] 0.0
      %s615 = scalar_lea.vmem [#allocation2], 24
      %616 = vst [vmem:[%s615 + $0x1] sm:$0xff] %v529
      %617 = vst [vmem:[%s615 + $0x9] sm:$0xff] %v530
      %618 = vst [vmem:[%s615 + $0x19] sm:$0xff] %v531
      %619 = vst [vmem:[%s615 + $0x21] sm:$0xff] %v532
      %620 = vst [vmem:[%s615 + $0x31] sm:$0xff] %v533
      %621 = vst [vmem:[%s615 + $0x39] sm:$0xff] %v534
      %622 = vst [vmem:[%s615 + $0x49] sm:$0xff] %v535
      %623 = vst [vmem:[%s615 + $0x51] sm:$0xff] %v536
      %624 = vst [vmem:[%s615 + $0x61] sm:$0xff] %v537
      %625 = vst [vmem:[%s615 + $0x69] sm:$0xff] %v538
      %626 = vst [vmem:[%s615 + $0x79] sm:$0xff] %v539
      %627 = vst [vmem:[%s615 + $0x81] sm:$0xff] %v540
      %628 = vst [vmem:[%s615 + $0x91] sm:$0xff] %v541
      %629 = vst [vmem:[%s615 + $0x99] sm:$0xff] %v542
      %630 = vst [vmem:[%s615 + $0xa9] sm:$0xff] %v543
      %631 = vst [vmem:[%s615 + $0xb1] sm:$0xff] %v544
      %632 = vst [vmem:[%s615 + $0xc1] sm:$0xff] %v545
      %633 = vst [vmem:[%s615 + $0xc9] sm:$0xff] %v546
      %634 = vst [vmem:[%s615 + $0xd9] sm:$0xff] %v547
      %635 = vst [vmem:[%s615 + $0xe1] sm:$0xff] %v548
      %636 = vst [vmem:[%s615 + $0xf1] sm:$0xff] %v549
      %637 = vst [vmem:[%s615 + $0xf9] sm:$0xff] %v550
      %638 = vst [vmem:[%s615 + $0x109] sm:$0xff] %v551
      %639 = vst [vmem:[%s615 + $0x111] sm:$0xff] %v552
      %640 = vst [vmem:[%s615 + $0x121] sm:$0xff] %v553
      %641 = vst [vmem:[%s615 + $0x129] sm:$0xff] %v554
      %642 = vst [vmem:[%s615 + $0x139] sm:$0xff] %v555
      %643 = vst [vmem:[%s615 + $0x141] sm:$0xff] %v556
      %644 = vst [vmem:[%s615 + $0x151] sm:$0xff] %v557
      %645 = vst [vmem:[%s615 + $0x159] sm:$0xff] %v558
      %646 = vst [vmem:[%s615 + $0x169] sm:$0xff] %v559
      %647 = vst [vmem:[%s615 + $0x171] sm:$0xff] %v560
      %v648 = vld [vmem:[#allocation2] sm:$0xff]
      %v649 = vld [vmem:[#allocation2 + $0x8] sm:$0xff]
      %v650 = vld [vmem:[#allocation2 + $0x18] sm:$0xff]
      %v651 = vld [vmem:[#allocation2 + $0x20] sm:$0xff]
      %v652 = vld [vmem:[#allocation2 + $0x30] sm:$0xff]
      %v653 = vld [vmem:[#allocation2 + $0x38] sm:$0xff]
      %v654 = vld [vmem:[#allocation2 + $0x48] sm:$0xff]
      %v655 = vld [vmem:[#allocation2 + $0x50] sm:$0xff]
      %v656 = vld [vmem:[#allocation2 + $0x60] sm:$0xff]
      %v657 = vld [vmem:[#allocation2 + $0x68] sm:$0xff]
      %v658 = vld [vmem:[#allocation2 + $0x78] sm:$0xff]
      %v659 = vld [vmem:[#allocation2 + $0x80] sm:$0xff]
      %v660 = vld [vmem:[#allocation2 + $0x90] sm:$0xff]
      %v661 = vld [vmem:[#allocation2 + $0x98] sm:$0xff]
      %v662 = vld [vmem:[#allocation2 + $0xa8] sm:$0xff]
      %v663 = vld [vmem:[#allocation2 + $0xb0] sm:$0xff]
      %v664 = vld [vmem:[#allocation2 + $0xc0] sm:$0xff]
      %v665 = vld [vmem:[#allocation2 + $0xc8] sm:$0xff]
      %v666 = vld [vmem:[#allocation2 + $0xd8] sm:$0xff]
      %v667 = vld [vmem:[#allocation2 + $0xe0] sm:$0xff]
      %v668 = vld [vmem:[#allocation2 + $0xf0] sm:$0xff]
      %v669 = vld [vmem:[#allocation2 + $0xf8] sm:$0xff]
      %v670 = vld [vmem:[#allocation2 + $0x108] sm:$0xff]
      %v671 = vld [vmem:[#allocation2 + $0x110] sm:$0xff]
      %v672 = vld [vmem:[#allocation2 + $0x120] sm:$0xff]
      %v673 = vld [vmem:[#allocation2 + $0x128] sm:$0xff]
      %v674 = vld [vmem:[#allocation2 + $0x138] sm:$0xff]
      %v675 = vld [vmem:[#allocation2 + $0x140] sm:$0xff]
      %v676 = vld [vmem:[#allocation2 + $0x150] sm:$0xff]
      %v677 = vld [vmem:[#allocation2 + $0x158] sm:$0xff]
      %v678 = vld [vmem:[#allocation2 + $0x168] sm:$0xff]
      %v679 = vld [vmem:[#allocation2 + $0x170] sm:$0xff]
      %680 = vst [vmem:[#allocation4] sm:$0xff] %v648
      %681 = vst [vmem:[#allocation4 + $0x48] sm:$0xff] %v649
      %682 = vst [vmem:[#allocation4 + $0x90] sm:$0xff] %v650
      %683 = vst [vmem:[#allocation4 + $0xd8] sm:$0xff] %v651
      %684 = vst [vmem:[#allocation4 + $0x120] sm:$0xff] %v652
      %685 = vst [vmem:[#allocation4 + $0x168] sm:$0xff] %v653
      %686 = vst [vmem:[#allocation4 + $0x1b0] sm:$0xff] %v654
      %687 = vst [vmem:[#allocation4 + $0x1f8] sm:$0xff] %v655
      %688 = vst [vmem:[#allocation4 + $0x240] sm:$0xff] %v656
      %689 = vst [vmem:[#allocation4 + $0x288] sm:$0xff] %v657
      %690 = vst [vmem:[#allocation4 + $0x2d0] sm:$0xff] %v658
      %691 = vst [vmem:[#allocation4 + $0x318] sm:$0xff] %v659
      %692 = vst [vmem:[#allocation4 + $0x360] sm:$0xff] %v660
      %693 = vst [vmem:[#allocation4 + $0x3a8] sm:$0xff] %v661
      %694 = vst [vmem:[#allocation4 + $0x3f0] sm:$0xff] %v662
      %695 = vst [vmem:[#allocation4 + $0x438] sm:$0xff] %v663
      %696 = vst [vmem:[#allocation4 + $0x480] sm:$0xff] %v664
      %697 = vst [vmem:[#allocation4 + $0x4c8] sm:$0xff] %v665
      %698 = vst [vmem:[#allocation4 + $0x510] sm:$0xff] %v666
      %699 = vst [vmem:[#allocation4 + $0x558] sm:$0xff] %v667
      %700 = vst [vmem:[#allocation4 + $0x5a0] sm:$0xff] %v668
      %701 = vst [vmem:[#allocation4 + $0x5e8] sm:$0xff] %v669
      %702 = vst [vmem:[#allocation4 + $0x630] sm:$0xff] %v670
      %703 = vst [vmem:[#allocation4 + $0x678] sm:$0xff] %v671
      %704 = vst [vmem:[#allocation4 + $0x6c0] sm:$0xff] %v672
      %705 = vst [vmem:[#allocation4 + $0x708] sm:$0xff] %v673
      %706 = vst [vmem:[#allocation4 + $0x750] sm:$0xff] %v674
      %707 = vst [vmem:[#allocation4 + $0x798] sm:$0xff] %v675
      %708 = vst [vmem:[#allocation4 + $0x7e0] sm:$0xff] %v676
      %709 = vst [vmem:[#allocation4 + $0x828] sm:$0xff] %v677
      %710 = vst [vmem:[#allocation4 + $0x870] sm:$0xff] %v678
      %711 = vst [vmem:[#allocation4 + $0x8b8] sm:$0xff] %v679
      %v712 = vld [vmem:[#allocation2 + $0x1] sm:$0xff]
      %v713 = vld [vmem:[#allocation2 + $0x9] sm:$0xff]
      %v714 = vld [vmem:[#allocation2 + $0x19] sm:$0xff]
      %v715 = vld [vmem:[#allocation2 + $0x21] sm:$0xff]
      %v716 = vld [vmem:[#allocation2 + $0x31] sm:$0xff]
      %v717 = vld [vmem:[#allocation2 + $0x39] sm:$0xff]
      %v718 = vld [vmem:[#allocation2 + $0x49] sm:$0xff]
      %v719 = vld [vmem:[#allocation2 + $0x51] sm:$0xff]
      %v720 = vld [vmem:[#allocation2 + $0x61] sm:$0xff]
      %v721 = vld [vmem:[#allocation2 + $0x69] sm:$0xff]
      %v722 = vld [vmem:[#allocation2 + $0x79] sm:$0xff]
      %v723 = vld [vmem:[#allocation2 + $0x81] sm:$0xff]
      %v724 = vld [vmem:[#allocation2 + $0x91] sm:$0xff]
      %v725 = vld [vmem:[#allocation2 + $0x99] sm:$0xff]
      %v726 = vld [vmem:[#allocation2 + $0xa9] sm:$0xff]
      %v727 = vld [vmem:[#allocation2 + $0xb1] sm:$0xff]
      %v728 = vld [vmem:[#allocation2 + $0xc1] sm:$0xff]
      %v729 = vld [vmem:[#allocation2 + $0xc9] sm:$0xff]
      %v730 = vld [vmem:[#allocation2 + $0xd9] sm:$0xff]
      %v731 = vld [vmem:[#allocation2 + $0xe1] sm:$0xff]
      %v732 = vld [vmem:[#allocation2 + $0xf1] sm:$0xff]
      %v733 = vld [vmem:[#allocation2 + $0xf9] sm:$0xff]
      %v734 = vld [vmem:[#allocation2 + $0x109] sm:$0xff]
      %v735 = vld [vmem:[#allocation2 + $0x111] sm:$0xff]
      %v736 = vld [vmem:[#allocation2 + $0x121] sm:$0xff]
      %v737 = vld [vmem:[#allocation2 + $0x129] sm:$0xff]
      %v738 = vld [vmem:[#allocation2 + $0x139] sm:$0xff]
      %v739 = vld [vmem:[#allocation2 + $0x141] sm:$0xff]
      %v740 = vld [vmem:[#allocation2 + $0x151] sm:$0xff]
      %v741 = vld [vmem:[#allocation2 + $0x159] sm:$0xff]
      %v742 = vld [vmem:[#allocation2 + $0x169] sm:$0xff]
      %v743 = vld [vmem:[#allocation2 + $0x171] sm:$0xff]
      %744 = vst [vmem:[#allocation4 + $0x8] sm:$0xff] %v712
      %745 = vst [vmem:[#allocation4 + $0x50] sm:$0xff] %v713
      %746 = vst [vmem:[#allocation4 + $0x98] sm:$0xff] %v714
      %747 = vst [vmem:[#allocation4 + $0xe0] sm:$0xff] %v715
      %748 = vst [vmem:[#allocation4 + $0x128] sm:$0xff] %v716
      %749 = vst [vmem:[#allocation4 + $0x170] sm:$0xff] %v717
      %750 = vst [vmem:[#allocation4 + $0x1b8] sm:$0xff] %v718
      %751 = vst [vmem:[#allocation4 + $0x200] sm:$0xff] %v719
      %752 = vst [vmem:[#allocation4 + $0x248] sm:$0xff] %v720
      %753 = vst [vmem:[#allocation4 + $0x290] sm:$0xff] %v721
      %754 = vst [vmem:[#allocation4 + $0x2d8] sm:$0xff] %v722
      %755 = vst [vmem:[#allocation4 + $0x320] sm:$0xff] %v723
      %756 = vst [vmem:[#allocation4 + $0x368] sm:$0xff] %v724
      %757 = vst [vmem:[#allocation4 + $0x3b0] sm:$0xff] %v725
      %758 = vst [vmem:[#allocation4 + $0x3f8] sm:$0xff] %v726
      %759 = vst [vmem:[#allocation4 + $0x440] sm:$0xff] %v727
      %760 = vst [vmem:[#allocation4 + $0x488] sm:$0xff] %v728
      %761 = vst [vmem:[#allocation4 + $0x4d0] sm:$0xff] %v729
      %762 = vst [vmem:[#allocation4 + $0x518] sm:$0xff] %v730
      %763 = vst [vmem:[#allocation4 + $0x560] sm:$0xff] %v731
      %764 = vst [vmem:[#allocation4 + $0x5a8] sm:$0xff] %v732
      %765 = vst [vmem:[#allocation4 + $0x5f0] sm:$0xff] %v733
      %766 = vst [vmem:[#allocation4 + $0x638] sm:$0xff] %v734
      %767 = vst [vmem:[#allocation4 + $0x680] sm:$0xff] %v735
      %768 = vst [vmem:[#allocation4 + $0x6c8] sm:$0xff] %v736
      %769 = vst [vmem:[#allocation4 + $0x710] sm:$0xff] %v737
      %770 = vst [vmem:[#allocation4 + $0x758] sm:$0xff] %v738
      %771 = vst [vmem:[#allocation4 + $0x7a0] sm:$0xff] %v739
      %772 = vst [vmem:[#allocation4 + $0x7e8] sm:$0xff] %v740
      %773 = vst [vmem:[#allocation4 + $0x830] sm:$0xff] %v741
      %774 = vst [vmem:[#allocation4 + $0x878] sm:$0xff] %v742
      %775 = vst [vmem:[#allocation4 + $0x8c0] sm:$0xff] %v743
      %v776 = vld [vmem:[#allocation2 + $0x2] sm:$0xff]
      %v777 = vld [vmem:[#allocation2 + $0xa] sm:$0xff]
      %v778 = vld [vmem:[#allocation2 + $0x1a] sm:$0xff]
      %v779 = vld [vmem:[#allocation2 + $0x22] sm:$0xff]
      %v780 = vld [vmem:[#allocation2 + $0x32] sm:$0xff]
      %v781 = vld [vmem:[#allocation2 + $0x3a] sm:$0xff]
      %v782 = vld [vmem:[#allocation2 + $0x4a] sm:$0xff]
      %v783 = vld [vmem:[#allocation2 + $0x52] sm:$0xff]
      %v784 = vld [vmem:[#allocation2 + $0x62] sm:$0xff]
      %v785 = vld [vmem:[#allocation2 + $0x6a] sm:$0xff]
      %v786 = vld [vmem:[#allocation2 + $0x7a] sm:$0xff]
      %v787 = vld [vmem:[#allocation2 + $0x82] sm:$0xff]
      %v788 = vld [vmem:[#allocation2 + $0x92] sm:$0xff]
      %v789 = vld [vmem:[#allocation2 + $0x9a] sm:$0xff]
      %v790 = vld [vmem:[#allocation2 + $0xaa] sm:$0xff]
      %v791 = vld [vmem:[#allocation2 + $0xb2] sm:$0xff]
      %v792 = vld [vmem:[#allocation2 + $0xc2] sm:$0xff]
      %v793 = vld [vmem:[#allocation2 + $0xca] sm:$0xff]
      %v794 = vld [vmem:[#allocation2 + $0xda] sm:$0xff]
      %v795 = vld [vmem:[#allocation2 + $0xe2] sm:$0xff]
      %v796 = vld [vmem:[#allocation2 + $0xf2] sm:$0xff]
      %v797 = vld [vmem:[#allocation2 + $0xfa] sm:$0xff]
      %v798 = vld [vmem:[#allocation2 + $0x10a] sm:$0xff]
      %v799 = vld [vmem:[#allocation2 + $0x112] sm:$0xff]
      %v800 = vld [vmem:[#allocation2 + $0x122] sm:$0xff]
      %v801 = vld [vmem:[#allocation2 + $0x12a] sm:$0xff]
      %v802 = vld [vmem:[#allocation2 + $0x13a] sm:$0xff]
      %v803 = vld [vmem:[#allocation2 + $0x142] sm:$0xff]
      %v804 = vld [vmem:[#allocation2 + $0x152] sm:$0xff]
      %v805 = vld [vmem:[#allocation2 + $0x15a] sm:$0xff]
      %v806 = vld [vmem:[#allocation2 + $0x16a] sm:$0xff]
      %v807 = vld [vmem:[#allocation2 + $0x172] sm:$0xff]
      %808 = vst [vmem:[#allocation4 + $0x10] sm:$0xff] %v776
      %809 = vst [vmem:[#allocation4 + $0x58] sm:$0xff] %v777
      %810 = vst [vmem:[#allocation4 + $0xa0] sm:$0xff] %v778
      %811 = vst [vmem:[#allocation4 + $0xe8] sm:$0xff] %v779
      %812 = vst [vmem:[#allocation4 + $0x130] sm:$0xff] %v780
      %813 = vst [vmem:[#allocation4 + $0x178] sm:$0xff] %v781
      %814 = vst [vmem:[#allocation4 + $0x1c0] sm:$0xff] %v782
      %815 = vst [vmem:[#allocation4 + $0x208] sm:$0xff] %v783
      %816 = vst [vmem:[#allocation4 + $0x250] sm:$0xff] %v784
      %817 = vst [vmem:[#allocation4 + $0x298] sm:$0xff] %v785
      %818 = vst [vmem:[#allocation4 + $0x2e0] sm:$0xff] %v786
      %819 = vst [vmem:[#allocation4 + $0x328] sm:$0xff] %v787
      %820 = vst [vmem:[#allocation4 + $0x370] sm:$0xff] %v788
      %821 = vst [vmem:[#allocation4 + $0x3b8] sm:$0xff] %v789
      %822 = vst [vmem:[#allocation4 + $0x400] sm:$0xff] %v790
      %823 = vst [vmem:[#allocation4 + $0x448] sm:$0xff] %v791
      %824 = vst [vmem:[#allocation4 + $0x490] sm:$0xff] %v792
      %825 = vst [vmem:[#allocation4 + $0x4d8] sm:$0xff] %v793
      %826 = vst [vmem:[#allocation4 + $0x520] sm:$0xff] %v794
      %827 = vst [vmem:[#allocation4 + $0x568] sm:$0xff] %v795
      %828 = vst [vmem:[#allocation4 + $0x5b0] sm:$0xff] %v796
      %829 = vst [vmem:[#allocation4 + $0x5f8] sm:$0xff] %v797
      %830 = vst [vmem:[#allocation4 + $0x640] sm:$0xff] %v798
      %831 = vst [vmem:[#allocation4 + $0x688] sm:$0xff] %v799
      %832 = vst [vmem:[#allocation4 + $0x6d0] sm:$0xff] %v800
      %833 = vst [vmem:[#allocation4 + $0x718] sm:$0xff] %v801
      %834 = vst [vmem:[#allocation4 + $0x760] sm:$0xff] %v802
      %835 = vst [vmem:[#allocation4 + $0x7a8] sm:$0xff] %v803
      %836 = vst [vmem:[#allocation4 + $0x7f0] sm:$0xff] %v804
      %837 = vst [vmem:[#allocation4 + $0x838] sm:$0xff] %v805
      %838 = vst [vmem:[#allocation4 + $0x880] sm:$0xff] %v806
      %839 = vst [vmem:[#allocation4 + $0x8c8] sm:$0xff] %v807
      %v840 = vld [vmem:[%s615] sm:$0xff]
      %v841 = vld [vmem:[%s615 + $0x8] sm:$0xff]
      %v842 = vld [vmem:[%s615 + $0x18] sm:$0xff]
      %v843 = vld [vmem:[%s615 + $0x20] sm:$0xff]
      %v844 = vld [vmem:[%s615 + $0x30] sm:$0xff]
      %v845 = vld [vmem:[%s615 + $0x38] sm:$0xff]
      %v846 = vld [vmem:[%s615 + $0x48] sm:$0xff]
      %v847 = vld [vmem:[%s615 + $0x50] sm:$0xff]
      %v848 = vld [vmem:[%s615 + $0x60] sm:$0xff]
      %v849 = vld [vmem:[%s615 + $0x68] sm:$0xff]
      %v850 = vld [vmem:[%s615 + $0x78] sm:$0xff]
      %v851 = vld [vmem:[%s615 + $0x80] sm:$0xff]
      %v852 = vld [vmem:[%s615 + $0x90] sm:$0xff]
      %v853 = vld [vmem:[%s615 + $0x98] sm:$0xff]
      %v854 = vld [vmem:[%s615 + $0xa8] sm:$0xff]
      %v855 = vld [vmem:[%s615 + $0xb0] sm:$0xff]
      %v856 = vld [vmem:[%s615 + $0xc0] sm:$0xff]
      %v857 = vld [vmem:[%s615 + $0xc8] sm:$0xff]
      %v858 = vld [vmem:[%s615 + $0xd8] sm:$0xff]
      %v859 = vld [vmem:[%s615 + $0xe0] sm:$0xff]
      %v860 = vld [vmem:[%s615 + $0xf0] sm:$0xff]
      %v861 = vld [vmem:[%s615 + $0xf8] sm:$0xff]
      %v862 = vld [vmem:[%s615 + $0x108] sm:$0xff]
      %v863 = vld [vmem:[%s615 + $0x110] sm:$0xff]
      %v864 = vld [vmem:[%s615 + $0x120] sm:$0xff]
      %v865 = vld [vmem:[%s615 + $0x128] sm:$0xff]
      %v866 = vld [vmem:[%s615 + $0x138] sm:$0xff]
      %v867 = vld [vmem:[%s615 + $0x140] sm:$0xff]
      %v868 = vld [vmem:[%s615 + $0x150] sm:$0xff]
      %v869 = vld [vmem:[%s615 + $0x158] sm:$0xff]
      %v870 = vld [vmem:[%s615 + $0x168] sm:$0xff]
      %v871 = vld [vmem:[%s615 + $0x170] sm:$0xff]
      %872 = vst [vmem:[#allocation4 + $0x18] sm:$0xff] %v840
      %873 = vst [vmem:[#allocation4 + $0x60] sm:$0xff] %v841
      %874 = vst [vmem:[#allocation4 + $0xa8] sm:$0xff] %v842
      %875 = vst [vmem:[#allocation4 + $0xf0] sm:$0xff] %v843
      %876 = vst [vmem:[#allocation4 + $0x138] sm:$0xff] %v844
      %877 = vst [vmem:[#allocation4 + $0x180] sm:$0xff] %v845
      %878 = vst [vmem:[#allocation4 + $0x1c8] sm:$0xff] %v846
      %879 = vst [vmem:[#allocation4 + $0x210] sm:$0xff] %v847
      %880 = vst [vmem:[#allocation4 + $0x258] sm:$0xff] %v848
      %881 = vst [vmem:[#allocation4 + $0x2a0] sm:$0xff] %v849
      %882 = vst [vmem:[#allocation4 + $0x2e8] sm:$0xff] %v850
      %883 = vst [vmem:[#allocation4 + $0x330] sm:$0xff] %v851
      %884 = vst [vmem:[#allocation4 + $0x378] sm:$0xff] %v852
      %885 = vst [vmem:[#allocation4 + $0x3c0] sm:$0xff] %v853
      %886 = vst [vmem:[#allocation4 + $0x408] sm:$0xff] %v854
      %887 = vst [vmem:[#allocation4 + $0x450] sm:$0xff] %v855
      %888 = vst [vmem:[#allocation4 + $0x498] sm:$0xff] %v856
      %889 = vst [vmem:[#allocation4 + $0x4e0] sm:$0xff] %v857
      %890 = vst [vmem:[#allocation4 + $0x528] sm:$0xff] %v858
      %891 = vst [vmem:[#allocation4 + $0x570] sm:$0xff] %v859
      %892 = vst [vmem:[#allocation4 + $0x5b8] sm:$0xff] %v860
      %893 = vst [vmem:[#allocation4 + $0x600] sm:$0xff] %v861
      %894 = vst [vmem:[#allocation4 + $0x648] sm:$0xff] %v862
      %895 = vst [vmem:[#allocation4 + $0x690] sm:$0xff] %v863
      %896 = vst [vmem:[#allocation4 + $0x6d8] sm:$0xff] %v864
      %897 = vst [vmem:[#allocation4 + $0x720] sm:$0xff] %v865
      %898 = vst [vmem:[#allocation4 + $0x768] sm:$0xff] %v866
      %899 = vst [vmem:[#allocation4 + $0x7b0] sm:$0xff] %v867
      %900 = vst [vmem:[#allocation4 + $0x7f8] sm:$0xff] %v868
      %901 = vst [vmem:[#allocation4 + $0x840] sm:$0xff] %v869
      %902 = vst [vmem:[#allocation4 + $0x888] sm:$0xff] %v870
      %903 = vst [vmem:[#allocation4 + $0x8d0] sm:$0xff] %v871
      %v904 = vld [vmem:[%s615 + $0x1] sm:$0xff]
      %v905 = vld [vmem:[%s615 + $0x9] sm:$0xff]
      %v906 = vld [vmem:[%s615 + $0x19] sm:$0xff]
      %v907 = vld [vmem:[%s615 + $0x21] sm:$0xff]
      %v908 = vld [vmem:[%s615 + $0x31] sm:$0xff]
      %v909 = vld [vmem:[%s615 + $0x39] sm:$0xff]
      %v910 = vld [vmem:[%s615 + $0x49] sm:$0xff]
      %v911 = vld [vmem:[%s615 + $0x51] sm:$0xff]
      %v912 = vld [vmem:[%s615 + $0x61] sm:$0xff]
      %v913 = vld [vmem:[%s615 + $0x69] sm:$0xff]
      %v914 = vld [vmem:[%s615 + $0x79] sm:$0xff]
      %v915 = vld [vmem:[%s615 + $0x81] sm:$0xff]
      %v916 = vld [vmem:[%s615 + $0x91] sm:$0xff]
      %v917 = vld [vmem:[%s615 + $0x99] sm:$0xff]
      %v918 = vld [vmem:[%s615 + $0xa9] sm:$0xff]
      %v919 = vld [vmem:[%s615 + $0xb1] sm:$0xff]
      %v920 = vld [vmem:[%s615 + $0xc1] sm:$0xff]
      %v921 = vld [vmem:[%s615 + $0xc9] sm:$0xff]
      %v922 = vld [vmem:[%s615 + $0xd9] sm:$0xff]
      %v923 = vld [vmem:[%s615 + $0xe1] sm:$0xff]
      %v924 = vld [vmem:[%s615 + $0xf1] sm:$0xff]
      %v925 = vld [vmem:[%s615 + $0xf9] sm:$0xff]
      %v926 = vld [vmem:[%s615 + $0x109] sm:$0xff]
      %v927 = vld [vmem:[%s615 + $0x111] sm:$0xff]
      %v928 = vld [vmem:[%s615 + $0x121] sm:$0xff]
      %v929 = vld [vmem:[%s615 + $0x129] sm:$0xff]
      %v930 = vld [vmem:[%s615 + $0x139] sm:$0xff]
      %v931 = vld [vmem:[%s615 + $0x141] sm:$0xff]
      %v932 = vld [vmem:[%s615 + $0x151] sm:$0xff]
      %v933 = vld [vmem:[%s615 + $0x159] sm:$0xff]
      %v934 = vld [vmem:[%s615 + $0x169] sm:$0xff]
      %v935 = vld [vmem:[%s615 + $0x171] sm:$0xff]
      %936 = vst [vmem:[#allocation4 + $0x20] sm:$0xff] %v904
      %937 = vst [vmem:[#allocation4 + $0x68] sm:$0xff] %v905
      %938 = vst [vmem:[#allocation4 + $0xb0] sm:$0xff] %v906
      %939 = vst [vmem:[#allocation4 + $0xf8] sm:$0xff] %v907
      %940 = vst [vmem:[#allocation4 + $0x140] sm:$0xff] %v908
      %941 = vst [vmem:[#allocation4 + $0x188] sm:$0xff] %v909
      %942 = vst [vmem:[#allocation4 + $0x1d0] sm:$0xff] %v910
      %943 = vst [vmem:[#allocation4 + $0x218] sm:$0xff] %v911
      %944 = vst [vmem:[#allocation4 + $0x260] sm:$0xff] %v912
      %945 = vst [vmem:[#allocation4 + $0x2a8] sm:$0xff] %v913
      %946 = vst [vmem:[#allocation4 + $0x2f0] sm:$0xff] %v914
      %947 = vst [vmem:[#allocation4 + $0x338] sm:$0xff] %v915
      %948 = vst [vmem:[#allocation4 + $0x380] sm:$0xff] %v916
      %949 = vst [vmem:[#allocation4 + $0x3c8] sm:$0xff] %v917
      %950 = vst [vmem:[#allocation4 + $0x410] sm:$0xff] %v918
      %951 = vst [vmem:[#allocation4 + $0x458] sm:$0xff] %v919
      %952 = vst [vmem:[#allocation4 + $0x4a0] sm:$0xff] %v920
      %953 = vst [vmem:[#allocation4 + $0x4e8] sm:$0xff] %v921
      %954 = vst [vmem:[#allocation4 + $0x530] sm:$0xff] %v922
      %955 = vst [vmem:[#allocation4 + $0x578] sm:$0xff] %v923
      %956 = vst [vmem:[#allocation4 + $0x5c0] sm:$0xff] %v924
      %957 = vst [vmem:[#allocation4 + $0x608] sm:$0xff] %v925
      %958 = vst [vmem:[#allocation4 + $0x650] sm:$0xff] %v926
      %959 = vst [vmem:[#allocation4 + $0x698] sm:$0xff] %v927
      %960 = vst [vmem:[#allocation4 + $0x6e0] sm:$0xff] %v928
      %961 = vst [vmem:[#allocation4 + $0x728] sm:$0xff] %v929
      %962 = vst [vmem:[#allocation4 + $0x770] sm:$0xff] %v930
      %963 = vst [vmem:[#allocation4 + $0x7b8] sm:$0xff] %v931
      %964 = vst [vmem:[#allocation4 + $0x800] sm:$0xff] %v932
      %965 = vst [vmem:[#allocation4 + $0x848] sm:$0xff] %v933
      %966 = vst [vmem:[#allocation4 + $0x890] sm:$0xff] %v934
      %967 = vst [vmem:[#allocation4 + $0x8d8] sm:$0xff] %v935
      %v968 = vld [vmem:[%s615 + $0x2] sm:$0xff]
      %v969 = vld [vmem:[%s615 + $0xa] sm:$0xff]
      %v970 = vld [vmem:[%s615 + $0x1a] sm:$0xff]
      %v971 = vld [vmem:[%s615 + $0x22] sm:$0xff]
      %v972 = vld [vmem:[%s615 + $0x32] sm:$0xff]
      %v973 = vld [vmem:[%s615 + $0x3a] sm:$0xff]
      %v974 = vld [vmem:[%s615 + $0x4a] sm:$0xff]
      %v975 = vld [vmem:[%s615 + $0x52] sm:$0xff]
      %v976 = vld [vmem:[%s615 + $0x62] sm:$0xff]
      %v977 = vld [vmem:[%s615 + $0x6a] sm:$0xff]
      %v978 = vld [vmem:[%s615 + $0x7a] sm:$0xff]
      %v979 = vld [vmem:[%s615 + $0x82] sm:$0xff]
      %v980 = vld [vmem:[%s615 + $0x92] sm:$0xff]
      %v981 = vld [vmem:[%s615 + $0x9a] sm:$0xff]
      %v982 = vld [vmem:[%s615 + $0xaa] sm:$0xff]
      %v983 = vld [vmem:[%s615 + $0xb2] sm:$0xff]
      %v984 = vld [vmem:[%s615 + $0xc2] sm:$0xff]
      %v985 = vld [vmem:[%s615 + $0xca] sm:$0xff]
      %v986 = vld [vmem:[%s615 + $0xda] sm:$0xff]
      %v987 = vld [vmem:[%s615 + $0xe2] sm:$0xff]
      %v988 = vld [vmem:[%s615 + $0xf2] sm:$0xff]
      %v989 = vld [vmem:[%s615 + $0xfa] sm:$0xff]
      %v990 = vld [vmem:[%s615 + $0x10a] sm:$0xff]
      %v991 = vld [vmem:[%s615 + $0x112] sm:$0xff]
      %v992 = vld [vmem:[%s615 + $0x122] sm:$0xff]
      %v993 = vld [vmem:[%s615 + $0x12a] sm:$0xff]
      %v994 = vld [vmem:[%s615 + $0x13a] sm:$0xff]
      %v995 = vld [vmem:[%s615 + $0x142] sm:$0xff]
      %v996 = vld [vmem:[%s615 + $0x152] sm:$0xff]
      %v997 = vld [vmem:[%s615 + $0x15a] sm:$0xff]
      %v998 = vld [vmem:[%s615 + $0x16a] sm:$0xff]
      %v999 = vld [vmem:[%s615 + $0x172] sm:$0xff]
      %1000 = vst [vmem:[#allocation4 + $0x28] sm:$0xff] %v968
      %1001 = vst [vmem:[#allocation4 + $0x70] sm:$0xff] %v969
      %1002 = vst [vmem:[#allocation4 + $0xb8] sm:$0xff] %v970
      %1003 = vst [vmem:[#allocation4 + $0x100] sm:$0xff] %v971
      %1004 = vst [vmem:[#allocation4 + $0x148] sm:$0xff] %v972
      %1005 = vst [vmem:[#allocation4 + $0x190] sm:$0xff] %v973
      %1006 = vst [vmem:[#allocation4 + $0x1d8] sm:$0xff] %v974
      %1007 = vst [vmem:[#allocation4 + $0x220] sm:$0xff] %v975
      %1008 = vst [vmem:[#allocation4 + $0x268] sm:$0xff] %v976
      %1009 = vst [vmem:[#allocation4 + $0x2b0] sm:$0xff] %v977
      %1010 = vst [vmem:[#allocation4 + $0x2f8] sm:$0xff] %v978
      %1011 = vst [vmem:[#allocation4 + $0x340] sm:$0xff] %v979
      %1012 = vst [vmem:[#allocation4 + $0x388] sm:$0xff] %v980
      %1013 = vst [vmem:[#allocation4 + $0x3d0] sm:$0xff] %v981
      %1014 = vst [vmem:[#allocation4 + $0x418] sm:$0xff] %v982
      %1015 = vst [vmem:[#allocation4 + $0x460] sm:$0xff] %v983
      %1016 = vst [vmem:[#allocation4 + $0x4a8] sm:$0xff] %v984
      %1017 = vst [vmem:[#allocation4 + $0x4f0] sm:$0xff] %v985
      %1018 = vst [vmem:[#allocation4 + $0x538] sm:$0xff] %v986
      %1019 = vst [vmem:[#allocation4 + $0x580] sm:$0xff] %v987
      %1020 = vst [vmem:[#allocation4 + $0x5c8] sm:$0xff] %v988
      %1021 = vst [vmem:[#allocation4 + $0x610] sm:$0xff] %v989
      %1022 = vst [vmem:[#allocation4 + $0x658] sm:$0xff] %v990
      %1023 = vst [vmem:[#allocation4 + $0x6a0] sm:$0xff] %v991
      %1024 = vst [vmem:[#allocation4 + $0x6e8] sm:$0xff] %v992
      %1025 = vst [vmem:[#allocation4 + $0x730] sm:$0xff] %v993
      %1026 = vst [vmem:[#allocation4 + $0x778] sm:$0xff] %v994
      %1027 = vst [vmem:[#allocation4 + $0x7c0] sm:$0xff] %v995
      %1028 = vst [vmem:[#allocation4 + $0x808] sm:$0xff] %v996
      %1029 = vst [vmem:[#allocation4 + $0x850] sm:$0xff] %v997
      %1030 = vst [vmem:[#allocation4 + $0x898] sm:$0xff] %v998
      %1031 = vst [vmem:[#allocation4 + $0x8e0] sm:$0xff] %v999
      %s1032 = scalar_lea.vmem [#allocation2], 48
      %v1033 = vld [vmem:[%s1032] sm:$0xff]
      %v1034 = vld [vmem:[%s1032 + $0x8] sm:$0xff]
      %v1035 = vld [vmem:[%s1032 + $0x18] sm:$0xff]
      %v1036 = vld [vmem:[%s1032 + $0x20] sm:$0xff]
      %v1037 = vld [vmem:[%s1032 + $0x30] sm:$0xff]
      %v1038 = vld [vmem:[%s1032 + $0x38] sm:$0xff]
      %v1039 = vld [vmem:[%s1032 + $0x48] sm:$0xff]
      %v1040 = vld [vmem:[%s1032 + $0x50] sm:$0xff]
      %v1041 = vld [vmem:[%s1032 + $0x60] sm:$0xff]
      %v1042 = vld [vmem:[%s1032 + $0x68] sm:$0xff]
      %v1043 = vld [vmem:[%s1032 + $0x78] sm:$0xff]
      %v1044 = vld [vmem:[%s1032 + $0x80] sm:$0xff]
      %v1045 = vld [vmem:[%s1032 + $0x90] sm:$0xff]
      %v1046 = vld [vmem:[%s1032 + $0x98] sm:$0xff]
      %v1047 = vld [vmem:[%s1032 + $0xa8] sm:$0xff]
      %v1048 = vld [vmem:[%s1032 + $0xb0] sm:$0xff]
      %v1049 = vld [vmem:[%s1032 + $0xc0] sm:$0xff]
      %v1050 = vld [vmem:[%s1032 + $0xc8] sm:$0xff]
      %v1051 = vld [vmem:[%s1032 + $0xd8] sm:$0xff]
      %v1052 = vld [vmem:[%s1032 + $0xe0] sm:$0xff]
      %v1053 = vld [vmem:[%s1032 + $0xf0] sm:$0xff]
      %v1054 = vld [vmem:[%s1032 + $0xf8] sm:$0xff]
      %v1055 = vld [vmem:[%s1032 + $0x108] sm:$0xff]
      %v1056 = vld [vmem:[%s1032 + $0x110] sm:$0xff]
      %v1057 = vld [vmem:[%s1032 + $0x120] sm:$0xff]
      %v1058 = vld [vmem:[%s1032 + $0x128] sm:$0xff]
      %v1059 = vld [vmem:[%s1032 + $0x138] sm:$0xff]
      %v1060 = vld [vmem:[%s1032 + $0x140] sm:$0xff]
      %v1061 = vld [vmem:[%s1032 + $0x150] sm:$0xff]
      %v1062 = vld [vmem:[%s1032 + $0x158] sm:$0xff]
      %v1063 = vld [vmem:[%s1032 + $0x168] sm:$0xff]
      %v1064 = vld [vmem:[%s1032 + $0x170] sm:$0xff]
      %1065 = vst [vmem:[#allocation4 + $0x30] sm:$0xff] %v1033
      %1066 = vst [vmem:[#allocation4 + $0x78] sm:$0xff] %v1034
      %1067 = vst [vmem:[#allocation4 + $0xc0] sm:$0xff] %v1035
      %1068 = vst [vmem:[#allocation4 + $0x108] sm:$0xff] %v1036
      %1069 = vst [vmem:[#allocation4 + $0x150] sm:$0xff] %v1037
      %1070 = vst [vmem:[#allocation4 + $0x198] sm:$0xff] %v1038
      %1071 = vst [vmem:[#allocation4 + $0x1e0] sm:$0xff] %v1039
      %1072 = vst [vmem:[#allocation4 + $0x228] sm:$0xff] %v1040
      %1073 = vst [vmem:[#allocation4 + $0x270] sm:$0xff] %v1041
      %1074 = vst [vmem:[#allocation4 + $0x2b8] sm:$0xff] %v1042
      %1075 = vst [vmem:[#allocation4 + $0x300] sm:$0xff] %v1043
      %1076 = vst [vmem:[#allocation4 + $0x348] sm:$0xff] %v1044
      %1077 = vst [vmem:[#allocation4 + $0x390] sm:$0xff] %v1045
      %1078 = vst [vmem:[#allocation4 + $0x3d8] sm:$0xff] %v1046
      %1079 = vst [vmem:[#allocation4 + $0x420] sm:$0xff] %v1047
      %1080 = vst [vmem:[#allocation4 + $0x468] sm:$0xff] %v1048
      %1081 = vst [vmem:[#allocation4 + $0x4b0] sm:$0xff] %v1049
      %1082 = vst [vmem:[#allocation4 + $0x4f8] sm:$0xff] %v1050
      %1083 = vst [vmem:[#allocation4 + $0x540] sm:$0xff] %v1051
      %1084 = vst [vmem:[#allocation4 + $0x588] sm:$0xff] %v1052
      %1085 = vst [vmem:[#allocation4 + $0x5d0] sm:$0xff] %v1053
      %1086 = vst [vmem:[#allocation4 + $0x618] sm:$0xff] %v1054
      %1087 = vst [vmem:[#allocation4 + $0x660] sm:$0xff] %v1055
      %1088 = vst [vmem:[#allocation4 + $0x6a8] sm:$0xff] %v1056
      %1089 = vst [vmem:[#allocation4 + $0x6f0] sm:$0xff] %v1057
      %1090 = vst [vmem:[#allocation4 + $0x738] sm:$0xff] %v1058
      %1091 = vst [vmem:[#allocation4 + $0x780] sm:$0xff] %v1059
      %1092 = vst [vmem:[#allocation4 + $0x7c8] sm:$0xff] %v1060
      %1093 = vst [vmem:[#allocation4 + $0x810] sm:$0xff] %v1061
      %1094 = vst [vmem:[#allocation4 + $0x858] sm:$0xff] %v1062
      %1095 = vst [vmem:[#allocation4 + $0x8a0] sm:$0xff] %v1063
      %1096 = vst [vmem:[#allocation4 + $0x8e8] sm:$0xff] %v1064
      %v1097 = vld [vmem:[%s1032 + $0x1] sm:$0xff]
      %v1098 = vld [vmem:[%s1032 + $0x9] sm:$0xff]
      %v1099 = vld [vmem:[%s1032 + $0x19] sm:$0xff]
      %v1100 = vld [vmem:[%s1032 + $0x21] sm:$0xff]
      %v1101 = vld [vmem:[%s1032 + $0x31] sm:$0xff]
      %v1102 = vld [vmem:[%s1032 + $0x39] sm:$0xff]
      %v1103 = vld [vmem:[%s1032 + $0x49] sm:$0xff]
      %v1104 = vld [vmem:[%s1032 + $0x51] sm:$0xff]
      %v1105 = vld [vmem:[%s1032 + $0x61] sm:$0xff]
      %v1106 = vld [vmem:[%s1032 + $0x69] sm:$0xff]
      %v1107 = vld [vmem:[%s1032 + $0x79] sm:$0xff]
      %v1108 = vld [vmem:[%s1032 + $0x81] sm:$0xff]
      %v1109 = vld [vmem:[%s1032 + $0x91] sm:$0xff]
      %v1110 = vld [vmem:[%s1032 + $0x99] sm:$0xff]
      %v1111 = vld [vmem:[%s1032 + $0xa9] sm:$0xff]
      %v1112 = vld [vmem:[%s1032 + $0xb1] sm:$0xff]
      %v1113 = vld [vmem:[%s1032 + $0xc1] sm:$0xff]
      %v1114 = vld [vmem:[%s1032 + $0xc9] sm:$0xff]
      %v1115 = vld [vmem:[%s1032 + $0xd9] sm:$0xff]
      %v1116 = vld [vmem:[%s1032 + $0xe1] sm:$0xff]
      %v1117 = vld [vmem:[%s1032 + $0xf1] sm:$0xff]
      %v1118 = vld [vmem:[%s1032 + $0xf9] sm:$0xff]
      %v1119 = vld [vmem:[%s1032 + $0x109] sm:$0xff]
      %v1120 = vld [vmem:[%s1032 + $0x111] sm:$0xff]
      %v1121 = vld [vmem:[%s1032 + $0x121] sm:$0xff]
      %v1122 = vld [vmem:[%s1032 + $0x129] sm:$0xff]
      %v1123 = vld [vmem:[%s1032 + $0x139] sm:$0xff]
      %v1124 = vld [vmem:[%s1032 + $0x141] sm:$0xff]
      %v1125 = vld [vmem:[%s1032 + $0x151] sm:$0xff]
      %v1126 = vld [vmem:[%s1032 + $0x159] sm:$0xff]
      %v1127 = vld [vmem:[%s1032 + $0x169] sm:$0xff]
      %v1128 = vld [vmem:[%s1032 + $0x171] sm:$0xff]
      %1129 = vst [vmem:[#allocation4 + $0x38] sm:$0xff] %v1097
      %1130 = vst [vmem:[#allocation4 + $0x80] sm:$0xff] %v1098
      %1131 = vst [vmem:[#allocation4 + $0xc8] sm:$0xff] %v1099
      %1132 = vst [vmem:[#allocation4 + $0x110] sm:$0xff] %v1100
      %1133 = vst [vmem:[#allocation4 + $0x158] sm:$0xff] %v1101
      %1134 = vst [vmem:[#allocation4 + $0x1a0] sm:$0xff] %v1102
      %1135 = vst [vmem:[#allocation4 + $0x1e8] sm:$0xff] %v1103
      %1136 = vst [vmem:[#allocation4 + $0x230] sm:$0xff] %v1104
      %1137 = vst [vmem:[#allocation4 + $0x278] sm:$0xff] %v1105
      %1138 = vst [vmem:[#allocation4 + $0x2c0] sm:$0xff] %v1106
      %1139 = vst [vmem:[#allocation4 + $0x308] sm:$0xff] %v1107
      %1140 = vst [vmem:[#allocation4 + $0x350] sm:$0xff] %v1108
      %1141 = vst [vmem:[#allocation4 + $0x398] sm:$0xff] %v1109
      %1142 = vst [vmem:[#allocation4 + $0x3e0] sm:$0xff] %v1110
      %1143 = vst [vmem:[#allocation4 + $0x428] sm:$0xff] %v1111
      %1144 = vst [vmem:[#allocation4 + $0x470] sm:$0xff] %v1112
      %1145 = vst [vmem:[#allocation4 + $0x4b8] sm:$0xff] %v1113
      %1146 = vst [vmem:[#allocation4 + $0x500] sm:$0xff] %v1114
      %1147 = vst [vmem:[#allocation4 + $0x548] sm:$0xff] %v1115
      %1148 = vst [vmem:[#allocation4 + $0x590] sm:$0xff] %v1116
      %1149 = vst [vmem:[#allocation4 + $0x5d8] sm:$0xff] %v1117
      %1150 = vst [vmem:[#allocation4 + $0x620] sm:$0xff] %v1118
      %1151 = vst [vmem:[#allocation4 + $0x668] sm:$0xff] %v1119
      %1152 = vst [vmem:[#allocation4 + $0x6b0] sm:$0xff] %v1120
      %1153 = vst [vmem:[#allocation4 + $0x6f8] sm:$0xff] %v1121
      %1154 = vst [vmem:[#allocation4 + $0x740] sm:$0xff] %v1122
      %1155 = vst [vmem:[#allocation4 + $0x788] sm:$0xff] %v1123
      %1156 = vst [vmem:[#allocation4 + $0x7d0] sm:$0xff] %v1124
      %1157 = vst [vmem:[#allocation4 + $0x818] sm:$0xff] %v1125
      %1158 = vst [vmem:[#allocation4 + $0x860] sm:$0xff] %v1126
      %1159 = vst [vmem:[#allocation4 + $0x8a8] sm:$0xff] %v1127
      %1160 = vst [vmem:[#allocation4 + $0x8f0] sm:$0xff] %v1128
      %v1161 = vld [vmem:[%s1032 + $0x2] sm:$0xff]
      %v1162 = vld [vmem:[%s1032 + $0xa] sm:$0xff]
      %v1163 = vld [vmem:[%s1032 + $0x1a] sm:$0xff]
      %v1164 = vld [vmem:[%s1032 + $0x22] sm:$0xff]
      %v1165 = vld [vmem:[%s1032 + $0x32] sm:$0xff]
      %v1166 = vld [vmem:[%s1032 + $0x3a] sm:$0xff]
      %v1167 = vld [vmem:[%s1032 + $0x4a] sm:$0xff]
      %v1168 = vld [vmem:[%s1032 + $0x52] sm:$0xff]
      %v1169 = vld [vmem:[%s1032 + $0x62] sm:$0xff]
      %v1170 = vld [vmem:[%s1032 + $0x6a] sm:$0xff]
      %v1171 = vld [vmem:[%s1032 + $0x7a] sm:$0xff]
      %v1172 = vld [vmem:[%s1032 + $0x82] sm:$0xff]
      %v1173 = vld [vmem:[%s1032 + $0x92] sm:$0xff]
      %v1174 = vld [vmem:[%s1032 + $0x9a] sm:$0xff]
      %v1175 = vld [vmem:[%s1032 + $0xaa] sm:$0xff]
      %v1176 = vld [vmem:[%s1032 + $0xb2] sm:$0xff]
      %v1177 = vld [vmem:[%s1032 + $0xc2] sm:$0xff]
      %v1178 = vld [vmem:[%s1032 + $0xca] sm:$0xff]
      %v1179 = vld [vmem:[%s1032 + $0xda] sm:$0xff]
      %v1180 = vld [vmem:[%s1032 + $0xe2] sm:$0xff]
      %v1181 = vld [vmem:[%s1032 + $0xf2] sm:$0xff]
      %v1182 = vld [vmem:[%s1032 + $0xfa] sm:$0xff]
      %v1183 = vld [vmem:[%s1032 + $0x10a] sm:$0xff]
      %v1184 = vld [vmem:[%s1032 + $0x112] sm:$0xff]
      %v1185 = vld [vmem:[%s1032 + $0x122] sm:$0xff]
      %v1186 = vld [vmem:[%s1032 + $0x12a] sm:$0xff]
      %v1187 = vld [vmem:[%s1032 + $0x13a] sm:$0xff]
      %v1188 = vld [vmem:[%s1032 + $0x142] sm:$0xff]
      %v1189 = vld [vmem:[%s1032 + $0x152] sm:$0xff]
      %v1190 = vld [vmem:[%s1032 + $0x15a] sm:$0xff]
      %v1191 = vld [vmem:[%s1032 + $0x16a] sm:$0xff]
      %v1192 = vld [vmem:[%s1032 + $0x172] sm:$0xff]
      %1193 = vst [vmem:[#allocation4 + $0x40] sm:$0xff] %v1161
      %1194 = vst [vmem:[#allocation4 + $0x88] sm:$0xff] %v1162
      %1195 = vst [vmem:[#allocation4 + $0xd0] sm:$0xff] %v1163
      %1196 = vst [vmem:[#allocation4 + $0x118] sm:$0xff] %v1164
      %1197 = vst [vmem:[#allocation4 + $0x160] sm:$0xff] %v1165
      %1198 = vst [vmem:[#allocation4 + $0x1a8] sm:$0xff] %v1166
      %1199 = vst [vmem:[#allocation4 + $0x1f0] sm:$0xff] %v1167
      %1200 = vst [vmem:[#allocation4 + $0x238] sm:$0xff] %v1168
      %1201 = vst [vmem:[#allocation4 + $0x280] sm:$0xff] %v1169
      %1202 = vst [vmem:[#allocation4 + $0x2c8] sm:$0xff] %v1170
      %1203 = vst [vmem:[#allocation4 + $0x310] sm:$0xff] %v1171
      %1204 = vst [vmem:[#allocation4 + $0x358] sm:$0xff] %v1172
      %1205 = vst [vmem:[#allocation4 + $0x3a0] sm:$0xff] %v1173
      %1206 = vst [vmem:[#allocation4 + $0x3e8] sm:$0xff] %v1174
      %1207 = vst [vmem:[#allocation4 + $0x430] sm:$0xff] %v1175
      %1208 = vst [vmem:[#allocation4 + $0x478] sm:$0xff] %v1176
      %1209 = vst [vmem:[#allocation4 + $0x4c0] sm:$0xff] %v1177
      %1210 = vst [vmem:[#allocation4 + $0x508] sm:$0xff] %v1178
      %1211 = vst [vmem:[#allocation4 + $0x550] sm:$0xff] %v1179
      %1212 = vst [vmem:[#allocation4 + $0x598] sm:$0xff] %v1180
      %1213 = vst [vmem:[#allocation4 + $0x5e0] sm:$0xff] %v1181
      %1214 = vst [vmem:[#allocation4 + $0x628] sm:$0xff] %v1182
      %1215 = vst [vmem:[#allocation4 + $0x670] sm:$0xff] %v1183
      %1216 = vst [vmem:[#allocation4 + $0x6b8] sm:$0xff] %v1184
      %1217 = vst [vmem:[#allocation4 + $0x700] sm:$0xff] %v1185
      %1218 = vst [vmem:[#allocation4 + $0x748] sm:$0xff] %v1186
      %1219 = vst [vmem:[#allocation4 + $0x790] sm:$0xff] %v1187
      %1220 = vst [vmem:[#allocation4 + $0x7d8] sm:$0xff] %v1188
      %1221 = vst [vmem:[#allocation4 + $0x820] sm:$0xff] %v1189
      %1222 = vst [vmem:[#allocation4 + $0x868] sm:$0xff] %v1190
      %1223 = vst [vmem:[#allocation4 + $0x8b0] sm:$0xff] %v1191
      %1224 = vst [vmem:[#allocation4 + $0x8f8] sm:$0xff] %v1192
      %v1225 = vld [vmem:[#allocation4] sm:$0xff]
      %v1226 = vld [vmem:[#allocation4 + $0x8] sm:$0xff]
      %v1227 = vld [vmem:[#allocation4 + $0x10] sm:$0xff]
      %v1228 = vld [vmem:[#allocation4 + $0x18] sm:$0xff]
      %v1229 = vld [vmem:[#allocation4 + $0x20] sm:$0xff]
      %v1230 = vld [vmem:[#allocation4 + $0x28] sm:$0xff]
      %v1231 = vld [vmem:[#allocation4 + $0x30] sm:$0xff]
      %v1232 = vld [vmem:[#allocation4 + $0x38] sm:$0xff]
      %v1233 = vld [vmem:[#allocation4 + $0x40] sm:$0xff]
      %v1234 = vld [vmem:[#allocation4 + $0x48] sm:$0xff]
      %v1235 = vld [vmem:[#allocation4 + $0x50] sm:$0xff]
      %v1236 = vld [vmem:[#allocation4 + $0x58] sm:$0xff]
      %v1237 = vld [vmem:[#allocation4 + $0x60] sm:$0xff]
      %v1238 = vld [vmem:[#allocation4 + $0x68] sm:$0xff]
      %v1239 = vld [vmem:[#allocation4 + $0x70] sm:$0xff]
      %v1240 = vld [vmem:[#allocation4 + $0x78] sm:$0xff]
      %v1241 = vld [vmem:[#allocation4 + $0x80] sm:$0xff]
      %v1242 = vld [vmem:[#allocation4 + $0x88] sm:$0xff]
      %v1243 = vld [vmem:[#allocation4 + $0x90] sm:$0xff]
      %v1244 = vld [vmem:[#allocation4 + $0x98] sm:$0xff]
      %v1245 = vld [vmem:[#allocation4 + $0xa0] sm:$0xff]
      %v1246 = vld [vmem:[#allocation4 + $0xa8] sm:$0xff]
      %v1247 = vld [vmem:[#allocation4 + $0xb0] sm:$0xff]
      %v1248 = vld [vmem:[#allocation4 + $0xb8] sm:$0xff]
      %v1249 = vld [vmem:[#allocation4 + $0xc0] sm:$0xff]
      %v1250 = vld [vmem:[#allocation4 + $0xc8] sm:$0xff]
      %v1251 = vld [vmem:[#allocation4 + $0xd0] sm:$0xff]
      %v1252 = vld [vmem:[#allocation4 + $0xd8] sm:$0xff]
      %v1253 = vld [vmem:[#allocation4 + $0xe0] sm:$0xff]
      %v1254 = vld [vmem:[#allocation4 + $0xe8] sm:$0xff]
      %v1255 = vld [vmem:[#allocation4 + $0xf0] sm:$0xff]
      %v1256 = vld [vmem:[#allocation4 + $0xf8] sm:$0xff]
      %v1257 = vld [vmem:[#allocation4 + $0x100] sm:$0xff]
      %v1258 = vld [vmem:[#allocation4 + $0x108] sm:$0xff]
      %v1259 = vld [vmem:[#allocation4 + $0x110] sm:$0xff]
      %v1260 = vld [vmem:[#allocation4 + $0x118] sm:$0xff]
      %v1261 = vld [vmem:[#allocation4 + $0x120] sm:$0xff]
      %v1262 = vld [vmem:[#allocation4 + $0x128] sm:$0xff]
      %v1263 = vld [vmem:[#allocation4 + $0x130] sm:$0xff]
      %v1264 = vld [vmem:[#allocation4 + $0x138] sm:$0xff]
      %v1265 = vld [vmem:[#allocation4 + $0x140] sm:$0xff]
      %v1266 = vld [vmem:[#allocation4 + $0x148] sm:$0xff]
      %v1267 = vld [vmem:[#allocation4 + $0x150] sm:$0xff]
      %v1268 = vld [vmem:[#allocation4 + $0x158] sm:$0xff]
      %v1269 = vld [vmem:[#allocation4 + $0x160] sm:$0xff]
      %v1270 = vld [vmem:[#allocation4 + $0x168] sm:$0xff]
      %v1271 = vld [vmem:[#allocation4 + $0x170] sm:$0xff]
      %v1272 = vld [vmem:[#allocation4 + $0x178] sm:$0xff]
      %v1273 = vld [vmem:[#allocation4 + $0x180] sm:$0xff]
      %v1274 = vld [vmem:[#allocation4 + $0x188] sm:$0xff]
      %v1275 = vld [vmem:[#allocation4 + $0x190] sm:$0xff]
      %v1276 = vld [vmem:[#allocation4 + $0x198] sm:$0xff]
      %v1277 = vld [vmem:[#allocation4 + $0x1a0] sm:$0xff]
      %v1278 = vld [vmem:[#allocation4 + $0x1a8] sm:$0xff]
      %v1279 = vld [vmem:[#allocation4 + $0x1b0] sm:$0xff]
      %v1280 = vld [vmem:[#allocation4 + $0x1b8] sm:$0xff]
      %v1281 = vld [vmem:[#allocation4 + $0x1c0] sm:$0xff]
      %v1282 = vld [vmem:[#allocation4 + $0x1c8] sm:$0xff]
      %v1283 = vld [vmem:[#allocation4 + $0x1d0] sm:$0xff]
      %v1284 = vld [vmem:[#allocation4 + $0x1d8] sm:$0xff]
      %v1285 = vld [vmem:[#allocation4 + $0x1e0] sm:$0xff]
      %v1286 = vld [vmem:[#allocation4 + $0x1e8] sm:$0xff]
      %v1287 = vld [vmem:[#allocation4 + $0x1f0] sm:$0xff]
      %v1288 = vld [vmem:[#allocation4 + $0x1f8] sm:$0xff]
      %v1289 = vld [vmem:[#allocation4 + $0x200] sm:$0xff]
      %v1290 = vld [vmem:[#allocation4 + $0x208] sm:$0xff]
      %v1291 = vld [vmem:[#allocation4 + $0x210] sm:$0xff]
      %v1292 = vld [vmem:[#allocation4 + $0x218] sm:$0xff]
      %v1293 = vld [vmem:[#allocation4 + $0x220] sm:$0xff]
      %v1294 = vld [vmem:[#allocation4 + $0x228] sm:$0xff]
      %v1295 = vld [vmem:[#allocation4 + $0x230] sm:$0xff]
      %v1296 = vld [vmem:[#allocation4 + $0x238] sm:$0xff]
      %v1297 = vld [vmem:[#allocation4 + $0x240] sm:$0xff]
      %v1298 = vld [vmem:[#allocation4 + $0x248] sm:$0xff]
      %v1299 = vld [vmem:[#allocation4 + $0x250] sm:$0xff]
      %v1300 = vld [vmem:[#allocation4 + $0x258] sm:$0xff]
      %v1301 = vld [vmem:[#allocation4 + $0x260] sm:$0xff]
      %v1302 = vld [vmem:[#allocation4 + $0x268] sm:$0xff]
      %v1303 = vld [vmem:[#allocation4 + $0x270] sm:$0xff]
      %v1304 = vld [vmem:[#allocation4 + $0x278] sm:$0xff]
      %v1305 = vld [vmem:[#allocation4 + $0x280] sm:$0xff]
      %v1306 = vld [vmem:[#allocation4 + $0x288] sm:$0xff]
      %v1307 = vld [vmem:[#allocation4 + $0x290] sm:$0xff]
      %v1308 = vld [vmem:[#allocation4 + $0x298] sm:$0xff]
      %v1309 = vld [vmem:[#allocation4 + $0x2a0] sm:$0xff]
      %v1310 = vld [vmem:[#allocation4 + $0x2a8] sm:$0xff]
      %v1311 = vld [vmem:[#allocation4 + $0x2b0] sm:$0xff]
      %v1312 = vld [vmem:[#allocation4 + $0x2b8] sm:$0xff]
      %v1313 = vld [vmem:[#allocation4 + $0x2c0] sm:$0xff]
      %v1314 = vld [vmem:[#allocation4 + $0x2c8] sm:$0xff]
      %v1315 = vld [vmem:[#allocation4 + $0x2d0] sm:$0xff]
      %v1316 = vld [vmem:[#allocation4 + $0x2d8] sm:$0xff]
      %v1317 = vld [vmem:[#allocation4 + $0x2e0] sm:$0xff]
      %v1318 = vld [vmem:[#allocation4 + $0x2e8] sm:$0xff]
      %v1319 = vld [vmem:[#allocation4 + $0x2f0] sm:$0xff]
      %v1320 = vld [vmem:[#allocation4 + $0x2f8] sm:$0xff]
      %v1321 = vld [vmem:[#allocation4 + $0x300] sm:$0xff]
      %v1322 = vld [vmem:[#allocation4 + $0x308] sm:$0xff]
      %v1323 = vld [vmem:[#allocation4 + $0x310] sm:$0xff]
      %v1324 = vld [vmem:[#allocation4 + $0x318] sm:$0xff]
      %v1325 = vld [vmem:[#allocation4 + $0x320] sm:$0xff]
      %v1326 = vld [vmem:[#allocation4 + $0x328] sm:$0xff]
      %v1327 = vld [vmem:[#allocation4 + $0x330] sm:$0xff]
      %v1328 = vld [vmem:[#allocation4 + $0x338] sm:$0xff]
      %v1329 = vld [vmem:[#allocation4 + $0x340] sm:$0xff]
      %v1330 = vld [vmem:[#allocation4 + $0x348] sm:$0xff]
      %v1331 = vld [vmem:[#allocation4 + $0x350] sm:$0xff]
      %v1332 = vld [vmem:[#allocation4 + $0x358] sm:$0xff]
      %v1333 = vld [vmem:[#allocation4 + $0x360] sm:$0xff]
      %v1334 = vld [vmem:[#allocation4 + $0x368] sm:$0xff]
      %v1335 = vld [vmem:[#allocation4 + $0x370] sm:$0xff]
      %v1336 = vld [vmem:[#allocation4 + $0x378] sm:$0xff]
      %v1337 = vld [vmem:[#allocation4 + $0x380] sm:$0xff]
      %v1338 = vld [vmem:[#allocation4 + $0x388] sm:$0xff]
      %v1339 = vld [vmem:[#allocation4 + $0x390] sm:$0xff]
      %v1340 = vld [vmem:[#allocation4 + $0x398] sm:$0xff]
      %v1341 = vld [vmem:[#allocation4 + $0x3a0] sm:$0xff]
      %v1342 = vld [vmem:[#allocation4 + $0x3a8] sm:$0xff]
      %v1343 = vld [vmem:[#allocation4 + $0x3b0] sm:$0xff]
      %v1344 = vld [vmem:[#allocation4 + $0x3b8] sm:$0xff]
      %v1345 = vld [vmem:[#allocation4 + $0x3c0] sm:$0xff]
      %v1346 = vld [vmem:[#allocation4 + $0x3c8] sm:$0xff]
      %v1347 = vld [vmem:[#allocation4 + $0x3d0] sm:$0xff]
      %v1348 = vld [vmem:[#allocation4 + $0x3d8] sm:$0xff]
      %v1349 = vld [vmem:[#allocation4 + $0x3e0] sm:$0xff]
      %v1350 = vld [vmem:[#allocation4 + $0x3e8] sm:$0xff]
      %v1351 = vld [vmem:[#allocation4 + $0x3f0] sm:$0xff]
      %v1352 = vld [vmem:[#allocation4 + $0x3f8] sm:$0xff]
      %v1353 = vld [vmem:[#allocation4 + $0x400] sm:$0xff]
      %v1354 = vld [vmem:[#allocation4 + $0x408] sm:$0xff]
      %v1355 = vld [vmem:[#allocation4 + $0x410] sm:$0xff]
      %v1356 = vld [vmem:[#allocation4 + $0x418] sm:$0xff]
      %v1357 = vld [vmem:[#allocation4 + $0x420] sm:$0xff]
      %v1358 = vld [vmem:[#allocation4 + $0x428] sm:$0xff]
      %v1359 = vld [vmem:[#allocation4 + $0x430] sm:$0xff]
      %v1360 = vld [vmem:[#allocation4 + $0x438] sm:$0xff]
      %v1361 = vld [vmem:[#allocation4 + $0x440] sm:$0xff]
      %v1362 = vld [vmem:[#allocation4 + $0x448] sm:$0xff]
      %v1363 = vld [vmem:[#allocation4 + $0x450] sm:$0xff]
      %v1364 = vld [vmem:[#allocation4 + $0x458] sm:$0xff]
      %v1365 = vld [vmem:[#allocation4 + $0x460] sm:$0xff]
      %v1366 = vld [vmem:[#allocation4 + $0x468] sm:$0xff]
      %v1367 = vld [vmem:[#allocation4 + $0x470] sm:$0xff]
      %v1368 = vld [vmem:[#allocation4 + $0x478] sm:$0xff]
      %v1369 = vld [vmem:[#allocation4 + $0x480] sm:$0xff]
      %v1370 = vld [vmem:[#allocation4 + $0x488] sm:$0xff]
      %v1371 = vld [vmem:[#allocation4 + $0x490] sm:$0xff]
      %v1372 = vld [vmem:[#allocation4 + $0x498] sm:$0xff]
      %v1373 = vld [vmem:[#allocation4 + $0x4a0] sm:$0xff]
      %v1374 = vld [vmem:[#allocation4 + $0x4a8] sm:$0xff]
      %v1375 = vld [vmem:[#allocation4 + $0x4b0] sm:$0xff]
      %v1376 = vld [vmem:[#allocation4 + $0x4b8] sm:$0xff]
      %v1377 = vld [vmem:[#allocation4 + $0x4c0] sm:$0xff]
      %v1378 = vld [vmem:[#allocation4 + $0x4c8] sm:$0xff]
      %v1379 = vld [vmem:[#allocation4 + $0x4d0] sm:$0xff]
      %v1380 = vld [vmem:[#allocation4 + $0x4d8] sm:$0xff]
      %v1381 = vld [vmem:[#allocation4 + $0x4e0] sm:$0xff]
      %v1382 = vld [vmem:[#allocation4 + $0x4e8] sm:$0xff]
      %v1383 = vld [vmem:[#allocation4 + $0x4f0] sm:$0xff]
      %v1384 = vld [vmem:[#allocation4 + $0x4f8] sm:$0xff]
      %v1385 = vld [vmem:[#allocation4 + $0x500] sm:$0xff]
      %v1386 = vld [vmem:[#allocation4 + $0x508] sm:$0xff]
      %v1387 = vld [vmem:[#allocation4 + $0x510] sm:$0xff]
      %v1388 = vld [vmem:[#allocation4 + $0x518] sm:$0xff]
      %v1389 = vld [vmem:[#allocation4 + $0x520] sm:$0xff]
      %v1390 = vld [vmem:[#allocation4 + $0x528] sm:$0xff]
      %v1391 = vld [vmem:[#allocation4 + $0x530] sm:$0xff]
      %v1392 = vld [vmem:[#allocation4 + $0x538] sm:$0xff]
      %v1393 = vld [vmem:[#allocation4 + $0x540] sm:$0xff]
      %v1394 = vld [vmem:[#allocation4 + $0x548] sm:$0xff]
      %v1395 = vld [vmem:[#allocation4 + $0x550] sm:$0xff]
      %v1396 = vld [vmem:[#allocation4 + $0x558] sm:$0xff]
      %v1397 = vld [vmem:[#allocation4 + $0x560] sm:$0xff]
      %v1398 = vld [vmem:[#allocation4 + $0x568] sm:$0xff]
      %v1399 = vld [vmem:[#allocation4 + $0x570] sm:$0xff]
      %v1400 = vld [vmem:[#allocation4 + $0x578] sm:$0xff]
      %v1401 = vld [vmem:[#allocation4 + $0x580] sm:$0xff]
      %v1402 = vld [vmem:[#allocation4 + $0x588] sm:$0xff]
      %v1403 = vld [vmem:[#allocation4 + $0x590] sm:$0xff]
      %v1404 = vld [vmem:[#allocation4 + $0x598] sm:$0xff]
      %v1405 = vld [vmem:[#allocation4 + $0x5a0] sm:$0xff]
      %v1406 = vld [vmem:[#allocation4 + $0x5a8] sm:$0xff]
      %v1407 = vld [vmem:[#allocation4 + $0x5b0] sm:$0xff]
      %v1408 = vld [vmem:[#allocation4 + $0x5b8] sm:$0xff]
      %v1409 = vld [vmem:[#allocation4 + $0x5c0] sm:$0xff]
      %v1410 = vld [vmem:[#allocation4 + $0x5c8] sm:$0xff]
      %v1411 = vld [vmem:[#allocation4 + $0x5d0] sm:$0xff]
      %v1412 = vld [vmem:[#allocation4 + $0x5d8] sm:$0xff]
      %v1413 = vld [vmem:[#allocation4 + $0x5e0] sm:$0xff]
      %v1414 = vld [vmem:[#allocation4 + $0x5e8] sm:$0xff]
      %v1415 = vld [vmem:[#allocation4 + $0x5f0] sm:$0xff]
      %v1416 = vld [vmem:[#allocation4 + $0x5f8] sm:$0xff]
      %v1417 = vld [vmem:[#allocation4 + $0x600] sm:$0xff]
      %v1418 = vld [vmem:[#allocation4 + $0x608] sm:$0xff]
      %v1419 = vld [vmem:[#allocation4 + $0x610] sm:$0xff]
      %v1420 = vld [vmem:[#allocation4 + $0x618] sm:$0xff]
      %v1421 = vld [vmem:[#allocation4 + $0x620] sm:$0xff]
      %v1422 = vld [vmem:[#allocation4 + $0x628] sm:$0xff]
      %v1423 = vld [vmem:[#allocation4 + $0x630] sm:$0xff]
      %v1424 = vld [vmem:[#allocation4 + $0x638] sm:$0xff]
      %v1425 = vld [vmem:[#allocation4 + $0x640] sm:$0xff]
      %v1426 = vld [vmem:[#allocation4 + $0x648] sm:$0xff]
      %v1427 = vld [vmem:[#allocation4 + $0x650] sm:$0xff]
      %v1428 = vld [vmem:[#allocation4 + $0x658] sm:$0xff]
      %v1429 = vld [vmem:[#allocation4 + $0x660] sm:$0xff]
      %v1430 = vld [vmem:[#allocation4 + $0x668] sm:$0xff]
      %v1431 = vld [vmem:[#allocation4 + $0x670] sm:$0xff]
      %v1432 = vld [vmem:[#allocation4 + $0x678] sm:$0xff]
      %v1433 = vld [vmem:[#allocation4 + $0x680] sm:$0xff]
      %v1434 = vld [vmem:[#allocation4 + $0x688] sm:$0xff]
      %v1435 = vld [vmem:[#allocation4 + $0x690] sm:$0xff]
      %v1436 = vld [vmem:[#allocation4 + $0x698] sm:$0xff]
      %v1437 = vld [vmem:[#allocation4 + $0x6a0] sm:$0xff]
      %v1438 = vld [vmem:[#allocation4 + $0x6a8] sm:$0xff]
      %v1439 = vld [vmem:[#allocation4 + $0x6b0] sm:$0xff]
      %v1440 = vld [vmem:[#allocation4 + $0x6b8] sm:$0xff]
      %v1441 = vld [vmem:[#allocation4 + $0x6c0] sm:$0xff]
      %v1442 = vld [vmem:[#allocation4 + $0x6c8] sm:$0xff]
      %v1443 = vld [vmem:[#allocation4 + $0x6d0] sm:$0xff]
      %v1444 = vld [vmem:[#allocation4 + $0x6d8] sm:$0xff]
      %v1445 = vld [vmem:[#allocation4 + $0x6e0] sm:$0xff]
      %v1446 = vld [vmem:[#allocation4 + $0x6e8] sm:$0xff]
      %v1447 = vld [vmem:[#allocation4 + $0x6f0] sm:$0xff]
      %v1448 = vld [vmem:[#allocation4 + $0x6f8] sm:$0xff]
      %v1449 = vld [vmem:[#allocation4 + $0x700] sm:$0xff]
      %v1450 = vld [vmem:[#allocation4 + $0x708] sm:$0xff]
      %v1451 = vld [vmem:[#allocation4 + $0x710] sm:$0xff]
      %v1452 = vld [vmem:[#allocation4 + $0x718] sm:$0xff]
      %v1453 = vld [vmem:[#allocation4 + $0x720] sm:$0xff]
      %v1454 = vld [vmem:[#allocation4 + $0x728] sm:$0xff]
      %v1455 = vld [vmem:[#allocation4 + $0x730] sm:$0xff]
      %v1456 = vld [vmem:[#allocation4 + $0x738] sm:$0xff]
      %v1457 = vld [vmem:[#allocation4 + $0x740] sm:$0xff]
      %v1458 = vld [vmem:[#allocation4 + $0x748] sm:$0xff]
      %v1459 = vld [vmem:[#allocation4 + $0x750] sm:$0xff]
      %v1460 = vld [vmem:[#allocation4 + $0x758] sm:$0xff]
      %v1461 = vld [vmem:[#allocation4 + $0x760] sm:$0xff]
      %v1462 = vld [vmem:[#allocation4 + $0x768] sm:$0xff]
      %v1463 = vld [vmem:[#allocation4 + $0x770] sm:$0xff]
      %v1464 = vld [vmem:[#allocation4 + $0x778] sm:$0xff]
      %v1465 = vld [vmem:[#allocation4 + $0x780] sm:$0xff]
      %v1466 = vld [vmem:[#allocation4 + $0x788] sm:$0xff]
      %v1467 = vld [vmem:[#allocation4 + $0x790] sm:$0xff]
      %v1468 = vld [vmem:[#allocation4 + $0x798] sm:$0xff]
      %v1469 = vld [vmem:[#allocation4 + $0x7a0] sm:$0xff]
      %v1470 = vld [vmem:[#allocation4 + $0x7a8] sm:$0xff]
      %v1471 = vld [vmem:[#allocation4 + $0x7b0] sm:$0xff]
      %v1472 = vld [vmem:[#allocation4 + $0x7b8] sm:$0xff]
      %v1473 = vld [vmem:[#allocation4 + $0x7c0] sm:$0xff]
      %v1474 = vld [vmem:[#allocation4 + $0x7c8] sm:$0xff]
      %v1475 = vld [vmem:[#allocation4 + $0x7d0] sm:$0xff]
      %v1476 = vld [vmem:[#allocation4 + $0x7d8] sm:$0xff]
      %v1477 = vld [vmem:[#allocation4 + $0x7e0] sm:$0xff]
      %v1478 = vld [vmem:[#allocation4 + $0x7e8] sm:$0xff]
      %v1479 = vld [vmem:[#allocation4 + $0x7f0] sm:$0xff]
      %v1480 = vld [vmem:[#allocation4 + $0x7f8] sm:$0xff]
      %v1481 = vld [vmem:[#allocation4 + $0x800] sm:$0xff]
      %v1482 = vld [vmem:[#allocation4 + $0x808] sm:$0xff]
      %v1483 = vld [vmem:[#allocation4 + $0x810] sm:$0xff]
      %v1484 = vld [vmem:[#allocation4 + $0x818] sm:$0xff]
      %v1485 = vld [vmem:[#allocation4 + $0x820] sm:$0xff]
      %v1486 = vld [vmem:[#allocation4 + $0x828] sm:$0xff]
      %v1487 = vld [vmem:[#allocation4 + $0x830] sm:$0xff]
      %v1488 = vld [vmem:[#allocation4 + $0x838] sm:$0xff]
      %v1489 = vld [vmem:[#allocation4 + $0x840] sm:$0xff]
      %v1490 = vld [vmem:[#allocation4 + $0x848] sm:$0xff]
      %v1491 = vld [vmem:[#allocation4 + $0x850] sm:$0xff]
      %v1492 = vld [vmem:[#allocation4 + $0x858] sm:$0xff]
      %v1493 = vld [vmem:[#allocation4 + $0x860] sm:$0xff]
      %v1494 = vld [vmem:[#allocation4 + $0x868] sm:$0xff]
      %v1495 = vld [vmem:[#allocation4 + $0x870] sm:$0xff]
      %v1496 = vld [vmem:[#allocation4 + $0x878] sm:$0xff]
      %v1497 = vld [vmem:[#allocation4 + $0x880] sm:$0xff]
      %v1498 = vld [vmem:[#allocation4 + $0x888] sm:$0xff]
      %v1499 = vld [vmem:[#allocation4 + $0x890] sm:$0xff]
      %v1500 = vld [vmem:[#allocation4 + $0x898] sm:$0xff]
      %v1501 = vld [vmem:[#allocation4 + $0x8a0] sm:$0xff]
      %v1502 = vld [vmem:[#allocation4 + $0x8a8] sm:$0xff]
      %v1503 = vld [vmem:[#allocation4 + $0x8b0] sm:$0xff]
      %v1504 = vld [vmem:[#allocation4 + $0x8b8] sm:$0xff]
      %v1505 = vld [vmem:[#allocation4 + $0x8c0] sm:$0xff]
      %v1506 = vld [vmem:[#allocation4 + $0x8c8] sm:$0xff]
      %v1507 = vld [vmem:[#allocation4 + $0x8d0] sm:$0xff]
      %v1508 = vld [vmem:[#allocation4 + $0x8d8] sm:$0xff]
      %v1509 = vld [vmem:[#allocation4 + $0x8e0] sm:$0xff]
      %v1510 = vld [vmem:[#allocation4 + $0x8e8] sm:$0xff]
      %v1511 = vld [vmem:[#allocation4 + $0x8f0] sm:$0xff]
      %v1512 = vld [vmem:[#allocation4 + $0x8f8] sm:$0xff]
      %v1513 = vld [vmem:[%s3] sm:$0xff]
      %v1514 = vld [vmem:[%s3 + $0x8] sm:$0xff]
      %v1515 = vld [vmem:[%s3 + $0x10] sm:$0xff]
      %v1516 = vld [vmem:[%s3 + $0x18] sm:$0xff]
      %v1517 = vld [vmem:[%s3 + $0x20] sm:$0xff]
      %v1518 = vld [vmem:[%s3 + $0x28] sm:$0xff]
      %v1519 = vld [vmem:[%s3 + $0x30] sm:$0xff]
      %v1520 = vld [vmem:[%s3 + $0x38] sm:$0xff]
      %v1521 = vld [vmem:[%s3 + $0x40] sm:$0xff]
      %v1522 = vld [vmem:[%s3 + $0x48] sm:$0xff]
      %v1523 = vld [vmem:[%s3 + $0x50] sm:$0xff]
      %v1524 = vld [vmem:[%s3 + $0x58] sm:$0xff]
      %v1525 = vld [vmem:[%s3 + $0x60] sm:$0xff]
      %v1526 = vld [vmem:[%s3 + $0x68] sm:$0xff]
      %v1527 = vld [vmem:[%s3 + $0x70] sm:$0xff]
      %v1528 = vld [vmem:[%s3 + $0x78] sm:$0xff]
      %v1529 = vld [vmem:[%s3 + $0x80] sm:$0xff]
      %v1530 = vld [vmem:[%s3 + $0x88] sm:$0xff]
      %v1531 = vld [vmem:[%s3 + $0x90] sm:$0xff]
      %v1532 = vld [vmem:[%s3 + $0x98] sm:$0xff]
      %v1533 = vld [vmem:[%s3 + $0xa0] sm:$0xff]
      %v1534 = vld [vmem:[%s3 + $0xa8] sm:$0xff]
      %v1535 = vld [vmem:[%s3 + $0xb0] sm:$0xff]
      %v1536 = vld [vmem:[%s3 + $0xb8] sm:$0xff]
      %v1537 = vld [vmem:[%s3 + $0xc0] sm:$0xff]
      %v1538 = vld [vmem:[%s3 + $0xc8] sm:$0xff]
      %v1539 = vld [vmem:[%s3 + $0xd0] sm:$0xff]
      %v1540 = vld [vmem:[%s3 + $0xd8] sm:$0xff]
      %v1541 = vld [vmem:[%s3 + $0xe0] sm:$0xff]
      %v1542 = vld [vmem:[%s3 + $0xe8] sm:$0xff]
      %v1543 = vld [vmem:[%s3 + $0xf0] sm:$0xff]
      %v1544 = vld [vmem:[%s3 + $0xf8] sm:$0xff]
      %v1545 = vld [vmem:[%s3 + $0x100] sm:$0xff]
      %v1546 = vld [vmem:[%s3 + $0x108] sm:$0xff]
      %v1547 = vld [vmem:[%s3 + $0x110] sm:$0xff]
      %v1548 = vld [vmem:[%s3 + $0x118] sm:$0xff]
      %v1549 = vld [vmem:[%s3 + $0x120] sm:$0xff]
      %v1550 = vld [vmem:[%s3 + $0x128] sm:$0xff]
      %v1551 = vld [vmem:[%s3 + $0x130] sm:$0xff]
      %v1552 = vld [vmem:[%s3 + $0x138] sm:$0xff]
      %v1553 = vld [vmem:[%s3 + $0x140] sm:$0xff]
      %v1554 = vld [vmem:[%s3 + $0x148] sm:$0xff]
      %v1555 = vld [vmem:[%s3 + $0x150] sm:$0xff]
      %v1556 = vld [vmem:[%s3 + $0x158] sm:$0xff]
      %v1557 = vld [vmem:[%s3 + $0x160] sm:$0xff]
      %v1558 = vld [vmem:[%s3 + $0x168] sm:$0xff]
      %v1559 = vld [vmem:[%s3 + $0x170] sm:$0xff]
      %v1560 = vld [vmem:[%s3 + $0x178] sm:$0xff]
      %v1561 = vld [vmem:[%s3 + $0x180] sm:$0xff]
      %v1562 = vld [vmem:[%s3 + $0x188] sm:$0xff]
      %v1563 = vld [vmem:[%s3 + $0x190] sm:$0xff]
      %v1564 = vld [vmem:[%s3 + $0x198] sm:$0xff]
      %v1565 = vld [vmem:[%s3 + $0x1a0] sm:$0xff]
      %v1566 = vld [vmem:[%s3 + $0x1a8] sm:$0xff]
      %v1567 = vld [vmem:[%s3 + $0x1b0] sm:$0xff]
      %v1568 = vld [vmem:[%s3 + $0x1b8] sm:$0xff]
      %v1569 = vld [vmem:[%s3 + $0x1c0] sm:$0xff]
      %v1570 = vld [vmem:[%s3 + $0x1c8] sm:$0xff]
      %v1571 = vld [vmem:[%s3 + $0x1d0] sm:$0xff]
      %v1572 = vld [vmem:[%s3 + $0x1d8] sm:$0xff]
      %v1573 = vld [vmem:[%s3 + $0x1e0] sm:$0xff]
      %v1574 = vld [vmem:[%s3 + $0x1e8] sm:$0xff]
      %v1575 = vld [vmem:[%s3 + $0x1f0] sm:$0xff]
      %v1576 = vld [vmem:[%s3 + $0x1f8] sm:$0xff]
      %v1577 = vld [vmem:[%s3 + $0x200] sm:$0xff]
      %v1578 = vld [vmem:[%s3 + $0x208] sm:$0xff]
      %v1579 = vld [vmem:[%s3 + $0x210] sm:$0xff]
      %v1580 = vld [vmem:[%s3 + $0x218] sm:$0xff]
      %v1581 = vld [vmem:[%s3 + $0x220] sm:$0xff]
      %v1582 = vld [vmem:[%s3 + $0x228] sm:$0xff]
      %v1583 = vld [vmem:[%s3 + $0x230] sm:$0xff]
      %v1584 = vld [vmem:[%s3 + $0x238] sm:$0xff]
      %v1585 = vld [vmem:[%s3 + $0x240] sm:$0xff]
      %v1586 = vld [vmem:[%s3 + $0x248] sm:$0xff]
      %v1587 = vld [vmem:[%s3 + $0x250] sm:$0xff]
      %v1588 = vld [vmem:[%s3 + $0x258] sm:$0xff]
      %v1589 = vld [vmem:[%s3 + $0x260] sm:$0xff]
      %v1590 = vld [vmem:[%s3 + $0x268] sm:$0xff]
      %v1591 = vld [vmem:[%s3 + $0x270] sm:$0xff]
      %v1592 = vld [vmem:[%s3 + $0x278] sm:$0xff]
      %v1593 = vld [vmem:[%s3 + $0x280] sm:$0xff]
      %v1594 = vld [vmem:[%s3 + $0x288] sm:$0xff]
      %v1595 = vld [vmem:[%s3 + $0x290] sm:$0xff]
      %v1596 = vld [vmem:[%s3 + $0x298] sm:$0xff]
      %v1597 = vld [vmem:[%s3 + $0x2a0] sm:$0xff]
      %v1598 = vld [vmem:[%s3 + $0x2a8] sm:$0xff]
      %v1599 = vld [vmem:[%s3 + $0x2b0] sm:$0xff]
      %v1600 = vld [vmem:[%s3 + $0x2b8] sm:$0xff]
      %v1601 = vld [vmem:[%s3 + $0x2c0] sm:$0xff]
      %v1602 = vld [vmem:[%s3 + $0x2c8] sm:$0xff]
      %v1603 = vld [vmem:[%s3 + $0x2d0] sm:$0xff]
      %v1604 = vld [vmem:[%s3 + $0x2d8] sm:$0xff]
      %v1605 = vld [vmem:[%s3 + $0x2e0] sm:$0xff]
      %v1606 = vld [vmem:[%s3 + $0x2e8] sm:$0xff]
      %v1607 = vld [vmem:[%s3 + $0x2f0] sm:$0xff]
      %v1608 = vld [vmem:[%s3 + $0x2f8] sm:$0xff]
      %v1609 = vld [vmem:[%s3 + $0x300] sm:$0xff]
      %v1610 = vld [vmem:[%s3 + $0x308] sm:$0xff]
      %v1611 = vld [vmem:[%s3 + $0x310] sm:$0xff]
      %v1612 = vld [vmem:[%s3 + $0x318] sm:$0xff]
      %v1613 = vld [vmem:[%s3 + $0x320] sm:$0xff]
      %v1614 = vld [vmem:[%s3 + $0x328] sm:$0xff]
      %v1615 = vld [vmem:[%s3 + $0x330] sm:$0xff]
      %v1616 = vld [vmem:[%s3 + $0x338] sm:$0xff]
      %v1617 = vld [vmem:[%s3 + $0x340] sm:$0xff]
      %v1618 = vld [vmem:[%s3 + $0x348] sm:$0xff]
      %v1619 = vld [vmem:[%s3 + $0x350] sm:$0xff]
      %v1620 = vld [vmem:[%s3 + $0x358] sm:$0xff]
      %v1621 = vld [vmem:[%s3 + $0x360] sm:$0xff]
      %v1622 = vld [vmem:[%s3 + $0x368] sm:$0xff]
      %v1623 = vld [vmem:[%s3 + $0x370] sm:$0xff]
      %v1624 = vld [vmem:[%s3 + $0x378] sm:$0xff]
      %v1625 = vld [vmem:[%s3 + $0x380] sm:$0xff]
      %v1626 = vld [vmem:[%s3 + $0x388] sm:$0xff]
      %v1627 = vld [vmem:[%s3 + $0x390] sm:$0xff]
      %v1628 = vld [vmem:[%s3 + $0x398] sm:$0xff]
      %v1629 = vld [vmem:[%s3 + $0x3a0] sm:$0xff]
      %v1630 = vld [vmem:[%s3 + $0x3a8] sm:$0xff]
      %v1631 = vld [vmem:[%s3 + $0x3b0] sm:$0xff]
      %v1632 = vld [vmem:[%s3 + $0x3b8] sm:$0xff]
      %v1633 = vld [vmem:[%s3 + $0x3c0] sm:$0xff]
      %v1634 = vld [vmem:[%s3 + $0x3c8] sm:$0xff]
      %v1635 = vld [vmem:[%s3 + $0x3d0] sm:$0xff]
      %v1636 = vld [vmem:[%s3 + $0x3d8] sm:$0xff]
      %v1637 = vld [vmem:[%s3 + $0x3e0] sm:$0xff]
      %v1638 = vld [vmem:[%s3 + $0x3e8] sm:$0xff]
      %v1639 = vld [vmem:[%s3 + $0x3f0] sm:$0xff]
      %v1640 = vld [vmem:[%s3 + $0x3f8] sm:$0xff]
      %v1641 = vld [vmem:[%s3 + $0x400] sm:$0xff]
      %v1642 = vld [vmem:[%s3 + $0x408] sm:$0xff]
      %v1643 = vld [vmem:[%s3 + $0x410] sm:$0xff]
      %v1644 = vld [vmem:[%s3 + $0x418] sm:$0xff]
      %v1645 = vld [vmem:[%s3 + $0x420] sm:$0xff]
      %v1646 = vld [vmem:[%s3 + $0x428] sm:$0xff]
      %v1647 = vld [vmem:[%s3 + $0x430] sm:$0xff]
      %v1648 = vld [vmem:[%s3 + $0x438] sm:$0xff]
      %v1649 = vld [vmem:[%s3 + $0x440] sm:$0xff]
      %v1650 = vld [vmem:[%s3 + $0x448] sm:$0xff]
      %v1651 = vld [vmem:[%s3 + $0x450] sm:$0xff]
      %v1652 = vld [vmem:[%s3 + $0x458] sm:$0xff]
      %v1653 = vld [vmem:[%s3 + $0x460] sm:$0xff]
      %v1654 = vld [vmem:[%s3 + $0x468] sm:$0xff]
      %v1655 = vld [vmem:[%s3 + $0x470] sm:$0xff]
      %v1656 = vld [vmem:[%s3 + $0x478] sm:$0xff]
      %v1657 = vld [vmem:[%s4] sm:$0x1]
      %v1659 = vperm.slane %v1657, 0
      %1661 = vmatpush.msra.mxu0 %v1528
      %1662 = vmatpush.msra.mxu0 %v1527
      %1663 = vmatpush.msra.mxu0 %v1526
      %1664 = vmatpush.msra.mxu0 %v1525
      %1665 = vmatpush.msra.mxu0 %v1524
      %1666 = vmatpush.msra.mxu0 %v1523
      %1667 = vmatpush.msra.mxu0 %v1522
      %1668 = vmatpush.msra.mxu0 %v1521
      %1669 = vmatpush.msra.mxu0 %v1520
      %1670 = vmatpush.msra.mxu0 %v1519
      %1671 = vmatpush.msra.mxu0 %v1518
      %1672 = vmatpush.msra.mxu0 %v1517
      %1673 = vmatpush.msra.mxu0 %v1516
      %1674 = vmatpush.msra.mxu0 %v1515
      %1675 = vmatpush.msra.mxu0 %v1514
      %1676 = vmatpush.msra.mxu0 %v1513
      %1677 = vmatmul.f32.gmra.mxu0 %v1225
      %v1678 = vpop.f32.mrf.mxu0
      %v1679 = vadd.f32 %v1659, %v1678
      %1680 = vmatmul.f32.gmra.mxu0 %v1234
      %v1681 = vpop.f32.mrf.mxu0
      %v1682 = vadd.f32 %v1659, %v1681
      %1683 = vmatmul.f32.gmra.mxu0 %v1243
      %v1684 = vpop.f32.mrf.mxu0
      %v1685 = vadd.f32 %v1659, %v1684
      %1686 = vmatmul.f32.gmra.mxu0 %v1252
      %v1687 = vpop.f32.mrf.mxu0
      %v1688 = vadd.f32 %v1659, %v1687
      %1689 = vmatmul.f32.gmra.mxu0 %v1261
      %v1690 = vpop.f32.mrf.mxu0
      %v1691 = vadd.f32 %v1659, %v1690
      %1692 = vmatmul.f32.gmra.mxu0 %v1270
      %v1693 = vpop.f32.mrf.mxu0
      %v1694 = vadd.f32 %v1659, %v1693
      %1695 = vmatmul.f32.gmra.mxu0 %v1279
      %v1696 = vpop.f32.mrf.mxu0
      %v1697 = vadd.f32 %v1659, %v1696
      %1698 = vmatmul.f32.gmra.mxu0 %v1288
      %v1699 = vpop.f32.mrf.mxu0
      %v1700 = vadd.f32 %v1659, %v1699
      %1701 = vmatmul.f32.gmra.mxu0 %v1297
      %v1702 = vpop.f32.mrf.mxu0
      %v1703 = vadd.f32 %v1659, %v1702
      %1704 = vmatmul.f32.gmra.mxu0 %v1306
      %v1705 = vpop.f32.mrf.mxu0
      %v1706 = vadd.f32 %v1659, %v1705
      %1707 = vmatmul.f32.gmra.mxu0 %v1315
      %v1708 = vpop.f32.mrf.mxu0
      %v1709 = vadd.f32 %v1659, %v1708
      %1710 = vmatmul.f32.gmra.mxu0 %v1324
      %v1711 = vpop.f32.mrf.mxu0
      %v1712 = vadd.f32 %v1659, %v1711
      %1713 = vmatmul.f32.gmra.mxu0 %v1333
      %v1714 = vpop.f32.mrf.mxu0
      %v1715 = vadd.f32 %v1659, %v1714
      %1716 = vmatmul.f32.gmra.mxu0 %v1342
      %v1717 = vpop.f32.mrf.mxu0
      %v1718 = vadd.f32 %v1659, %v1717
      %1719 = vmatmul.f32.gmra.mxu0 %v1351
      %v1720 = vpop.f32.mrf.mxu0
      %v1721 = vadd.f32 %v1659, %v1720
      %1722 = vmatmul.f32.gmra.mxu0 %v1360
      %v1723 = vpop.f32.mrf.mxu0
      %v1724 = vadd.f32 %v1659, %v1723
      %1725 = vmatmul.f32.gmra.mxu0 %v1369
      %v1726 = vpop.f32.mrf.mxu0
      %v1727 = vadd.f32 %v1659, %v1726
      %1728 = vmatmul.f32.gmra.mxu0 %v1378
      %v1729 = vpop.f32.mrf.mxu0
      %v1730 = vadd.f32 %v1659, %v1729
      %1731 = vmatmul.f32.gmra.mxu0 %v1387
      %v1732 = vpop.f32.mrf.mxu0
      %v1733 = vadd.f32 %v1659, %v1732
      %1734 = vmatmul.f32.gmra.mxu0 %v1396
      %v1735 = vpop.f32.mrf.mxu0
      %v1736 = vadd.f32 %v1659, %v1735
      %1737 = vmatmul.f32.gmra.mxu0 %v1405
      %v1738 = vpop.f32.mrf.mxu0
      %v1739 = vadd.f32 %v1659, %v1738
      %1740 = vmatmul.f32.gmra.mxu0 %v1414
      %v1741 = vpop.f32.mrf.mxu0
      %v1742 = vadd.f32 %v1659, %v1741
      %1743 = vmatmul.f32.gmra.mxu0 %v1423
      %v1744 = vpop.f32.mrf.mxu0
      %v1745 = vadd.f32 %v1659, %v1744
      %1746 = vmatmul.f32.gmra.mxu0 %v1432
      %v1747 = vpop.f32.mrf.mxu0
      %v1748 = vadd.f32 %v1659, %v1747
      %1749 = vmatmul.f32.gmra.mxu0 %v1441
      %v1750 = vpop.f32.mrf.mxu0
      %v1751 = vadd.f32 %v1659, %v1750
      %1752 = vmatmul.f32.gmra.mxu0 %v1450
      %v1753 = vpop.f32.mrf.mxu0
      %v1754 = vadd.f32 %v1659, %v1753
      %1755 = vmatmul.f32.gmra.mxu0 %v1459
      %v1756 = vpop.f32.mrf.mxu0
      %v1757 = vadd.f32 %v1659, %v1756
      %1758 = vmatmul.f32.gmra.mxu0 %v1468
      %v1759 = vpop.f32.mrf.mxu0
      %v1760 = vadd.f32 %v1659, %v1759
      %1761 = vmatmul.f32.gmra.mxu0 %v1477
      %v1762 = vpop.f32.mrf.mxu0
      %v1763 = vadd.f32 %v1659, %v1762
      %1764 = vmatmul.f32.gmra.mxu0 %v1486
      %v1765 = vpop.f32.mrf.mxu0
      %v1766 = vadd.f32 %v1659, %v1765
      %1767 = vmatmul.f32.gmra.mxu0 %v1495
      %v1768 = vpop.f32.mrf.mxu0
      %v1769 = vadd.f32 %v1659, %v1768
      %1770 = vmatmul.f32.gmra.mxu0 %v1504
      %v1771 = vpop.f32.mrf.mxu0
      %v1772 = vadd.f32 %v1659, %v1771
      %1773 = vdwg.mxu0
      %1774 = vmatpush.msra.mxu0 %v1544
      %1775 = vmatpush.msra.mxu0 %v1543
      %1776 = vmatpush.msra.mxu0 %v1542
      %1777 = vmatpush.msra.mxu0 %v1541
      %1778 = vmatpush.msra.mxu0 %v1540
      %1779 = vmatpush.msra.mxu0 %v1539
      %1780 = vmatpush.msra.mxu0 %v1538
      %1781 = vmatpush.msra.mxu0 %v1537
      %1782 = vmatpush.msra.mxu0 %v1536
      %1783 = vmatpush.msra.mxu0 %v1535
      %1784 = vmatpush.msra.mxu0 %v1534
      %1785 = vmatpush.msra.mxu0 %v1533
      %1786 = vmatpush.msra.mxu0 %v1532
      %1787 = vmatpush.msra.mxu0 %v1531
      %1788 = vmatpush.msra.mxu0 %v1530
      %1789 = vmatpush.msra.mxu0 %v1529
      %1790 = vmatmul.f32.gmra.mxu0 %v1226
      %v1791 = vpop.f32.mrf.mxu0
      %v1792 = vadd.f32 %v1679, %v1791
      %1793 = vmatmul.f32.gmra.mxu0 %v1235
      %v1794 = vpop.f32.mrf.mxu0
      %v1795 = vadd.f32 %v1682, %v1794
      %1796 = vmatmul.f32.gmra.mxu0 %v1244
      %v1797 = vpop.f32.mrf.mxu0
      %v1798 = vadd.f32 %v1685, %v1797
      %1799 = vmatmul.f32.gmra.mxu0 %v1253
      %v1800 = vpop.f32.mrf.mxu0
      %v1801 = vadd.f32 %v1688, %v1800
      %1802 = vmatmul.f32.gmra.mxu0 %v1262
      %v1803 = vpop.f32.mrf.mxu0
      %v1804 = vadd.f32 %v1691, %v1803
      %1805 = vmatmul.f32.gmra.mxu0 %v1271
      %v1806 = vpop.f32.mrf.mxu0
      %v1807 = vadd.f32 %v1694, %v1806
      %1808 = vmatmul.f32.gmra.mxu0 %v1280
      %v1809 = vpop.f32.mrf.mxu0
      %v1810 = vadd.f32 %v1697, %v1809
      %1811 = vmatmul.f32.gmra.mxu0 %v1289
      %v1812 = vpop.f32.mrf.mxu0
      %v1813 = vadd.f32 %v1700, %v1812
      %1814 = vmatmul.f32.gmra.mxu0 %v1298
      %v1815 = vpop.f32.mrf.mxu0
      %v1816 = vadd.f32 %v1703, %v1815
      %1817 = vmatmul.f32.gmra.mxu0 %v1307
      %v1818 = vpop.f32.mrf.mxu0
      %v1819 = vadd.f32 %v1706, %v1818
      %1820 = vmatmul.f32.gmra.mxu0 %v1316
      %v1821 = vpop.f32.mrf.mxu0
      %v1822 = vadd.f32 %v1709, %v1821
      %1823 = vmatmul.f32.gmra.mxu0 %v1325
      %v1824 = vpop.f32.mrf.mxu0
      %v1825 = vadd.f32 %v1712, %v1824
      %1826 = vmatmul.f32.gmra.mxu0 %v1334
      %v1827 = vpop.f32.mrf.mxu0
      %v1828 = vadd.f32 %v1715, %v1827
      %1829 = vmatmul.f32.gmra.mxu0 %v1343
      %v1830 = vpop.f32.mrf.mxu0
      %v1831 = vadd.f32 %v1718, %v1830
      %1832 = vmatmul.f32.gmra.mxu0 %v1352
      %v1833 = vpop.f32.mrf.mxu0
      %v1834 = vadd.f32 %v1721, %v1833
      %1835 = vmatmul.f32.gmra.mxu0 %v1361
      %v1836 = vpop.f32.mrf.mxu0
      %v1837 = vadd.f32 %v1724, %v1836
      %1838 = vmatmul.f32.gmra.mxu0 %v1370
      %v1839 = vpop.f32.mrf.mxu0
      %v1840 = vadd.f32 %v1727, %v1839
      %1841 = vmatmul.f32.gmra.mxu0 %v1379
      %v1842 = vpop.f32.mrf.mxu0
      %v1843 = vadd.f32 %v1730, %v1842
      %1844 = vmatmul.f32.gmra.mxu0 %v1388
      %v1845 = vpop.f32.mrf.mxu0
      %v1846 = vadd.f32 %v1733, %v1845
      %1847 = vmatmul.f32.gmra.mxu0 %v1397
      %v1848 = vpop.f32.mrf.mxu0
      %v1849 = vadd.f32 %v1736, %v1848
      %1850 = vmatmul.f32.gmra.mxu0 %v1406
      %v1851 = vpop.f32.mrf.mxu0
      %v1852 = vadd.f32 %v1739, %v1851
      %1853 = vmatmul.f32.gmra.mxu0 %v1415
      %v1854 = vpop.f32.mrf.mxu0
      %v1855 = vadd.f32 %v1742, %v1854
      %1856 = vmatmul.f32.gmra.mxu0 %v1424
      %v1857 = vpop.f32.mrf.mxu0
      %v1858 = vadd.f32 %v1745, %v1857
      %1859 = vmatmul.f32.gmra.mxu0 %v1433
      %v1860 = vpop.f32.mrf.mxu0
      %v1861 = vadd.f32 %v1748, %v1860
      %1862 = vmatmul.f32.gmra.mxu0 %v1442
      %v1863 = vpop.f32.mrf.mxu0
      %v1864 = vadd.f32 %v1751, %v1863
      %1865 = vmatmul.f32.gmra.mxu0 %v1451
      %v1866 = vpop.f32.mrf.mxu0
      %v1867 = vadd.f32 %v1754, %v1866
      %1868 = vmatmul.f32.gmra.mxu0 %v1460
      %v1869 = vpop.f32.mrf.mxu0
      %v1870 = vadd.f32 %v1757, %v1869
      %1871 = vmatmul.f32.gmra.mxu0 %v1469
      %v1872 = vpop.f32.mrf.mxu0
      %v1873 = vadd.f32 %v1760, %v1872
      %1874 = vmatmul.f32.gmra.mxu0 %v1478
      %v1875 = vpop.f32.mrf.mxu0
      %v1876 = vadd.f32 %v1763, %v1875
      %1877 = vmatmul.f32.gmra.mxu0 %v1487
      %v1878 = vpop.f32.mrf.mxu0
      %v1879 = vadd.f32 %v1766, %v1878
      %1880 = vmatmul.f32.gmra.mxu0 %v1496
      %v1881 = vpop.f32.mrf.mxu0
      %v1882 = vadd.f32 %v1769, %v1881
      %1883 = vmatmul.f32.gmra.mxu0 %v1505
      %v1884 = vpop.f32.mrf.mxu0
      %v1885 = vadd.f32 %v1772, %v1884
      %1886 = vdwg.mxu0
      %1887 = vmatpush.msra.mxu0 %v1560
      %1888 = vmatpush.msra.mxu0 %v1559
      %1889 = vmatpush.msra.mxu0 %v1558
      %1890 = vmatpush.msra.mxu0 %v1557
      %1891 = vmatpush.msra.mxu0 %v1556
      %1892 = vmatpush.msra.mxu0 %v1555
      %1893 = vmatpush.msra.mxu0 %v1554
      %1894 = vmatpush.msra.mxu0 %v1553
      %1895 = vmatpush.msra.mxu0 %v1552
      %1896 = vmatpush.msra.mxu0 %v1551
      %1897 = vmatpush.msra.mxu0 %v1550
      %1898 = vmatpush.msra.mxu0 %v1549
      %1899 = vmatpush.msra.mxu0 %v1548
      %1900 = vmatpush.msra.mxu0 %v1547
      %1901 = vmatpush.msra.mxu0 %v1546
      %1902 = vmatpush.msra.mxu0 %v1545
      %1903 = vmatmul.f32.gmra.mxu0 %v1227
      %v1904 = vpop.f32.mrf.mxu0
      %v1905 = vadd.f32 %v1792, %v1904
      %1906 = vmatmul.f32.gmra.mxu0 %v1236
      %v1907 = vpop.f32.mrf.mxu0
      %v1908 = vadd.f32 %v1795, %v1907
      %1909 = vmatmul.f32.gmra.mxu0 %v1245
      %v1910 = vpop.f32.mrf.mxu0
      %v1911 = vadd.f32 %v1798, %v1910
      %1912 = vmatmul.f32.gmra.mxu0 %v1254
      %v1913 = vpop.f32.mrf.mxu0
      %v1914 = vadd.f32 %v1801, %v1913
      %1915 = vmatmul.f32.gmra.mxu0 %v1263
      %v1916 = vpop.f32.mrf.mxu0
      %v1917 = vadd.f32 %v1804, %v1916
      %1918 = vmatmul.f32.gmra.mxu0 %v1272
      %v1919 = vpop.f32.mrf.mxu0
      %v1920 = vadd.f32 %v1807, %v1919
      %1921 = vmatmul.f32.gmra.mxu0 %v1281
      %v1922 = vpop.f32.mrf.mxu0
      %v1923 = vadd.f32 %v1810, %v1922
      %1924 = vmatmul.f32.gmra.mxu0 %v1290
      %v1925 = vpop.f32.mrf.mxu0
      %v1926 = vadd.f32 %v1813, %v1925
      %1927 = vmatmul.f32.gmra.mxu0 %v1299
      %v1928 = vpop.f32.mrf.mxu0
      %v1929 = vadd.f32 %v1816, %v1928
      %1930 = vmatmul.f32.gmra.mxu0 %v1308
      %v1931 = vpop.f32.mrf.mxu0
      %v1932 = vadd.f32 %v1819, %v1931
      %1933 = vmatmul.f32.gmra.mxu0 %v1317
      %v1934 = vpop.f32.mrf.mxu0
      %v1935 = vadd.f32 %v1822, %v1934
      %1936 = vmatmul.f32.gmra.mxu0 %v1326
      %v1937 = vpop.f32.mrf.mxu0
      %v1938 = vadd.f32 %v1825, %v1937
      %1939 = vmatmul.f32.gmra.mxu0 %v1335
      %v1940 = vpop.f32.mrf.mxu0
      %v1941 = vadd.f32 %v1828, %v1940
      %1942 = vmatmul.f32.gmra.mxu0 %v1344
      %v1943 = vpop.f32.mrf.mxu0
      %v1944 = vadd.f32 %v1831, %v1943
      %1945 = vmatmul.f32.gmra.mxu0 %v1353
      %v1946 = vpop.f32.mrf.mxu0
      %v1947 = vadd.f32 %v1834, %v1946
      %1948 = vmatmul.f32.gmra.mxu0 %v1362
      %v1949 = vpop.f32.mrf.mxu0
      %v1950 = vadd.f32 %v1837, %v1949
      %1951 = vmatmul.f32.gmra.mxu0 %v1371
      %v1952 = vpop.f32.mrf.mxu0
      %v1953 = vadd.f32 %v1840, %v1952
      %1954 = vmatmul.f32.gmra.mxu0 %v1380
      %v1955 = vpop.f32.mrf.mxu0
      %v1956 = vadd.f32 %v1843, %v1955
      %1957 = vmatmul.f32.gmra.mxu0 %v1389
      %v1958 = vpop.f32.mrf.mxu0
      %v1959 = vadd.f32 %v1846, %v1958
      %1960 = vmatmul.f32.gmra.mxu0 %v1398
      %v1961 = vpop.f32.mrf.mxu0
      %v1962 = vadd.f32 %v1849, %v1961
      %1963 = vmatmul.f32.gmra.mxu0 %v1407
      %v1964 = vpop.f32.mrf.mxu0
      %v1965 = vadd.f32 %v1852, %v1964
      %1966 = vmatmul.f32.gmra.mxu0 %v1416
      %v1967 = vpop.f32.mrf.mxu0
      %v1968 = vadd.f32 %v1855, %v1967
      %1969 = vmatmul.f32.gmra.mxu0 %v1425
      %v1970 = vpop.f32.mrf.mxu0
      %v1971 = vadd.f32 %v1858, %v1970
      %1972 = vmatmul.f32.gmra.mxu0 %v1434
      %v1973 = vpop.f32.mrf.mxu0
      %v1974 = vadd.f32 %v1861, %v1973
      %1975 = vmatmul.f32.gmra.mxu0 %v1443
      %v1976 = vpop.f32.mrf.mxu0
      %v1977 = vadd.f32 %v1864, %v1976
      %1978 = vmatmul.f32.gmra.mxu0 %v1452
      %v1979 = vpop.f32.mrf.mxu0
      %v1980 = vadd.f32 %v1867, %v1979
      %1981 = vmatmul.f32.gmra.mxu0 %v1461
      %v1982 = vpop.f32.mrf.mxu0
      %v1983 = vadd.f32 %v1870, %v1982
      %1984 = vmatmul.f32.gmra.mxu0 %v1470
      %v1985 = vpop.f32.mrf.mxu0
      %v1986 = vadd.f32 %v1873, %v1985
      %1987 = vmatmul.f32.gmra.mxu0 %v1479
      %v1988 = vpop.f32.mrf.mxu0
      %v1989 = vadd.f32 %v1876, %v1988
      %1990 = vmatmul.f32.gmra.mxu0 %v1488
      %v1991 = vpop.f32.mrf.mxu0
      %v1992 = vadd.f32 %v1879, %v1991
      %1993 = vmatmul.f32.gmra.mxu0 %v1497
      %v1994 = vpop.f32.mrf.mxu0
      %v1995 = vadd.f32 %v1882, %v1994
      %1996 = vmatmul.f32.gmra.mxu0 %v1506
      %v1997 = vpop.f32.mrf.mxu0
      %v1998 = vadd.f32 %v1885, %v1997
      %1999 = vdwg.mxu0
      %2000 = vmatpush.msra.mxu0 %v1576
      %2001 = vmatpush.msra.mxu0 %v1575
      %2002 = vmatpush.msra.mxu0 %v1574
      %2003 = vmatpush.msra.mxu0 %v1573
      %2004 = vmatpush.msra.mxu0 %v1572
      %2005 = vmatpush.msra.mxu0 %v1571
      %2006 = vmatpush.msra.mxu0 %v1570
      %2007 = vmatpush.msra.mxu0 %v1569
      %2008 = vmatpush.msra.mxu0 %v1568
      %2009 = vmatpush.msra.mxu0 %v1567
      %2010 = vmatpush.msra.mxu0 %v1566
      %2011 = vmatpush.msra.mxu0 %v1565
      %2012 = vmatpush.msra.mxu0 %v1564
      %2013 = vmatpush.msra.mxu0 %v1563
      %2014 = vmatpush.msra.mxu0 %v1562
      %2015 = vmatpush.msra.mxu0 %v1561
      %2016 = vmatmul.f32.gmra.mxu0 %v1228
      %v2017 = vpop.f32.mrf.mxu0
      %v2018 = vadd.f32 %v1905, %v2017
      %2019 = vmatmul.f32.gmra.mxu0 %v1237
      %v2020 = vpop.f32.mrf.mxu0
      %v2021 = vadd.f32 %v1908, %v2020
      %2022 = vmatmul.f32.gmra.mxu0 %v1246
      %v2023 = vpop.f32.mrf.mxu0
      %v2024 = vadd.f32 %v1911, %v2023
      %2025 = vmatmul.f32.gmra.mxu0 %v1255
      %v2026 = vpop.f32.mrf.mxu0
      %v2027 = vadd.f32 %v1914, %v2026
      %2028 = vmatmul.f32.gmra.mxu0 %v1264
      %v2029 = vpop.f32.mrf.mxu0
      %v2030 = vadd.f32 %v1917, %v2029
      %2031 = vmatmul.f32.gmra.mxu0 %v1273
      %v2032 = vpop.f32.mrf.mxu0
      %v2033 = vadd.f32 %v1920, %v2032
      %2034 = vmatmul.f32.gmra.mxu0 %v1282
      %v2035 = vpop.f32.mrf.mxu0
      %v2036 = vadd.f32 %v1923, %v2035
      %2037 = vmatmul.f32.gmra.mxu0 %v1291
      %v2038 = vpop.f32.mrf.mxu0
      %v2039 = vadd.f32 %v1926, %v2038
      %2040 = vmatmul.f32.gmra.mxu0 %v1300
      %v2041 = vpop.f32.mrf.mxu0
      %v2042 = vadd.f32 %v1929, %v2041
      %2043 = vmatmul.f32.gmra.mxu0 %v1309
      %v2044 = vpop.f32.mrf.mxu0
      %v2045 = vadd.f32 %v1932, %v2044
      %2046 = vmatmul.f32.gmra.mxu0 %v1318
      %v2047 = vpop.f32.mrf.mxu0
      %v2048 = vadd.f32 %v1935, %v2047
      %2049 = vmatmul.f32.gmra.mxu0 %v1327
      %v2050 = vpop.f32.mrf.mxu0
      %v2051 = vadd.f32 %v1938, %v2050
      %2052 = vmatmul.f32.gmra.mxu0 %v1336
      %v2053 = vpop.f32.mrf.mxu0
      %v2054 = vadd.f32 %v1941, %v2053
      %2055 = vmatmul.f32.gmra.mxu0 %v1345
      %v2056 = vpop.f32.mrf.mxu0
      %v2057 = vadd.f32 %v1944, %v2056
      %2058 = vmatmul.f32.gmra.mxu0 %v1354
      %v2059 = vpop.f32.mrf.mxu0
      %v2060 = vadd.f32 %v1947, %v2059
      %2061 = vmatmul.f32.gmra.mxu0 %v1363
      %v2062 = vpop.f32.mrf.mxu0
      %v2063 = vadd.f32 %v1950, %v2062
      %2064 = vmatmul.f32.gmra.mxu0 %v1372
      %v2065 = vpop.f32.mrf.mxu0
      %v2066 = vadd.f32 %v1953, %v2065
      %2067 = vmatmul.f32.gmra.mxu0 %v1381
      %v2068 = vpop.f32.mrf.mxu0
      %v2069 = vadd.f32 %v1956, %v2068
      %2070 = vmatmul.f32.gmra.mxu0 %v1390
      %v2071 = vpop.f32.mrf.mxu0
      %v2072 = vadd.f32 %v1959, %v2071
      %2073 = vmatmul.f32.gmra.mxu0 %v1399
      %v2074 = vpop.f32.mrf.mxu0
      %v2075 = vadd.f32 %v1962, %v2074
      %2076 = vmatmul.f32.gmra.mxu0 %v1408
      %v2077 = vpop.f32.mrf.mxu0
      %v2078 = vadd.f32 %v1965, %v2077
      %2079 = vmatmul.f32.gmra.mxu0 %v1417
      %v2080 = vpop.f32.mrf.mxu0
      %v2081 = vadd.f32 %v1968, %v2080
      %2082 = vmatmul.f32.gmra.mxu0 %v1426
      %v2083 = vpop.f32.mrf.mxu0
      %v2084 = vadd.f32 %v1971, %v2083
      %2085 = vmatmul.f32.gmra.mxu0 %v1435
      %v2086 = vpop.f32.mrf.mxu0
      %v2087 = vadd.f32 %v1974, %v2086
      %2088 = vmatmul.f32.gmra.mxu0 %v1444
      %v2089 = vpop.f32.mrf.mxu0
      %v2090 = vadd.f32 %v1977, %v2089
      %2091 = vmatmul.f32.gmra.mxu0 %v1453
      %v2092 = vpop.f32.mrf.mxu0
      %v2093 = vadd.f32 %v1980, %v2092
      %2094 = vmatmul.f32.gmra.mxu0 %v1462
      %v2095 = vpop.f32.mrf.mxu0
      %v2096 = vadd.f32 %v1983, %v2095
      %2097 = vmatmul.f32.gmra.mxu0 %v1471
      %v2098 = vpop.f32.mrf.mxu0
      %v2099 = vadd.f32 %v1986, %v2098
      %2100 = vmatmul.f32.gmra.mxu0 %v1480
      %v2101 = vpop.f32.mrf.mxu0
      %v2102 = vadd.f32 %v1989, %v2101
      %2103 = vmatmul.f32.gmra.mxu0 %v1489
      %v2104 = vpop.f32.mrf.mxu0
      %v2105 = vadd.f32 %v1992, %v2104
      %2106 = vmatmul.f32.gmra.mxu0 %v1498
      %v2107 = vpop.f32.mrf.mxu0
      %v2108 = vadd.f32 %v1995, %v2107
      %2109 = vmatmul.f32.gmra.mxu0 %v1507
      %v2110 = vpop.f32.mrf.mxu0
      %v2111 = vadd.f32 %v1998, %v2110
      %2112 = vdwg.mxu0
      %2113 = vmatpush.msra.mxu0 %v1592
      %2114 = vmatpush.msra.mxu0 %v1591
      %2115 = vmatpush.msra.mxu0 %v1590
      %2116 = vmatpush.msra.mxu0 %v1589
      %2117 = vmatpush.msra.mxu0 %v1588
      %2118 = vmatpush.msra.mxu0 %v1587
      %2119 = vmatpush.msra.mxu0 %v1586
      %2120 = vmatpush.msra.mxu0 %v1585
      %2121 = vmatpush.msra.mxu0 %v1584
      %2122 = vmatpush.msra.mxu0 %v1583
      %2123 = vmatpush.msra.mxu0 %v1582
      %2124 = vmatpush.msra.mxu0 %v1581
      %2125 = vmatpush.msra.mxu0 %v1580
      %2126 = vmatpush.msra.mxu0 %v1579
      %2127 = vmatpush.msra.mxu0 %v1578
      %2128 = vmatpush.msra.mxu0 %v1577
      %2129 = vmatmul.f32.gmra.mxu0 %v1229
      %v2130 = vpop.f32.mrf.mxu0
      %v2131 = vadd.f32 %v2018, %v2130
      %2132 = vmatmul.f32.gmra.mxu0 %v1238
      %v2133 = vpop.f32.mrf.mxu0
      %v2134 = vadd.f32 %v2021, %v2133
      %2135 = vmatmul.f32.gmra.mxu0 %v1247
      %v2136 = vpop.f32.mrf.mxu0
      %v2137 = vadd.f32 %v2024, %v2136
      %2138 = vmatmul.f32.gmra.mxu0 %v1256
      %v2139 = vpop.f32.mrf.mxu0
      %v2140 = vadd.f32 %v2027, %v2139
      %2141 = vmatmul.f32.gmra.mxu0 %v1265
      %v2142 = vpop.f32.mrf.mxu0
      %v2143 = vadd.f32 %v2030, %v2142
      %2144 = vmatmul.f32.gmra.mxu0 %v1274
      %v2145 = vpop.f32.mrf.mxu0
      %v2146 = vadd.f32 %v2033, %v2145
      %2147 = vmatmul.f32.gmra.mxu0 %v1283
      %v2148 = vpop.f32.mrf.mxu0
      %v2149 = vadd.f32 %v2036, %v2148
      %2150 = vmatmul.f32.gmra.mxu0 %v1292
      %v2151 = vpop.f32.mrf.mxu0
      %v2152 = vadd.f32 %v2039, %v2151
      %2153 = vmatmul.f32.gmra.mxu0 %v1301
      %v2154 = vpop.f32.mrf.mxu0
      %v2155 = vadd.f32 %v2042, %v2154
      %2156 = vmatmul.f32.gmra.mxu0 %v1310
      %v2157 = vpop.f32.mrf.mxu0
      %v2158 = vadd.f32 %v2045, %v2157
      %2159 = vmatmul.f32.gmra.mxu0 %v1319
      %v2160 = vpop.f32.mrf.mxu0
      %v2161 = vadd.f32 %v2048, %v2160
      %2162 = vmatmul.f32.gmra.mxu0 %v1328
      %v2163 = vpop.f32.mrf.mxu0
      %v2164 = vadd.f32 %v2051, %v2163
      %2165 = vmatmul.f32.gmra.mxu0 %v1337
      %v2166 = vpop.f32.mrf.mxu0
      %v2167 = vadd.f32 %v2054, %v2166
      %2168 = vmatmul.f32.gmra.mxu0 %v1346
      %v2169 = vpop.f32.mrf.mxu0
      %v2170 = vadd.f32 %v2057, %v2169
      %2171 = vmatmul.f32.gmra.mxu0 %v1355
      %v2172 = vpop.f32.mrf.mxu0
      %v2173 = vadd.f32 %v2060, %v2172
      %2174 = vmatmul.f32.gmra.mxu0 %v1364
      %v2175 = vpop.f32.mrf.mxu0
      %v2176 = vadd.f32 %v2063, %v2175
      %2177 = vmatmul.f32.gmra.mxu0 %v1373
      %v2178 = vpop.f32.mrf.mxu0
      %v2179 = vadd.f32 %v2066, %v2178
      %2180 = vmatmul.f32.gmra.mxu0 %v1382
      %v2181 = vpop.f32.mrf.mxu0
      %v2182 = vadd.f32 %v2069, %v2181
      %2183 = vmatmul.f32.gmra.mxu0 %v1391
      %v2184 = vpop.f32.mrf.mxu0
      %v2185 = vadd.f32 %v2072, %v2184
      %2186 = vmatmul.f32.gmra.mxu0 %v1400
      %v2187 = vpop.f32.mrf.mxu0
      %v2188 = vadd.f32 %v2075, %v2187
      %2189 = vmatmul.f32.gmra.mxu0 %v1409
      %v2190 = vpop.f32.mrf.mxu0
      %v2191 = vadd.f32 %v2078, %v2190
      %2192 = vmatmul.f32.gmra.mxu0 %v1418
      %v2193 = vpop.f32.mrf.mxu0
      %v2194 = vadd.f32 %v2081, %v2193
      %2195 = vmatmul.f32.gmra.mxu0 %v1427
      %v2196 = vpop.f32.mrf.mxu0
      %v2197 = vadd.f32 %v2084, %v2196
      %2198 = vmatmul.f32.gmra.mxu0 %v1436
      %v2199 = vpop.f32.mrf.mxu0
      %v2200 = vadd.f32 %v2087, %v2199
      %2201 = vmatmul.f32.gmra.mxu0 %v1445
      %v2202 = vpop.f32.mrf.mxu0
      %v2203 = vadd.f32 %v2090, %v2202
      %2204 = vmatmul.f32.gmra.mxu0 %v1454
      %v2205 = vpop.f32.mrf.mxu0
      %v2206 = vadd.f32 %v2093, %v2205
      %2207 = vmatmul.f32.gmra.mxu0 %v1463
      %v2208 = vpop.f32.mrf.mxu0
      %v2209 = vadd.f32 %v2096, %v2208
      %2210 = vmatmul.f32.gmra.mxu0 %v1472
      %v2211 = vpop.f32.mrf.mxu0
      %v2212 = vadd.f32 %v2099, %v2211
      %2213 = vmatmul.f32.gmra.mxu0 %v1481
      %v2214 = vpop.f32.mrf.mxu0
      %v2215 = vadd.f32 %v2102, %v2214
      %2216 = vmatmul.f32.gmra.mxu0 %v1490
      %v2217 = vpop.f32.mrf.mxu0
      %v2218 = vadd.f32 %v2105, %v2217
      %2219 = vmatmul.f32.gmra.mxu0 %v1499
      %v2220 = vpop.f32.mrf.mxu0
      %v2221 = vadd.f32 %v2108, %v2220
      %2222 = vmatmul.f32.gmra.mxu0 %v1508
      %v2223 = vpop.f32.mrf.mxu0
      %v2224 = vadd.f32 %v2111, %v2223
      %2225 = vdwg.mxu0
      %2226 = vmatpush.msra.mxu0 %v1608
      %2227 = vmatpush.msra.mxu0 %v1607
      %2228 = vmatpush.msra.mxu0 %v1606
      %2229 = vmatpush.msra.mxu0 %v1605
      %2230 = vmatpush.msra.mxu0 %v1604
      %2231 = vmatpush.msra.mxu0 %v1603
      %2232 = vmatpush.msra.mxu0 %v1602
      %2233 = vmatpush.msra.mxu0 %v1601
      %2234 = vmatpush.msra.mxu0 %v1600
      %2235 = vmatpush.msra.mxu0 %v1599
      %2236 = vmatpush.msra.mxu0 %v1598
      %2237 = vmatpush.msra.mxu0 %v1597
      %2238 = vmatpush.msra.mxu0 %v1596
      %2239 = vmatpush.msra.mxu0 %v1595
      %2240 = vmatpush.msra.mxu0 %v1594
      %2241 = vmatpush.msra.mxu0 %v1593
      %2242 = vmatmul.f32.gmra.mxu0 %v1230
      %v2243 = vpop.f32.mrf.mxu0
      %v2244 = vadd.f32 %v2131, %v2243
      %2245 = vmatmul.f32.gmra.mxu0 %v1239
      %v2246 = vpop.f32.mrf.mxu0
      %v2247 = vadd.f32 %v2134, %v2246
      %2248 = vmatmul.f32.gmra.mxu0 %v1248
      %v2249 = vpop.f32.mrf.mxu0
      %v2250 = vadd.f32 %v2137, %v2249
      %2251 = vmatmul.f32.gmra.mxu0 %v1257
      %v2252 = vpop.f32.mrf.mxu0
      %v2253 = vadd.f32 %v2140, %v2252
      %2254 = vmatmul.f32.gmra.mxu0 %v1266
      %v2255 = vpop.f32.mrf.mxu0
      %v2256 = vadd.f32 %v2143, %v2255
      %2257 = vmatmul.f32.gmra.mxu0 %v1275
      %v2258 = vpop.f32.mrf.mxu0
      %v2259 = vadd.f32 %v2146, %v2258
      %2260 = vmatmul.f32.gmra.mxu0 %v1284
      %v2261 = vpop.f32.mrf.mxu0
      %v2262 = vadd.f32 %v2149, %v2261
      %2263 = vmatmul.f32.gmra.mxu0 %v1293
      %v2264 = vpop.f32.mrf.mxu0
      %v2265 = vadd.f32 %v2152, %v2264
      %2266 = vmatmul.f32.gmra.mxu0 %v1302
      %v2267 = vpop.f32.mrf.mxu0
      %v2268 = vadd.f32 %v2155, %v2267
      %2269 = vmatmul.f32.gmra.mxu0 %v1311
      %v2270 = vpop.f32.mrf.mxu0
      %v2271 = vadd.f32 %v2158, %v2270
      %2272 = vmatmul.f32.gmra.mxu0 %v1320
      %v2273 = vpop.f32.mrf.mxu0
      %v2274 = vadd.f32 %v2161, %v2273
      %2275 = vmatmul.f32.gmra.mxu0 %v1329
      %v2276 = vpop.f32.mrf.mxu0
      %v2277 = vadd.f32 %v2164, %v2276
      %2278 = vmatmul.f32.gmra.mxu0 %v1338
      %v2279 = vpop.f32.mrf.mxu0
      %v2280 = vadd.f32 %v2167, %v2279
      %2281 = vmatmul.f32.gmra.mxu0 %v1347
      %v2282 = vpop.f32.mrf.mxu0
      %v2283 = vadd.f32 %v2170, %v2282
      %2284 = vmatmul.f32.gmra.mxu0 %v1356
      %v2285 = vpop.f32.mrf.mxu0
      %v2286 = vadd.f32 %v2173, %v2285
      %2287 = vmatmul.f32.gmra.mxu0 %v1365
      %v2288 = vpop.f32.mrf.mxu0
      %v2289 = vadd.f32 %v2176, %v2288
      %2290 = vmatmul.f32.gmra.mxu0 %v1374
      %v2291 = vpop.f32.mrf.mxu0
      %v2292 = vadd.f32 %v2179, %v2291
      %2293 = vmatmul.f32.gmra.mxu0 %v1383
      %v2294 = vpop.f32.mrf.mxu0
      %v2295 = vadd.f32 %v2182, %v2294
      %2296 = vmatmul.f32.gmra.mxu0 %v1392
      %v2297 = vpop.f32.mrf.mxu0
      %v2298 = vadd.f32 %v2185, %v2297
      %2299 = vmatmul.f32.gmra.mxu0 %v1401
      %v2300 = vpop.f32.mrf.mxu0
      %v2301 = vadd.f32 %v2188, %v2300
      %2302 = vmatmul.f32.gmra.mxu0 %v1410
      %v2303 = vpop.f32.mrf.mxu0
      %v2304 = vadd.f32 %v2191, %v2303
      %2305 = vmatmul.f32.gmra.mxu0 %v1419
      %v2306 = vpop.f32.mrf.mxu0
      %v2307 = vadd.f32 %v2194, %v2306
      %2308 = vmatmul.f32.gmra.mxu0 %v1428
      %v2309 = vpop.f32.mrf.mxu0
      %v2310 = vadd.f32 %v2197, %v2309
      %2311 = vmatmul.f32.gmra.mxu0 %v1437
      %v2312 = vpop.f32.mrf.mxu0
      %v2313 = vadd.f32 %v2200, %v2312
      %2314 = vmatmul.f32.gmra.mxu0 %v1446
      %v2315 = vpop.f32.mrf.mxu0
      %v2316 = vadd.f32 %v2203, %v2315
      %2317 = vmatmul.f32.gmra.mxu0 %v1455
      %v2318 = vpop.f32.mrf.mxu0
      %v2319 = vadd.f32 %v2206, %v2318
      %2320 = vmatmul.f32.gmra.mxu0 %v1464
      %v2321 = vpop.f32.mrf.mxu0
      %v2322 = vadd.f32 %v2209, %v2321
      %2323 = vmatmul.f32.gmra.mxu0 %v1473
      %v2324 = vpop.f32.mrf.mxu0
      %v2325 = vadd.f32 %v2212, %v2324
      %2326 = vmatmul.f32.gmra.mxu0 %v1482
      %v2327 = vpop.f32.mrf.mxu0
      %v2328 = vadd.f32 %v2215, %v2327
      %2329 = vmatmul.f32.gmra.mxu0 %v1491
      %v2330 = vpop.f32.mrf.mxu0
      %v2331 = vadd.f32 %v2218, %v2330
      %2332 = vmatmul.f32.gmra.mxu0 %v1500
      %v2333 = vpop.f32.mrf.mxu0
      %v2334 = vadd.f32 %v2221, %v2333
      %2335 = vmatmul.f32.gmra.mxu0 %v1509
      %v2336 = vpop.f32.mrf.mxu0
      %v2337 = vadd.f32 %v2224, %v2336
      %2338 = vdwg.mxu0
      %2339 = vmatpush.msra.mxu0 %v1624
      %2340 = vmatpush.msra.mxu0 %v1623
      %2341 = vmatpush.msra.mxu0 %v1622
      %2342 = vmatpush.msra.mxu0 %v1621
      %2343 = vmatpush.msra.mxu0 %v1620
      %2344 = vmatpush.msra.mxu0 %v1619
      %2345 = vmatpush.msra.mxu0 %v1618
      %2346 = vmatpush.msra.mxu0 %v1617
      %2347 = vmatpush.msra.mxu0 %v1616
      %2348 = vmatpush.msra.mxu0 %v1615
      %2349 = vmatpush.msra.mxu0 %v1614
      %2350 = vmatpush.msra.mxu0 %v1613
      %2351 = vmatpush.msra.mxu0 %v1612
      %2352 = vmatpush.msra.mxu0 %v1611
      %2353 = vmatpush.msra.mxu0 %v1610
      %2354 = vmatpush.msra.mxu0 %v1609
      %2355 = vmatmul.f32.gmra.mxu0 %v1231
      %v2356 = vpop.f32.mrf.mxu0
      %v2357 = vadd.f32 %v2244, %v2356
      %2358 = vmatmul.f32.gmra.mxu0 %v1240
      %v2359 = vpop.f32.mrf.mxu0
      %v2360 = vadd.f32 %v2247, %v2359
      %2361 = vmatmul.f32.gmra.mxu0 %v1249
      %v2362 = vpop.f32.mrf.mxu0
      %v2363 = vadd.f32 %v2250, %v2362
      %2364 = vmatmul.f32.gmra.mxu0 %v1258
      %v2365 = vpop.f32.mrf.mxu0
      %v2366 = vadd.f32 %v2253, %v2365
      %2367 = vmatmul.f32.gmra.mxu0 %v1267
      %v2368 = vpop.f32.mrf.mxu0
      %v2369 = vadd.f32 %v2256, %v2368
      %2370 = vmatmul.f32.gmra.mxu0 %v1276
      %v2371 = vpop.f32.mrf.mxu0
      %v2372 = vadd.f32 %v2259, %v2371
      %2373 = vmatmul.f32.gmra.mxu0 %v1285
      %v2374 = vpop.f32.mrf.mxu0
      %v2375 = vadd.f32 %v2262, %v2374
      %2376 = vmatmul.f32.gmra.mxu0 %v1294
      %v2377 = vpop.f32.mrf.mxu0
      %v2378 = vadd.f32 %v2265, %v2377
      %2379 = vmatmul.f32.gmra.mxu0 %v1303
      %v2380 = vpop.f32.mrf.mxu0
      %v2381 = vadd.f32 %v2268, %v2380
      %2382 = vmatmul.f32.gmra.mxu0 %v1312
      %v2383 = vpop.f32.mrf.mxu0
      %v2384 = vadd.f32 %v2271, %v2383
      %2385 = vmatmul.f32.gmra.mxu0 %v1321
      %v2386 = vpop.f32.mrf.mxu0
      %v2387 = vadd.f32 %v2274, %v2386
      %2388 = vmatmul.f32.gmra.mxu0 %v1330
      %v2389 = vpop.f32.mrf.mxu0
      %v2390 = vadd.f32 %v2277, %v2389
      %2391 = vmatmul.f32.gmra.mxu0 %v1339
      %v2392 = vpop.f32.mrf.mxu0
      %v2393 = vadd.f32 %v2280, %v2392
      %2394 = vmatmul.f32.gmra.mxu0 %v1348
      %v2395 = vpop.f32.mrf.mxu0
      %v2396 = vadd.f32 %v2283, %v2395
      %2397 = vmatmul.f32.gmra.mxu0 %v1357
      %v2398 = vpop.f32.mrf.mxu0
      %v2399 = vadd.f32 %v2286, %v2398
      %2400 = vmatmul.f32.gmra.mxu0 %v1366
      %v2401 = vpop.f32.mrf.mxu0
      %v2402 = vadd.f32 %v2289, %v2401
      %2403 = vmatmul.f32.gmra.mxu0 %v1375
      %v2404 = vpop.f32.mrf.mxu0
      %v2405 = vadd.f32 %v2292, %v2404
      %2406 = vmatmul.f32.gmra.mxu0 %v1384
      %v2407 = vpop.f32.mrf.mxu0
      %v2408 = vadd.f32 %v2295, %v2407
      %2409 = vmatmul.f32.gmra.mxu0 %v1393
      %v2410 = vpop.f32.mrf.mxu0
      %v2411 = vadd.f32 %v2298, %v2410
      %2412 = vmatmul.f32.gmra.mxu0 %v1402
      %v2413 = vpop.f32.mrf.mxu0
      %v2414 = vadd.f32 %v2301, %v2413
      %2415 = vmatmul.f32.gmra.mxu0 %v1411
      %v2416 = vpop.f32.mrf.mxu0
      %v2417 = vadd.f32 %v2304, %v2416
      %2418 = vmatmul.f32.gmra.mxu0 %v1420
      %v2419 = vpop.f32.mrf.mxu0
      %v2420 = vadd.f32 %v2307, %v2419
      %2421 = vmatmul.f32.gmra.mxu0 %v1429
      %v2422 = vpop.f32.mrf.mxu0
      %v2423 = vadd.f32 %v2310, %v2422
      %2424 = vmatmul.f32.gmra.mxu0 %v1438
      %v2425 = vpop.f32.mrf.mxu0
      %v2426 = vadd.f32 %v2313, %v2425
      %2427 = vmatmul.f32.gmra.mxu0 %v1447
      %v2428 = vpop.f32.mrf.mxu0
      %v2429 = vadd.f32 %v2316, %v2428
      %2430 = vmatmul.f32.gmra.mxu0 %v1456
      %v2431 = vpop.f32.mrf.mxu0
      %v2432 = vadd.f32 %v2319, %v2431
      %2433 = vmatmul.f32.gmra.mxu0 %v1465
      %v2434 = vpop.f32.mrf.mxu0
      %v2435 = vadd.f32 %v2322, %v2434
      %2436 = vmatmul.f32.gmra.mxu0 %v1474
      %v2437 = vpop.f32.mrf.mxu0
      %v2438 = vadd.f32 %v2325, %v2437
      %2439 = vmatmul.f32.gmra.mxu0 %v1483
      %v2440 = vpop.f32.mrf.mxu0
      %v2441 = vadd.f32 %v2328, %v2440
      %2442 = vmatmul.f32.gmra.mxu0 %v1492
      %v2443 = vpop.f32.mrf.mxu0
      %v2444 = vadd.f32 %v2331, %v2443
      %2445 = vmatmul.f32.gmra.mxu0 %v1501
      %v2446 = vpop.f32.mrf.mxu0
      %v2447 = vadd.f32 %v2334, %v2446
      %2448 = vmatmul.f32.gmra.mxu0 %v1510
      %v2449 = vpop.f32.mrf.mxu0
      %v2450 = vadd.f32 %v2337, %v2449
      %2451 = vdwg.mxu0
      %2452 = vmatpush.msra.mxu0 %v1640
      %2453 = vmatpush.msra.mxu0 %v1639
      %2454 = vmatpush.msra.mxu0 %v1638
      %2455 = vmatpush.msra.mxu0 %v1637
      %2456 = vmatpush.msra.mxu0 %v1636
      %2457 = vmatpush.msra.mxu0 %v1635
      %2458 = vmatpush.msra.mxu0 %v1634
      %2459 = vmatpush.msra.mxu0 %v1633
      %2460 = vmatpush.msra.mxu0 %v1632
      %2461 = vmatpush.msra.mxu0 %v1631
      %2462 = vmatpush.msra.mxu0 %v1630
      %2463 = vmatpush.msra.mxu0 %v1629
      %2464 = vmatpush.msra.mxu0 %v1628
      %2465 = vmatpush.msra.mxu0 %v1627
      %2466 = vmatpush.msra.mxu0 %v1626
      %2467 = vmatpush.msra.mxu0 %v1625
      %2468 = vmatmul.f32.gmra.mxu0 %v1232
      %v2469 = vpop.f32.mrf.mxu0
      %v2470 = vadd.f32 %v2357, %v2469
      %2471 = vmatmul.f32.gmra.mxu0 %v1241
      %v2472 = vpop.f32.mrf.mxu0
      %v2473 = vadd.f32 %v2360, %v2472
      %2474 = vmatmul.f32.gmra.mxu0 %v1250
      %v2475 = vpop.f32.mrf.mxu0
      %v2476 = vadd.f32 %v2363, %v2475
      %2477 = vmatmul.f32.gmra.mxu0 %v1259
      %v2478 = vpop.f32.mrf.mxu0
      %v2479 = vadd.f32 %v2366, %v2478
      %2480 = vmatmul.f32.gmra.mxu0 %v1268
      %v2481 = vpop.f32.mrf.mxu0
      %v2482 = vadd.f32 %v2369, %v2481
      %2483 = vmatmul.f32.gmra.mxu0 %v1277
      %v2484 = vpop.f32.mrf.mxu0
      %v2485 = vadd.f32 %v2372, %v2484
      %2486 = vmatmul.f32.gmra.mxu0 %v1286
      %v2487 = vpop.f32.mrf.mxu0
      %v2488 = vadd.f32 %v2375, %v2487
      %2489 = vmatmul.f32.gmra.mxu0 %v1295
      %v2490 = vpop.f32.mrf.mxu0
      %v2491 = vadd.f32 %v2378, %v2490
      %2492 = vmatmul.f32.gmra.mxu0 %v1304
      %v2493 = vpop.f32.mrf.mxu0
      %v2494 = vadd.f32 %v2381, %v2493
      %2495 = vmatmul.f32.gmra.mxu0 %v1313
      %v2496 = vpop.f32.mrf.mxu0
      %v2497 = vadd.f32 %v2384, %v2496
      %2498 = vmatmul.f32.gmra.mxu0 %v1322
      %v2499 = vpop.f32.mrf.mxu0
      %v2500 = vadd.f32 %v2387, %v2499
      %2501 = vmatmul.f32.gmra.mxu0 %v1331
      %v2502 = vpop.f32.mrf.mxu0
      %v2503 = vadd.f32 %v2390, %v2502
      %2504 = vmatmul.f32.gmra.mxu0 %v1340
      %v2505 = vpop.f32.mrf.mxu0
      %v2506 = vadd.f32 %v2393, %v2505
      %2507 = vmatmul.f32.gmra.mxu0 %v1349
      %v2508 = vpop.f32.mrf.mxu0
      %v2509 = vadd.f32 %v2396, %v2508
      %2510 = vmatmul.f32.gmra.mxu0 %v1358
      %v2511 = vpop.f32.mrf.mxu0
      %v2512 = vadd.f32 %v2399, %v2511
      %2513 = vmatmul.f32.gmra.mxu0 %v1367
      %v2514 = vpop.f32.mrf.mxu0
      %v2515 = vadd.f32 %v2402, %v2514
      %2516 = vmatmul.f32.gmra.mxu0 %v1376
      %v2517 = vpop.f32.mrf.mxu0
      %v2518 = vadd.f32 %v2405, %v2517
      %2519 = vmatmul.f32.gmra.mxu0 %v1385
      %v2520 = vpop.f32.mrf.mxu0
      %v2521 = vadd.f32 %v2408, %v2520
      %2522 = vmatmul.f32.gmra.mxu0 %v1394
      %v2523 = vpop.f32.mrf.mxu0
      %v2524 = vadd.f32 %v2411, %v2523
      %2525 = vmatmul.f32.gmra.mxu0 %v1403
      %v2526 = vpop.f32.mrf.mxu0
      %v2527 = vadd.f32 %v2414, %v2526
      %2528 = vmatmul.f32.gmra.mxu0 %v1412
      %v2529 = vpop.f32.mrf.mxu0
      %v2530 = vadd.f32 %v2417, %v2529
      %2531 = vmatmul.f32.gmra.mxu0 %v1421
      %v2532 = vpop.f32.mrf.mxu0
      %v2533 = vadd.f32 %v2420, %v2532
      %2534 = vmatmul.f32.gmra.mxu0 %v1430
      %v2535 = vpop.f32.mrf.mxu0
      %v2536 = vadd.f32 %v2423, %v2535
      %2537 = vmatmul.f32.gmra.mxu0 %v1439
      %v2538 = vpop.f32.mrf.mxu0
      %v2539 = vadd.f32 %v2426, %v2538
      %2540 = vmatmul.f32.gmra.mxu0 %v1448
      %v2541 = vpop.f32.mrf.mxu0
      %v2542 = vadd.f32 %v2429, %v2541
      %2543 = vmatmul.f32.gmra.mxu0 %v1457
      %v2544 = vpop.f32.mrf.mxu0
      %v2545 = vadd.f32 %v2432, %v2544
      %2546 = vmatmul.f32.gmra.mxu0 %v1466
      %v2547 = vpop.f32.mrf.mxu0
      %v2548 = vadd.f32 %v2435, %v2547
      %2549 = vmatmul.f32.gmra.mxu0 %v1475
      %v2550 = vpop.f32.mrf.mxu0
      %v2551 = vadd.f32 %v2438, %v2550
      %2552 = vmatmul.f32.gmra.mxu0 %v1484
      %v2553 = vpop.f32.mrf.mxu0
      %v2554 = vadd.f32 %v2441, %v2553
      %2555 = vmatmul.f32.gmra.mxu0 %v1493
      %v2556 = vpop.f32.mrf.mxu0
      %v2557 = vadd.f32 %v2444, %v2556
      %2558 = vmatmul.f32.gmra.mxu0 %v1502
      %v2559 = vpop.f32.mrf.mxu0
      %v2560 = vadd.f32 %v2447, %v2559
      %2561 = vmatmul.f32.gmra.mxu0 %v1511
      %v2562 = vpop.f32.mrf.mxu0
      %v2563 = vadd.f32 %v2450, %v2562
      %2564 = vdwg.mxu0
      %2565 = vmatpush.msra.mxu0 %v1656
      %2566 = vmatpush.msra.mxu0 %v1655
      %2567 = vmatpush.msra.mxu0 %v1654
      %2568 = vmatpush.msra.mxu0 %v1653
      %2569 = vmatpush.msra.mxu0 %v1652
      %2570 = vmatpush.msra.mxu0 %v1651
      %2571 = vmatpush.msra.mxu0 %v1650
      %2572 = vmatpush.msra.mxu0 %v1649
      %2573 = vmatpush.msra.mxu0 %v1648
      %2574 = vmatpush.msra.mxu0 %v1647
      %2575 = vmatpush.msra.mxu0 %v1646
      %2576 = vmatpush.msra.mxu0 %v1645
      %2577 = vmatpush.msra.mxu0 %v1644
      %2578 = vmatpush.msra.mxu0 %v1643
      %2579 = vmatpush.msra.mxu0 %v1642
      %2580 = vmatpush.msra.mxu0 %v1641
      %2581 = vmatmul.f32.gmra.mxu0 %v1233
      %v2582 = vpop.f32.mrf.mxu0
      %v2583 = vadd.f32 %v2470, %v2582
      %2584 = vmatmul.f32.gmra.mxu0 %v1242
      %v2585 = vpop.f32.mrf.mxu0
      %v2586 = vadd.f32 %v2473, %v2585
      %2587 = vmatmul.f32.gmra.mxu0 %v1251
      %v2588 = vpop.f32.mrf.mxu0
      %v2589 = vadd.f32 %v2476, %v2588
      %2590 = vmatmul.f32.gmra.mxu0 %v1260
      %v2591 = vpop.f32.mrf.mxu0
      %v2592 = vadd.f32 %v2479, %v2591
      %2593 = vmatmul.f32.gmra.mxu0 %v1269
      %v2594 = vpop.f32.mrf.mxu0
      %v2595 = vadd.f32 %v2482, %v2594
      %2596 = vmatmul.f32.gmra.mxu0 %v1278
      %v2597 = vpop.f32.mrf.mxu0
      %v2598 = vadd.f32 %v2485, %v2597
      %2599 = vmatmul.f32.gmra.mxu0 %v1287
      %v2600 = vpop.f32.mrf.mxu0
      %v2601 = vadd.f32 %v2488, %v2600
      %2602 = vmatmul.f32.gmra.mxu0 %v1296
      %v2603 = vpop.f32.mrf.mxu0
      %v2604 = vadd.f32 %v2491, %v2603
      %2605 = vmatmul.f32.gmra.mxu0 %v1305
      %v2606 = vpop.f32.mrf.mxu0
      %v2607 = vadd.f32 %v2494, %v2606
      %2608 = vmatmul.f32.gmra.mxu0 %v1314
      %v2609 = vpop.f32.mrf.mxu0
      %v2610 = vadd.f32 %v2497, %v2609
      %2611 = vmatmul.f32.gmra.mxu0 %v1323
      %v2612 = vpop.f32.mrf.mxu0
      %v2613 = vadd.f32 %v2500, %v2612
      %2614 = vmatmul.f32.gmra.mxu0 %v1332
      %v2615 = vpop.f32.mrf.mxu0
      %v2616 = vadd.f32 %v2503, %v2615
      %2617 = vmatmul.f32.gmra.mxu0 %v1341
      %v2618 = vpop.f32.mrf.mxu0
      %v2619 = vadd.f32 %v2506, %v2618
      %2620 = vmatmul.f32.gmra.mxu0 %v1350
      %v2621 = vpop.f32.mrf.mxu0
      %v2622 = vadd.f32 %v2509, %v2621
      %2623 = vmatmul.f32.gmra.mxu0 %v1359
      %v2624 = vpop.f32.mrf.mxu0
      %v2625 = vadd.f32 %v2512, %v2624
      %2626 = vmatmul.f32.gmra.mxu0 %v1368
      %v2627 = vpop.f32.mrf.mxu0
      %v2628 = vadd.f32 %v2515, %v2627
      %2629 = vmatmul.f32.gmra.mxu0 %v1377
      %v2630 = vpop.f32.mrf.mxu0
      %v2631 = vadd.f32 %v2518, %v2630
      %2632 = vmatmul.f32.gmra.mxu0 %v1386
      %v2633 = vpop.f32.mrf.mxu0
      %v2634 = vadd.f32 %v2521, %v2633
      %2635 = vmatmul.f32.gmra.mxu0 %v1395
      %v2636 = vpop.f32.mrf.mxu0
      %v2637 = vadd.f32 %v2524, %v2636
      %2638 = vmatmul.f32.gmra.mxu0 %v1404
      %v2639 = vpop.f32.mrf.mxu0
      %v2640 = vadd.f32 %v2527, %v2639
      %2641 = vmatmul.f32.gmra.mxu0 %v1413
      %v2642 = vpop.f32.mrf.mxu0
      %v2643 = vadd.f32 %v2530, %v2642
      %2644 = vmatmul.f32.gmra.mxu0 %v1422
      %v2645 = vpop.f32.mrf.mxu0
      %v2646 = vadd.f32 %v2533, %v2645
      %2647 = vmatmul.f32.gmra.mxu0 %v1431
      %v2648 = vpop.f32.mrf.mxu0
      %v2649 = vadd.f32 %v2536, %v2648
      %2650 = vmatmul.f32.gmra.mxu0 %v1440
      %v2651 = vpop.f32.mrf.mxu0
      %v2652 = vadd.f32 %v2539, %v2651
      %2653 = vmatmul.f32.gmra.mxu0 %v1449
      %v2654 = vpop.f32.mrf.mxu0
      %v2655 = vadd.f32 %v2542, %v2654
      %2656 = vmatmul.f32.gmra.mxu0 %v1458
      %v2657 = vpop.f32.mrf.mxu0
      %v2658 = vadd.f32 %v2545, %v2657
      %2659 = vmatmul.f32.gmra.mxu0 %v1467
      %v2660 = vpop.f32.mrf.mxu0
      %v2661 = vadd.f32 %v2548, %v2660
      %2662 = vmatmul.f32.gmra.mxu0 %v1476
      %v2663 = vpop.f32.mrf.mxu0
      %v2664 = vadd.f32 %v2551, %v2663
      %2665 = vmatmul.f32.gmra.mxu0 %v1485
      %v2666 = vpop.f32.mrf.mxu0
      %v2667 = vadd.f32 %v2554, %v2666
      %2668 = vmatmul.f32.gmra.mxu0 %v1494
      %v2669 = vpop.f32.mrf.mxu0
      %v2670 = vadd.f32 %v2557, %v2669
      %2671 = vmatmul.f32.gmra.mxu0 %v1503
      %v2672 = vpop.f32.mrf.mxu0
      %v2673 = vadd.f32 %v2560, %v2672
      %2674 = vmatmul.f32.gmra.mxu0 %v1512
      %v2675 = vpop.f32.mrf.mxu0
      %v2676 = vadd.f32 %v2563, %v2675
      %2677 = vdwg.mxu0
      %v2678 = vmax.f32 %v2583, 0.0
      %v2679 = vmax.f32 %v2586, 0.0
      %v2680 = vmax.f32 %v2589, 0.0
      %v2681 = vmax.f32 %v2592, 0.0
      %v2682 = vmax.f32 %v2595, 0.0
      %v2683 = vmax.f32 %v2598, 0.0
      %v2684 = vmax.f32 %v2601, 0.0
      %v2685 = vmax.f32 %v2604, 0.0
      %v2686 = vmax.f32 %v2607, 0.0
      %v2687 = vmax.f32 %v2610, 0.0
      %v2688 = vmax.f32 %v2613, 0.0
      %v2689 = vmax.f32 %v2616, 0.0
      %v2690 = vmax.f32 %v2619, 0.0
      %v2691 = vmax.f32 %v2622, 0.0
      %v2692 = vmax.f32 %v2625, 0.0
      %v2693 = vmax.f32 %v2628, 0.0
      %v2694 = vmax.f32 %v2631, 0.0
      %v2695 = vmax.f32 %v2634, 0.0
      %v2696 = vmax.f32 %v2637, 0.0
      %v2697 = vmax.f32 %v2640, 0.0
      %v2698 = vmax.f32 %v2643, 0.0
      %v2699 = vmax.f32 %v2646, 0.0
      %v2700 = vmax.f32 %v2649, 0.0
      %v2701 = vmax.f32 %v2652, 0.0
      %v2702 = vmax.f32 %v2655, 0.0
      %v2703 = vmax.f32 %v2658, 0.0
      %v2704 = vmax.f32 %v2661, 0.0
      %v2705 = vmax.f32 %v2664, 0.0
      %v2706 = vmax.f32 %v2667, 0.0
      %v2707 = vmax.f32 %v2670, 0.0
      %v2708 = vmax.f32 %v2673, 0.0
      %v2709 = vmax.f32 %v2676, 0.0
      %2710 = vst [vmem:[#allocation3] sm:$0xff] 0.0
      %2711 = vst [vmem:[#allocation3 + $0x8] sm:$0xff] 0.0
      %2712 = vst [vmem:[#allocation3 + $0x10] sm:$0x3] 0.0
      %2713 = vst [vmem:[#allocation3 + $0x18] sm:$0xff] 0.0
      %2714 = vst [vmem:[#allocation3 + $0x20] sm:$0xff] 0.0
      %2715 = vst [vmem:[#allocation3 + $0x28] sm:$0x3] 0.0
      %2716 = vst [vmem:[#allocation3 + $0x30] sm:$0xff] 0.0
      %2717 = vst [vmem:[#allocation3 + $0x38] sm:$0xff] 0.0
      %2718 = vst [vmem:[#allocation3 + $0x40] sm:$0x3] 0.0
      %2719 = vst [vmem:[#allocation3 + $0x48] sm:$0xff] 0.0
      %2720 = vst [vmem:[#allocation3 + $0x50] sm:$0xff] 0.0
      %2721 = vst [vmem:[#allocation3 + $0x58] sm:$0x3] 0.0
      %2722 = vst [vmem:[#allocation3 + $0x60] sm:$0xff] 0.0
      %2723 = vst [vmem:[#allocation3 + $0x68] sm:$0xff] 0.0
      %2724 = vst [vmem:[#allocation3 + $0x70] sm:$0x3] 0.0
      %2725 = vst [vmem:[#allocation3 + $0x78] sm:$0xff] 0.0
      %2726 = vst [vmem:[#allocation3 + $0x80] sm:$0xff] 0.0
      %2727 = vst [vmem:[#allocation3 + $0x88] sm:$0x3] 0.0
      %2728 = vst [vmem:[#allocation3 + $0x90] sm:$0xff] 0.0
      %2729 = vst [vmem:[#allocation3 + $0x98] sm:$0xff] 0.0
      %2730 = vst [vmem:[#allocation3 + $0xa0] sm:$0x3] 0.0
      %2731 = vst [vmem:[#allocation3 + $0xa8] sm:$0xff] 0.0
      %2732 = vst [vmem:[#allocation3 + $0xb0] sm:$0xff] 0.0
      %2733 = vst [vmem:[#allocation3 + $0xb8] sm:$0x3] 0.0
      %2734 = vst [vmem:[#allocation3 + $0xc0] sm:$0xff] 0.0
      %2735 = vst [vmem:[#allocation3 + $0xc8] sm:$0xff] 0.0
      %2736 = vst [vmem:[#allocation3 + $0xd0] sm:$0x3] 0.0
      %2737 = vst [vmem:[#allocation3 + $0xd8] sm:$0xff] 0.0
      %2738 = vst [vmem:[#allocation3 + $0xe0] sm:$0xff] 0.0
      %2739 = vst [vmem:[#allocation3 + $0xe8] sm:$0x3] 0.0
      %2740 = vst [vmem:[#allocation3 + $0xf0] sm:$0xff] 0.0
      %2741 = vst [vmem:[#allocation3 + $0xf8] sm:$0xff] 0.0
      %2742 = vst [vmem:[#allocation3 + $0x100] sm:$0x3] 0.0
      %2743 = vst [vmem:[#allocation3 + $0x108] sm:$0xff] 0.0
      %2744 = vst [vmem:[#allocation3 + $0x110] sm:$0xff] 0.0
      %2745 = vst [vmem:[#allocation3 + $0x118] sm:$0x3] 0.0
      %2746 = vst [vmem:[#allocation3 + $0x120] sm:$0xff] 0.0
      %2747 = vst [vmem:[#allocation3 + $0x128] sm:$0xff] 0.0
      %2748 = vst [vmem:[#allocation3 + $0x130] sm:$0x3] 0.0
      %2749 = vst [vmem:[#allocation3 + $0x138] sm:$0xff] 0.0
      %2750 = vst [vmem:[#allocation3 + $0x140] sm:$0xff] 0.0
      %2751 = vst [vmem:[#allocation3 + $0x148] sm:$0x3] 0.0
      %2752 = vst [vmem:[#allocation3 + $0x150] sm:$0xff] 0.0
      %2753 = vst [vmem:[#allocation3 + $0x158] sm:$0xff] 0.0
      %2754 = vst [vmem:[#allocation3 + $0x160] sm:$0x3] 0.0
      %2755 = vst [vmem:[#allocation3 + $0x168] sm:$0xff] 0.0
      %2756 = vst [vmem:[#allocation3 + $0x170] sm:$0xff] 0.0
      %2757 = vst [vmem:[#allocation3 + $0x178] sm:$0x3] 0.0
      %2758 = vst [vmem:[#allocation3 + $0x180] sm:$0xff] 0.0
      %2759 = vst [vmem:[#allocation3 + $0x188] sm:$0xff] 0.0
      %2760 = vst [vmem:[#allocation3 + $0x190] sm:$0x3] 0.0
      %2761 = vst [vmem:[#allocation3 + $0x198] sm:$0xff] 0.0
      %2762 = vst [vmem:[#allocation3 + $0x1a0] sm:$0xff] 0.0
      %2763 = vst [vmem:[#allocation3 + $0x1a8] sm:$0x3] 0.0
      %s2764 = scalar_lea.vmem [#allocation3], 24
      %2765 = vst [vmem:[%s2764 + $0x1] sm:$0xff] %v2678
      %2766 = vst [vmem:[%s2764 + $0x9] sm:$0xff] %v2679
      %2767 = vst [vmem:[%s2764 + $0x19] sm:$0xff] %v2680
      %2768 = vst [vmem:[%s2764 + $0x21] sm:$0xff] %v2681
      %2769 = vst [vmem:[%s2764 + $0x31] sm:$0xff] %v2682
      %2770 = vst [vmem:[%s2764 + $0x39] sm:$0xff] %v2683
      %2771 = vst [vmem:[%s2764 + $0x49] sm:$0xff] %v2684
      %2772 = vst [vmem:[%s2764 + $0x51] sm:$0xff] %v2685
      %2773 = vst [vmem:[%s2764 + $0x61] sm:$0xff] %v2686
      %2774 = vst [vmem:[%s2764 + $0x69] sm:$0xff] %v2687
      %2775 = vst [vmem:[%s2764 + $0x79] sm:$0xff] %v2688
      %2776 = vst [vmem:[%s2764 + $0x81] sm:$0xff] %v2689
      %2777 = vst [vmem:[%s2764 + $0x91] sm:$0xff] %v2690
      %2778 = vst [vmem:[%s2764 + $0x99] sm:$0xff] %v2691
      %2779 = vst [vmem:[%s2764 + $0xa9] sm:$0xff] %v2692
      %2780 = vst [vmem:[%s2764 + $0xb1] sm:$0xff] %v2693
      %2781 = vst [vmem:[%s2764 + $0xc1] sm:$0xff] %v2694
      %2782 = vst [vmem:[%s2764 + $0xc9] sm:$0xff] %v2695
      %2783 = vst [vmem:[%s2764 + $0xd9] sm:$0xff] %v2696
      %2784 = vst [vmem:[%s2764 + $0xe1] sm:$0xff] %v2697
      %2785 = vst [vmem:[%s2764 + $0xf1] sm:$0xff] %v2698
      %2786 = vst [vmem:[%s2764 + $0xf9] sm:$0xff] %v2699
      %2787 = vst [vmem:[%s2764 + $0x109] sm:$0xff] %v2700
      %2788 = vst [vmem:[%s2764 + $0x111] sm:$0xff] %v2701
      %2789 = vst [vmem:[%s2764 + $0x121] sm:$0xff] %v2702
      %2790 = vst [vmem:[%s2764 + $0x129] sm:$0xff] %v2703
      %2791 = vst [vmem:[%s2764 + $0x139] sm:$0xff] %v2704
      %2792 = vst [vmem:[%s2764 + $0x141] sm:$0xff] %v2705
      %2793 = vst [vmem:[%s2764 + $0x151] sm:$0xff] %v2706
      %2794 = vst [vmem:[%s2764 + $0x159] sm:$0xff] %v2707
      %2795 = vst [vmem:[%s2764 + $0x169] sm:$0xff] %v2708
      %2796 = vst [vmem:[%s2764 + $0x171] sm:$0xff] %v2709
      %v2797 = vld [vmem:[#allocation3] sm:$0xff]
      %v2798 = vld [vmem:[#allocation3 + $0x8] sm:$0xff]
      %v2799 = vld [vmem:[#allocation3 + $0x18] sm:$0xff]
      %v2800 = vld [vmem:[#allocation3 + $0x20] sm:$0xff]
      %v2801 = vld [vmem:[#allocation3 + $0x30] sm:$0xff]
      %v2802 = vld [vmem:[#allocation3 + $0x38] sm:$0xff]
      %v2803 = vld [vmem:[#allocation3 + $0x48] sm:$0xff]
      %v2804 = vld [vmem:[#allocation3 + $0x50] sm:$0xff]
      %v2805 = vld [vmem:[#allocation3 + $0x60] sm:$0xff]
      %v2806 = vld [vmem:[#allocation3 + $0x68] sm:$0xff]
      %v2807 = vld [vmem:[#allocation3 + $0x78] sm:$0xff]
      %v2808 = vld [vmem:[#allocation3 + $0x80] sm:$0xff]
      %v2809 = vld [vmem:[#allocation3 + $0x90] sm:$0xff]
      %v2810 = vld [vmem:[#allocation3 + $0x98] sm:$0xff]
      %v2811 = vld [vmem:[#allocation3 + $0xa8] sm:$0xff]
      %v2812 = vld [vmem:[#allocation3 + $0xb0] sm:$0xff]
      %v2813 = vld [vmem:[#allocation3 + $0xc0] sm:$0xff]
      %v2814 = vld [vmem:[#allocation3 + $0xc8] sm:$0xff]
      %v2815 = vld [vmem:[#allocation3 + $0xd8] sm:$0xff]
      %v2816 = vld [vmem:[#allocation3 + $0xe0] sm:$0xff]
      %v2817 = vld [vmem:[#allocation3 + $0xf0] sm:$0xff]
      %v2818 = vld [vmem:[#allocation3 + $0xf8] sm:$0xff]
      %v2819 = vld [vmem:[#allocation3 + $0x108] sm:$0xff]
      %v2820 = vld [vmem:[#allocation3 + $0x110] sm:$0xff]
      %v2821 = vld [vmem:[#allocation3 + $0x120] sm:$0xff]
      %v2822 = vld [vmem:[#allocation3 + $0x128] sm:$0xff]
      %v2823 = vld [vmem:[#allocation3 + $0x138] sm:$0xff]
      %v2824 = vld [vmem:[#allocation3 + $0x140] sm:$0xff]
      %v2825 = vld [vmem:[#allocation3 + $0x150] sm:$0xff]
      %v2826 = vld [vmem:[#allocation3 + $0x158] sm:$0xff]
      %v2827 = vld [vmem:[#allocation3 + $0x168] sm:$0xff]
      %v2828 = vld [vmem:[#allocation3 + $0x170] sm:$0xff]
      %2829 = vst [vmem:[#allocation4] sm:$0xff] %v2797
      %2830 = vst [vmem:[#allocation4 + $0x48] sm:$0xff] %v2798
      %2831 = vst [vmem:[#allocation4 + $0x90] sm:$0xff] %v2799
      %2832 = vst [vmem:[#allocation4 + $0xd8] sm:$0xff] %v2800
      %2833 = vst [vmem:[#allocation4 + $0x120] sm:$0xff] %v2801
      %2834 = vst [vmem:[#allocation4 + $0x168] sm:$0xff] %v2802
      %2835 = vst [vmem:[#allocation4 + $0x1b0] sm:$0xff] %v2803
      %2836 = vst [vmem:[#allocation4 + $0x1f8] sm:$0xff] %v2804
      %2837 = vst [vmem:[#allocation4 + $0x240] sm:$0xff] %v2805
      %2838 = vst [vmem:[#allocation4 + $0x288] sm:$0xff] %v2806
      %2839 = vst [vmem:[#allocation4 + $0x2d0] sm:$0xff] %v2807
      %2840 = vst [vmem:[#allocation4 + $0x318] sm:$0xff] %v2808
      %2841 = vst [vmem:[#allocation4 + $0x360] sm:$0xff] %v2809
      %2842 = vst [vmem:[#allocation4 + $0x3a8] sm:$0xff] %v2810
      %2843 = vst [vmem:[#allocation4 + $0x3f0] sm:$0xff] %v2811
      %2844 = vst [vmem:[#allocation4 + $0x438] sm:$0xff] %v2812
      %2845 = vst [vmem:[#allocation4 + $0x480] sm:$0xff] %v2813
      %2846 = vst [vmem:[#allocation4 + $0x4c8] sm:$0xff] %v2814
      %2847 = vst [vmem:[#allocation4 + $0x510] sm:$0xff] %v2815
      %2848 = vst [vmem:[#allocation4 + $0x558] sm:$0xff] %v2816
      %2849 = vst [vmem:[#allocation4 + $0x5a0] sm:$0xff] %v2817
      %2850 = vst [vmem:[#allocation4 + $0x5e8] sm:$0xff] %v2818
      %2851 = vst [vmem:[#allocation4 + $0x630] sm:$0xff] %v2819
      %2852 = vst [vmem:[#allocation4 + $0x678] sm:$0xff] %v2820
      %2853 = vst [vmem:[#allocation4 + $0x6c0] sm:$0xff] %v2821
      %2854 = vst [vmem:[#allocation4 + $0x708] sm:$0xff] %v2822
      %2855 = vst [vmem:[#allocation4 + $0x750] sm:$0xff] %v2823
      %2856 = vst [vmem:[#allocation4 + $0x798] sm:$0xff] %v2824
      %2857 = vst [vmem:[#allocation4 + $0x7e0] sm:$0xff] %v2825
      %2858 = vst [vmem:[#allocation4 + $0x828] sm:$0xff] %v2826
      %2859 = vst [vmem:[#allocation4 + $0x870] sm:$0xff] %v2827
      %2860 = vst [vmem:[#allocation4 + $0x8b8] sm:$0xff] %v2828
      %v2861 = vld [vmem:[#allocation3 + $0x1] sm:$0xff]
      %v2862 = vld [vmem:[#allocation3 + $0x9] sm:$0xff]
      %v2863 = vld [vmem:[#allocation3 + $0x19] sm:$0xff]
      %v2864 = vld [vmem:[#allocation3 + $0x21] sm:$0xff]
      %v2865 = vld [vmem:[#allocation3 + $0x31] sm:$0xff]
      %v2866 = vld [vmem:[#allocation3 + $0x39] sm:$0xff]
      %v2867 = vld [vmem:[#allocation3 + $0x49] sm:$0xff]
      %v2868 = vld [vmem:[#allocation3 + $0x51] sm:$0xff]
      %v2869 = vld [vmem:[#allocation3 + $0x61] sm:$0xff]
      %v2870 = vld [vmem:[#allocation3 + $0x69] sm:$0xff]
      %v2871 = vld [vmem:[#allocation3 + $0x79] sm:$0xff]
      %v2872 = vld [vmem:[#allocation3 + $0x81] sm:$0xff]
      %v2873 = vld [vmem:[#allocation3 + $0x91] sm:$0xff]
      %v2874 = vld [vmem:[#allocation3 + $0x99] sm:$0xff]
      %v2875 = vld [vmem:[#allocation3 + $0xa9] sm:$0xff]
      %v2876 = vld [vmem:[#allocation3 + $0xb1] sm:$0xff]
      %v2877 = vld [vmem:[#allocation3 + $0xc1] sm:$0xff]
      %v2878 = vld [vmem:[#allocation3 + $0xc9] sm:$0xff]
      %v2879 = vld [vmem:[#allocation3 + $0xd9] sm:$0xff]
      %v2880 = vld [vmem:[#allocation3 + $0xe1] sm:$0xff]
      %v2881 = vld [vmem:[#allocation3 + $0xf1] sm:$0xff]
      %v2882 = vld [vmem:[#allocation3 + $0xf9] sm:$0xff]
      %v2883 = vld [vmem:[#allocation3 + $0x109] sm:$0xff]
      %v2884 = vld [vmem:[#allocation3 + $0x111] sm:$0xff]
      %v2885 = vld [vmem:[#allocation3 + $0x121] sm:$0xff]
      %v2886 = vld [vmem:[#allocation3 + $0x129] sm:$0xff]
      %v2887 = vld [vmem:[#allocation3 + $0x139] sm:$0xff]
      %v2888 = vld [vmem:[#allocation3 + $0x141] sm:$0xff]
      %v2889 = vld [vmem:[#allocation3 + $0x151] sm:$0xff]
      %v2890 = vld [vmem:[#allocation3 + $0x159] sm:$0xff]
      %v2891 = vld [vmem:[#allocation3 + $0x169] sm:$0xff]
      %v2892 = vld [vmem:[#allocation3 + $0x171] sm:$0xff]
      %2893 = vst [vmem:[#allocation4 + $0x8] sm:$0xff] %v2861
      %2894 = vst [vmem:[#allocation4 + $0x50] sm:$0xff] %v2862
      %2895 = vst [vmem:[#allocation4 + $0x98] sm:$0xff] %v2863
      %2896 = vst [vmem:[#allocation4 + $0xe0] sm:$0xff] %v2864
      %2897 = vst [vmem:[#allocation4 + $0x128] sm:$0xff] %v2865
      %2898 = vst [vmem:[#allocation4 + $0x170] sm:$0xff] %v2866
      %2899 = vst [vmem:[#allocation4 + $0x1b8] sm:$0xff] %v2867
      %2900 = vst [vmem:[#allocation4 + $0x200] sm:$0xff] %v2868
      %2901 = vst [vmem:[#allocation4 + $0x248] sm:$0xff] %v2869
      %2902 = vst [vmem:[#allocation4 + $0x290] sm:$0xff] %v2870
      %2903 = vst [vmem:[#allocation4 + $0x2d8] sm:$0xff] %v2871
      %2904 = vst [vmem:[#allocation4 + $0x320] sm:$0xff] %v2872
      %2905 = vst [vmem:[#allocation4 + $0x368] sm:$0xff] %v2873
      %2906 = vst [vmem:[#allocation4 + $0x3b0] sm:$0xff] %v2874
      %2907 = vst [vmem:[#allocation4 + $0x3f8] sm:$0xff] %v2875
      %2908 = vst [vmem:[#allocation4 + $0x440] sm:$0xff] %v2876
      %2909 = vst [vmem:[#allocation4 + $0x488] sm:$0xff] %v2877
      %2910 = vst [vmem:[#allocation4 + $0x4d0] sm:$0xff] %v2878
      %2911 = vst [vmem:[#allocation4 + $0x518] sm:$0xff] %v2879
      %2912 = vst [vmem:[#allocation4 + $0x560] sm:$0xff] %v2880
      %2913 = vst [vmem:[#allocation4 + $0x5a8] sm:$0xff] %v2881
      %2914 = vst [vmem:[#allocation4 + $0x5f0] sm:$0xff] %v2882
      %2915 = vst [vmem:[#allocation4 + $0x638] sm:$0xff] %v2883
      %2916 = vst [vmem:[#allocation4 + $0x680] sm:$0xff] %v2884
      %2917 = vst [vmem:[#allocation4 + $0x6c8] sm:$0xff] %v2885
      %2918 = vst [vmem:[#allocation4 + $0x710] sm:$0xff] %v2886
      %2919 = vst [vmem:[#allocation4 + $0x758] sm:$0xff] %v2887
      %2920 = vst [vmem:[#allocation4 + $0x7a0] sm:$0xff] %v2888
      %2921 = vst [vmem:[#allocation4 + $0x7e8] sm:$0xff] %v2889
      %2922 = vst [vmem:[#allocation4 + $0x830] sm:$0xff] %v2890
      %2923 = vst [vmem:[#allocation4 + $0x878] sm:$0xff] %v2891
      %2924 = vst [vmem:[#allocation4 + $0x8c0] sm:$0xff] %v2892
      %v2925 = vld [vmem:[#allocation3 + $0x2] sm:$0xff]
      %v2926 = vld [vmem:[#allocation3 + $0xa] sm:$0xff]
      %v2927 = vld [vmem:[#allocation3 + $0x1a] sm:$0xff]
      %v2928 = vld [vmem:[#allocation3 + $0x22] sm:$0xff]
      %v2929 = vld [vmem:[#allocation3 + $0x32] sm:$0xff]
      %v2930 = vld [vmem:[#allocation3 + $0x3a] sm:$0xff]
      %v2931 = vld [vmem:[#allocation3 + $0x4a] sm:$0xff]
      %v2932 = vld [vmem:[#allocation3 + $0x52] sm:$0xff]
      %v2933 = vld [vmem:[#allocation3 + $0x62] sm:$0xff]
      %v2934 = vld [vmem:[#allocation3 + $0x6a] sm:$0xff]
      %v2935 = vld [vmem:[#allocation3 + $0x7a] sm:$0xff]
      %v2936 = vld [vmem:[#allocation3 + $0x82] sm:$0xff]
      %v2937 = vld [vmem:[#allocation3 + $0x92] sm:$0xff]
      %v2938 = vld [vmem:[#allocation3 + $0x9a] sm:$0xff]
      %v2939 = vld [vmem:[#allocation3 + $0xaa] sm:$0xff]
      %v2940 = vld [vmem:[#allocation3 + $0xb2] sm:$0xff]
      %v2941 = vld [vmem:[#allocation3 + $0xc2] sm:$0xff]
      %v2942 = vld [vmem:[#allocation3 + $0xca] sm:$0xff]
      %v2943 = vld [vmem:[#allocation3 + $0xda] sm:$0xff]
      %v2944 = vld [vmem:[#allocation3 + $0xe2] sm:$0xff]
      %v2945 = vld [vmem:[#allocation3 + $0xf2] sm:$0xff]
      %v2946 = vld [vmem:[#allocation3 + $0xfa] sm:$0xff]
      %v2947 = vld [vmem:[#allocation3 + $0x10a] sm:$0xff]
      %v2948 = vld [vmem:[#allocation3 + $0x112] sm:$0xff]
      %v2949 = vld [vmem:[#allocation3 + $0x122] sm:$0xff]
      %v2950 = vld [vmem:[#allocation3 + $0x12a] sm:$0xff]
      %v2951 = vld [vmem:[#allocation3 + $0x13a] sm:$0xff]
      %v2952 = vld [vmem:[#allocation3 + $0x142] sm:$0xff]
      %v2953 = vld [vmem:[#allocation3 + $0x152] sm:$0xff]
      %v2954 = vld [vmem:[#allocation3 + $0x15a] sm:$0xff]
      %v2955 = vld [vmem:[#allocation3 + $0x16a] sm:$0xff]
      %v2956 = vld [vmem:[#allocation3 + $0x172] sm:$0xff]
      %2957 = vst [vmem:[#allocation4 + $0x10] sm:$0xff] %v2925
      %2958 = vst [vmem:[#allocation4 + $0x58] sm:$0xff] %v2926
      %2959 = vst [vmem:[#allocation4 + $0xa0] sm:$0xff] %v2927
      %2960 = vst [vmem:[#allocation4 + $0xe8] sm:$0xff] %v2928
      %2961 = vst [vmem:[#allocation4 + $0x130] sm:$0xff] %v2929
      %2962 = vst [vmem:[#allocation4 + $0x178] sm:$0xff] %v2930
      %2963 = vst [vmem:[#allocation4 + $0x1c0] sm:$0xff] %v2931
      %2964 = vst [vmem:[#allocation4 + $0x208] sm:$0xff] %v2932
      %2965 = vst [vmem:[#allocation4 + $0x250] sm:$0xff] %v2933
      %2966 = vst [vmem:[#allocation4 + $0x298] sm:$0xff] %v2934
      %2967 = vst [vmem:[#allocation4 + $0x2e0] sm:$0xff] %v2935
      %2968 = vst [vmem:[#allocation4 + $0x328] sm:$0xff] %v2936
      %2969 = vst [vmem:[#allocation4 + $0x370] sm:$0xff] %v2937
      %2970 = vst [vmem:[#allocation4 + $0x3b8] sm:$0xff] %v2938
      %2971 = vst [vmem:[#allocation4 + $0x400] sm:$0xff] %v2939
      %2972 = vst [vmem:[#allocation4 + $0x448] sm:$0xff] %v2940
      %2973 = vst [vmem:[#allocation4 + $0x490] sm:$0xff] %v2941
      %2974 = vst [vmem:[#allocation4 + $0x4d8] sm:$0xff] %v2942
      %2975 = vst [vmem:[#allocation4 + $0x520] sm:$0xff] %v2943
      %2976 = vst [vmem:[#allocation4 + $0x568] sm:$0xff] %v2944
      %2977 = vst [vmem:[#allocation4 + $0x5b0] sm:$0xff] %v2945
      %2978 = vst [vmem:[#allocation4 + $0x5f8] sm:$0xff] %v2946
      %2979 = vst [vmem:[#allocation4 + $0x640] sm:$0xff] %v2947
      %2980 = vst [vmem:[#allocation4 + $0x688] sm:$0xff] %v2948
      %2981 = vst [vmem:[#allocation4 + $0x6d0] sm:$0xff] %v2949
      %2982 = vst [vmem:[#allocation4 + $0x718] sm:$0xff] %v2950
      %2983 = vst [vmem:[#allocation4 + $0x760] sm:$0xff] %v2951
      %2984 = vst [vmem:[#allocation4 + $0x7a8] sm:$0xff] %v2952
      %2985 = vst [vmem:[#allocation4 + $0x7f0] sm:$0xff] %v2953
      %2986 = vst [vmem:[#allocation4 + $0x838] sm:$0xff] %v2954
      %2987 = vst [vmem:[#allocation4 + $0x880] sm:$0xff] %v2955
      %2988 = vst [vmem:[#allocation4 + $0x8c8] sm:$0xff] %v2956
      %v2989 = vld [vmem:[%s2764] sm:$0xff]
      %v2990 = vld [vmem:[%s2764 + $0x8] sm:$0xff]
      %v2991 = vld [vmem:[%s2764 + $0x18] sm:$0xff]
      %v2992 = vld [vmem:[%s2764 + $0x20] sm:$0xff]
      %v2993 = vld [vmem:[%s2764 + $0x30] sm:$0xff]
      %v2994 = vld [vmem:[%s2764 + $0x38] sm:$0xff]
      %v2995 = vld [vmem:[%s2764 + $0x48] sm:$0xff]
      %v2996 = vld [vmem:[%s2764 + $0x50] sm:$0xff]
      %v2997 = vld [vmem:[%s2764 + $0x60] sm:$0xff]
      %v2998 = vld [vmem:[%s2764 + $0x68] sm:$0xff]
      %v2999 = vld [vmem:[%s2764 + $0x78] sm:$0xff]
      %v3000 = vld [vmem:[%s2764 + $0x80] sm:$0xff]
      %v3001 = vld [vmem:[%s2764 + $0x90] sm:$0xff]
      %v3002 = vld [vmem:[%s2764 + $0x98] sm:$0xff]
      %v3003 = vld [vmem:[%s2764 + $0xa8] sm:$0xff]
      %v3004 = vld [vmem:[%s2764 + $0xb0] sm:$0xff]
      %v3005 = vld [vmem:[%s2764 + $0xc0] sm:$0xff]
      %v3006 = vld [vmem:[%s2764 + $0xc8] sm:$0xff]
      %v3007 = vld [vmem:[%s2764 + $0xd8] sm:$0xff]
      %v3008 = vld [vmem:[%s2764 + $0xe0] sm:$0xff]
      %v3009 = vld [vmem:[%s2764 + $0xf0] sm:$0xff]
      %v3010 = vld [vmem:[%s2764 + $0xf8] sm:$0xff]
      %v3011 = vld [vmem:[%s2764 + $0x108] sm:$0xff]
      %v3012 = vld [vmem:[%s2764 + $0x110] sm:$0xff]
      %v3013 = vld [vmem:[%s2764 + $0x120] sm:$0xff]
      %v3014 = vld [vmem:[%s2764 + $0x128] sm:$0xff]
      %v3015 = vld [vmem:[%s2764 + $0x138] sm:$0xff]
      %v3016 = vld [vmem:[%s2764 + $0x140] sm:$0xff]
      %v3017 = vld [vmem:[%s2764 + $0x150] sm:$0xff]
      %v3018 = vld [vmem:[%s2764 + $0x158] sm:$0xff]
      %v3019 = vld [vmem:[%s2764 + $0x168] sm:$0xff]
      %v3020 = vld [vmem:[%s2764 + $0x170] sm:$0xff]
      %3021 = vst [vmem:[#allocation4 + $0x18] sm:$0xff] %v2989
      %3022 = vst [vmem:[#allocation4 + $0x60] sm:$0xff] %v2990
      %3023 = vst [vmem:[#allocation4 + $0xa8] sm:$0xff] %v2991
      %3024 = vst [vmem:[#allocation4 + $0xf0] sm:$0xff] %v2992
      %3025 = vst [vmem:[#allocation4 + $0x138] sm:$0xff] %v2993
      %3026 = vst [vmem:[#allocation4 + $0x180] sm:$0xff] %v2994
      %3027 = vst [vmem:[#allocation4 + $0x1c8] sm:$0xff] %v2995
      %3028 = vst [vmem:[#allocation4 + $0x210] sm:$0xff] %v2996
      %3029 = vst [vmem:[#allocation4 + $0x258] sm:$0xff] %v2997
      %3030 = vst [vmem:[#allocation4 + $0x2a0] sm:$0xff] %v2998
      %3031 = vst [vmem:[#allocation4 + $0x2e8] sm:$0xff] %v2999
      %3032 = vst [vmem:[#allocation4 + $0x330] sm:$0xff] %v3000
      %3033 = vst [vmem:[#allocation4 + $0x378] sm:$0xff] %v3001
      %3034 = vst [vmem:[#allocation4 + $0x3c0] sm:$0xff] %v3002
      %3035 = vst [vmem:[#allocation4 + $0x408] sm:$0xff] %v3003
      %3036 = vst [vmem:[#allocation4 + $0x450] sm:$0xff] %v3004
      %3037 = vst [vmem:[#allocation4 + $0x498] sm:$0xff] %v3005
      %3038 = vst [vmem:[#allocation4 + $0x4e0] sm:$0xff] %v3006
      %3039 = vst [vmem:[#allocation4 + $0x528] sm:$0xff] %v3007
      %3040 = vst [vmem:[#allocation4 + $0x570] sm:$0xff] %v3008
      %3041 = vst [vmem:[#allocation4 + $0x5b8] sm:$0xff] %v3009
      %3042 = vst [vmem:[#allocation4 + $0x600] sm:$0xff] %v3010
      %3043 = vst [vmem:[#allocation4 + $0x648] sm:$0xff] %v3011
      %3044 = vst [vmem:[#allocation4 + $0x690] sm:$0xff] %v3012
      %3045 = vst [vmem:[#allocation4 + $0x6d8] sm:$0xff] %v3013
      %3046 = vst [vmem:[#allocation4 + $0x720] sm:$0xff] %v3014
      %3047 = vst [vmem:[#allocation4 + $0x768] sm:$0xff] %v3015
      %3048 = vst [vmem:[#allocation4 + $0x7b0] sm:$0xff] %v3016
      %3049 = vst [vmem:[#allocation4 + $0x7f8] sm:$0xff] %v3017
      %3050 = vst [vmem:[#allocation4 + $0x840] sm:$0xff] %v3018
      %3051 = vst [vmem:[#allocation4 + $0x888] sm:$0xff] %v3019
      %3052 = vst [vmem:[#allocation4 + $0x8d0] sm:$0xff] %v3020
      %v3053 = vld [vmem:[%s2764 + $0x1] sm:$0xff]
      %v3054 = vld [vmem:[%s2764 + $0x9] sm:$0xff]
      %v3055 = vld [vmem:[%s2764 + $0x19] sm:$0xff]
      %v3056 = vld [vmem:[%s2764 + $0x21] sm:$0xff]
      %v3057 = vld [vmem:[%s2764 + $0x31] sm:$0xff]
      %v3058 = vld [vmem:[%s2764 + $0x39] sm:$0xff]
      %v3059 = vld [vmem:[%s2764 + $0x49] sm:$0xff]
      %v3060 = vld [vmem:[%s2764 + $0x51] sm:$0xff]
      %v3061 = vld [vmem:[%s2764 + $0x61] sm:$0xff]
      %v3062 = vld [vmem:[%s2764 + $0x69] sm:$0xff]
      %v3063 = vld [vmem:[%s2764 + $0x79] sm:$0xff]
      %v3064 = vld [vmem:[%s2764 + $0x81] sm:$0xff]
      %v3065 = vld [vmem:[%s2764 + $0x91] sm:$0xff]
      %v3066 = vld [vmem:[%s2764 + $0x99] sm:$0xff]
      %v3067 = vld [vmem:[%s2764 + $0xa9] sm:$0xff]
      %v3068 = vld [vmem:[%s2764 + $0xb1] sm:$0xff]
      %v3069 = vld [vmem:[%s2764 + $0xc1] sm:$0xff]
      %v3070 = vld [vmem:[%s2764 + $0xc9] sm:$0xff]
      %v3071 = vld [vmem:[%s2764 + $0xd9] sm:$0xff]
      %v3072 = vld [vmem:[%s2764 + $0xe1] sm:$0xff]
      %v3073 = vld [vmem:[%s2764 + $0xf1] sm:$0xff]
      %v3074 = vld [vmem:[%s2764 + $0xf9] sm:$0xff]
      %v3075 = vld [vmem:[%s2764 + $0x109] sm:$0xff]
      %v3076 = vld [vmem:[%s2764 + $0x111] sm:$0xff]
      %v3077 = vld [vmem:[%s2764 + $0x121] sm:$0xff]
      %v3078 = vld [vmem:[%s2764 + $0x129] sm:$0xff]
      %v3079 = vld [vmem:[%s2764 + $0x139] sm:$0xff]
      %v3080 = vld [vmem:[%s2764 + $0x141] sm:$0xff]
      %v3081 = vld [vmem:[%s2764 + $0x151] sm:$0xff]
      %v3082 = vld [vmem:[%s2764 + $0x159] sm:$0xff]
      %v3083 = vld [vmem:[%s2764 + $0x169] sm:$0xff]
      %v3084 = vld [vmem:[%s2764 + $0x171] sm:$0xff]
      %3085 = vst [vmem:[#allocation4 + $0x20] sm:$0xff] %v3053
      %3086 = vst [vmem:[#allocation4 + $0x68] sm:$0xff] %v3054
      %3087 = vst [vmem:[#allocation4 + $0xb0] sm:$0xff] %v3055
      %3088 = vst [vmem:[#allocation4 + $0xf8] sm:$0xff] %v3056
      %3089 = vst [vmem:[#allocation4 + $0x140] sm:$0xff] %v3057
      %3090 = vst [vmem:[#allocation4 + $0x188] sm:$0xff] %v3058
      %3091 = vst [vmem:[#allocation4 + $0x1d0] sm:$0xff] %v3059
      %3092 = vst [vmem:[#allocation4 + $0x218] sm:$0xff] %v3060
      %3093 = vst [vmem:[#allocation4 + $0x260] sm:$0xff] %v3061
      %3094 = vst [vmem:[#allocation4 + $0x2a8] sm:$0xff] %v3062
      %3095 = vst [vmem:[#allocation4 + $0x2f0] sm:$0xff] %v3063
      %3096 = vst [vmem:[#allocation4 + $0x338] sm:$0xff] %v3064
      %3097 = vst [vmem:[#allocation4 + $0x380] sm:$0xff] %v3065
      %3098 = vst [vmem:[#allocation4 + $0x3c8] sm:$0xff] %v3066
      %3099 = vst [vmem:[#allocation4 + $0x410] sm:$0xff] %v3067
      %3100 = vst [vmem:[#allocation4 + $0x458] sm:$0xff] %v3068
      %3101 = vst [vmem:[#allocation4 + $0x4a0] sm:$0xff] %v3069
      %3102 = vst [vmem:[#allocation4 + $0x4e8] sm:$0xff] %v3070
      %3103 = vst [vmem:[#allocation4 + $0x530] sm:$0xff] %v3071
      %3104 = vst [vmem:[#allocation4 + $0x578] sm:$0xff] %v3072
      %3105 = vst [vmem:[#allocation4 + $0x5c0] sm:$0xff] %v3073
      %3106 = vst [vmem:[#allocation4 + $0x608] sm:$0xff] %v3074
      %3107 = vst [vmem:[#allocation4 + $0x650] sm:$0xff] %v3075
      %3108 = vst [vmem:[#allocation4 + $0x698] sm:$0xff] %v3076
      %3109 = vst [vmem:[#allocation4 + $0x6e0] sm:$0xff] %v3077
      %3110 = vst [vmem:[#allocation4 + $0x728] sm:$0xff] %v3078
      %3111 = vst [vmem:[#allocation4 + $0x770] sm:$0xff] %v3079
      %3112 = vst [vmem:[#allocation4 + $0x7b8] sm:$0xff] %v3080
      %3113 = vst [vmem:[#allocation4 + $0x800] sm:$0xff] %v3081
      %3114 = vst [vmem:[#allocation4 + $0x848] sm:$0xff] %v3082
      %3115 = vst [vmem:[#allocation4 + $0x890] sm:$0xff] %v3083
      %3116 = vst [vmem:[#allocation4 + $0x8d8] sm:$0xff] %v3084
      %v3117 = vld [vmem:[%s2764 + $0x2] sm:$0xff]
      %v3118 = vld [vmem:[%s2764 + $0xa] sm:$0xff]
      %v3119 = vld [vmem:[%s2764 + $0x1a] sm:$0xff]
      %v3120 = vld [vmem:[%s2764 + $0x22] sm:$0xff]
      %v3121 = vld [vmem:[%s2764 + $0x32] sm:$0xff]
      %v3122 = vld [vmem:[%s2764 + $0x3a] sm:$0xff]
      %v3123 = vld [vmem:[%s2764 + $0x4a] sm:$0xff]
      %v3124 = vld [vmem:[%s2764 + $0x52] sm:$0xff]
      %v3125 = vld [vmem:[%s2764 + $0x62] sm:$0xff]
      %v3126 = vld [vmem:[%s2764 + $0x6a] sm:$0xff]
      %v3127 = vld [vmem:[%s2764 + $0x7a] sm:$0xff]
      %v3128 = vld [vmem:[%s2764 + $0x82] sm:$0xff]
      %v3129 = vld [vmem:[%s2764 + $0x92] sm:$0xff]
      %v3130 = vld [vmem:[%s2764 + $0x9a] sm:$0xff]
      %v3131 = vld [vmem:[%s2764 + $0xaa] sm:$0xff]
      %v3132 = vld [vmem:[%s2764 + $0xb2] sm:$0xff]
      %v3133 = vld [vmem:[%s2764 + $0xc2] sm:$0xff]
      %v3134 = vld [vmem:[%s2764 + $0xca] sm:$0xff]
      %v3135 = vld [vmem:[%s2764 + $0xda] sm:$0xff]
      %v3136 = vld [vmem:[%s2764 + $0xe2] sm:$0xff]
      %v3137 = vld [vmem:[%s2764 + $0xf2] sm:$0xff]
      %v3138 = vld [vmem:[%s2764 + $0xfa] sm:$0xff]
      %v3139 = vld [vmem:[%s2764 + $0x10a] sm:$0xff]
      %v3140 = vld [vmem:[%s2764 + $0x112] sm:$0xff]
      %v3141 = vld [vmem:[%s2764 + $0x122] sm:$0xff]
      %v3142 = vld [vmem:[%s2764 + $0x12a] sm:$0xff]
      %v3143 = vld [vmem:[%s2764 + $0x13a] sm:$0xff]
      %v3144 = vld [vmem:[%s2764 + $0x142] sm:$0xff]
      %v3145 = vld [vmem:[%s2764 + $0x152] sm:$0xff]
      %v3146 = vld [vmem:[%s2764 + $0x15a] sm:$0xff]
      %v3147 = vld [vmem:[%s2764 + $0x16a] sm:$0xff]
      %v3148 = vld [vmem:[%s2764 + $0x172] sm:$0xff]
      %3149 = vst [vmem:[#allocation4 + $0x28] sm:$0xff] %v3117
      %3150 = vst [vmem:[#allocation4 + $0x70] sm:$0xff] %v3118
      %3151 = vst [vmem:[#allocation4 + $0xb8] sm:$0xff] %v3119
      %3152 = vst [vmem:[#allocation4 + $0x100] sm:$0xff] %v3120
      %3153 = vst [vmem:[#allocation4 + $0x148] sm:$0xff] %v3121
      %3154 = vst [vmem:[#allocation4 + $0x190] sm:$0xff] %v3122
      %3155 = vst [vmem:[#allocation4 + $0x1d8] sm:$0xff] %v3123
      %3156 = vst [vmem:[#allocation4 + $0x220] sm:$0xff] %v3124
      %3157 = vst [vmem:[#allocation4 + $0x268] sm:$0xff] %v3125
      %3158 = vst [vmem:[#allocation4 + $0x2b0] sm:$0xff] %v3126
      %3159 = vst [vmem:[#allocation4 + $0x2f8] sm:$0xff] %v3127
      %3160 = vst [vmem:[#allocation4 + $0x340] sm:$0xff] %v3128
      %3161 = vst [vmem:[#allocation4 + $0x388] sm:$0xff] %v3129
      %3162 = vst [vmem:[#allocation4 + $0x3d0] sm:$0xff] %v3130
      %3163 = vst [vmem:[#allocation4 + $0x418] sm:$0xff] %v3131
      %3164 = vst [vmem:[#allocation4 + $0x460] sm:$0xff] %v3132
      %3165 = vst [vmem:[#allocation4 + $0x4a8] sm:$0xff] %v3133
      %3166 = vst [vmem:[#allocation4 + $0x4f0] sm:$0xff] %v3134
      %3167 = vst [vmem:[#allocation4 + $0x538] sm:$0xff] %v3135
      %3168 = vst [vmem:[#allocation4 + $0x580] sm:$0xff] %v3136
      %3169 = vst [vmem:[#allocation4 + $0x5c8] sm:$0xff] %v3137
      %3170 = vst [vmem:[#allocation4 + $0x610] sm:$0xff] %v3138
      %3171 = vst [vmem:[#allocation4 + $0x658] sm:$0xff] %v3139
      %3172 = vst [vmem:[#allocation4 + $0x6a0] sm:$0xff] %v3140
      %3173 = vst [vmem:[#allocation4 + $0x6e8] sm:$0xff] %v3141
      %3174 = vst [vmem:[#allocation4 + $0x730] sm:$0xff] %v3142
      %3175 = vst [vmem:[#allocation4 + $0x778] sm:$0xff] %v3143
      %3176 = vst [vmem:[#allocation4 + $0x7c0] sm:$0xff] %v3144
      %3177 = vst [vmem:[#allocation4 + $0x808] sm:$0xff] %v3145
      %3178 = vst [vmem:[#allocation4 + $0x850] sm:$0xff] %v3146
      %3179 = vst [vmem:[#allocation4 + $0x898] sm:$0xff] %v3147
      %3180 = vst [vmem:[#allocation4 + $0x8e0] sm:$0xff] %v3148
      %s3181 = scalar_lea.vmem [#allocation3], 48
      %v3182 = vld [vmem:[%s3181] sm:$0xff]
      %v3183 = vld [vmem:[%s3181 + $0x8] sm:$0xff]
      %v3184 = vld [vmem:[%s3181 + $0x18] sm:$0xff]
      %v3185 = vld [vmem:[%s3181 + $0x20] sm:$0xff]
      %v3186 = vld [vmem:[%s3181 + $0x30] sm:$0xff]
      %v3187 = vld [vmem:[%s3181 + $0x38] sm:$0xff]
      %v3188 = vld [vmem:[%s3181 + $0x48] sm:$0xff]
      %v3189 = vld [vmem:[%s3181 + $0x50] sm:$0xff]
      %v3190 = vld [vmem:[%s3181 + $0x60] sm:$0xff]
      %v3191 = vld [vmem:[%s3181 + $0x68] sm:$0xff]
      %v3192 = vld [vmem:[%s3181 + $0x78] sm:$0xff]
      %v3193 = vld [vmem:[%s3181 + $0x80] sm:$0xff]
      %v3194 = vld [vmem:[%s3181 + $0x90] sm:$0xff]
      %v3195 = vld [vmem:[%s3181 + $0x98] sm:$0xff]
      %v3196 = vld [vmem:[%s3181 + $0xa8] sm:$0xff]
      %v3197 = vld [vmem:[%s3181 + $0xb0] sm:$0xff]
      %v3198 = vld [vmem:[%s3181 + $0xc0] sm:$0xff]
      %v3199 = vld [vmem:[%s3181 + $0xc8] sm:$0xff]
      %v3200 = vld [vmem:[%s3181 + $0xd8] sm:$0xff]
      %v3201 = vld [vmem:[%s3181 + $0xe0] sm:$0xff]
      %v3202 = vld [vmem:[%s3181 + $0xf0] sm:$0xff]
      %v3203 = vld [vmem:[%s3181 + $0xf8] sm:$0xff]
      %v3204 = vld [vmem:[%s3181 + $0x108] sm:$0xff]
      %v3205 = vld [vmem:[%s3181 + $0x110] sm:$0xff]
      %v3206 = vld [vmem:[%s3181 + $0x120] sm:$0xff]
      %v3207 = vld [vmem:[%s3181 + $0x128] sm:$0xff]
      %v3208 = vld [vmem:[%s3181 + $0x138] sm:$0xff]
      %v3209 = vld [vmem:[%s3181 + $0x140] sm:$0xff]
      %v3210 = vld [vmem:[%s3181 + $0x150] sm:$0xff]
      %v3211 = vld [vmem:[%s3181 + $0x158] sm:$0xff]
      %v3212 = vld [vmem:[%s3181 + $0x168] sm:$0xff]
      %v3213 = vld [vmem:[%s3181 + $0x170] sm:$0xff]
      %3214 = vst [vmem:[#allocation4 + $0x30] sm:$0xff] %v3182
      %3215 = vst [vmem:[#allocation4 + $0x78] sm:$0xff] %v3183
      %3216 = vst [vmem:[#allocation4 + $0xc0] sm:$0xff] %v3184
      %3217 = vst [vmem:[#allocation4 + $0x108] sm:$0xff] %v3185
      %3218 = vst [vmem:[#allocation4 + $0x150] sm:$0xff] %v3186
      %3219 = vst [vmem:[#allocation4 + $0x198] sm:$0xff] %v3187
      %3220 = vst [vmem:[#allocation4 + $0x1e0] sm:$0xff] %v3188
      %3221 = vst [vmem:[#allocation4 + $0x228] sm:$0xff] %v3189
      %3222 = vst [vmem:[#allocation4 + $0x270] sm:$0xff] %v3190
      %3223 = vst [vmem:[#allocation4 + $0x2b8] sm:$0xff] %v3191
      %3224 = vst [vmem:[#allocation4 + $0x300] sm:$0xff] %v3192
      %3225 = vst [vmem:[#allocation4 + $0x348] sm:$0xff] %v3193
      %3226 = vst [vmem:[#allocation4 + $0x390] sm:$0xff] %v3194
      %3227 = vst [vmem:[#allocation4 + $0x3d8] sm:$0xff] %v3195
      %3228 = vst [vmem:[#allocation4 + $0x420] sm:$0xff] %v3196
      %3229 = vst [vmem:[#allocation4 + $0x468] sm:$0xff] %v3197
      %3230 = vst [vmem:[#allocation4 + $0x4b0] sm:$0xff] %v3198
      %3231 = vst [vmem:[#allocation4 + $0x4f8] sm:$0xff] %v3199
      %3232 = vst [vmem:[#allocation4 + $0x540] sm:$0xff] %v3200
      %3233 = vst [vmem:[#allocation4 + $0x588] sm:$0xff] %v3201
      %3234 = vst [vmem:[#allocation4 + $0x5d0] sm:$0xff] %v3202
      %3235 = vst [vmem:[#allocation4 + $0x618] sm:$0xff] %v3203
      %3236 = vst [vmem:[#allocation4 + $0x660] sm:$0xff] %v3204
      %3237 = vst [vmem:[#allocation4 + $0x6a8] sm:$0xff] %v3205
      %3238 = vst [vmem:[#allocation4 + $0x6f0] sm:$0xff] %v3206
      %3239 = vst [vmem:[#allocation4 + $0x738] sm:$0xff] %v3207
      %3240 = vst [vmem:[#allocation4 + $0x780] sm:$0xff] %v3208
      %3241 = vst [vmem:[#allocation4 + $0x7c8] sm:$0xff] %v3209
      %3242 = vst [vmem:[#allocation4 + $0x810] sm:$0xff] %v3210
      %3243 = vst [vmem:[#allocation4 + $0x858] sm:$0xff] %v3211
      %3244 = vst [vmem:[#allocation4 + $0x8a0] sm:$0xff] %v3212
      %3245 = vst [vmem:[#allocation4 + $0x8e8] sm:$0xff] %v3213
      %v3246 = vld [vmem:[%s3181 + $0x1] sm:$0xff]
      %v3247 = vld [vmem:[%s3181 + $0x9] sm:$0xff]
      %v3248 = vld [vmem:[%s3181 + $0x19] sm:$0xff]
      %v3249 = vld [vmem:[%s3181 + $0x21] sm:$0xff]
      %v3250 = vld [vmem:[%s3181 + $0x31] sm:$0xff]
      %v3251 = vld [vmem:[%s3181 + $0x39] sm:$0xff]
      %v3252 = vld [vmem:[%s3181 + $0x49] sm:$0xff]
      %v3253 = vld [vmem:[%s3181 + $0x51] sm:$0xff]
      %v3254 = vld [vmem:[%s3181 + $0x61] sm:$0xff]
      %v3255 = vld [vmem:[%s3181 + $0x69] sm:$0xff]
      %v3256 = vld [vmem:[%s3181 + $0x79] sm:$0xff]
      %v3257 = vld [vmem:[%s3181 + $0x81] sm:$0xff]
      %v3258 = vld [vmem:[%s3181 + $0x91] sm:$0xff]
      %v3259 = vld [vmem:[%s3181 + $0x99] sm:$0xff]
      %v3260 = vld [vmem:[%s3181 + $0xa9] sm:$0xff]
      %v3261 = vld [vmem:[%s3181 + $0xb1] sm:$0xff]
      %v3262 = vld [vmem:[%s3181 + $0xc1] sm:$0xff]
      %v3263 = vld [vmem:[%s3181 + $0xc9] sm:$0xff]
      %v3264 = vld [vmem:[%s3181 + $0xd9] sm:$0xff]
      %v3265 = vld [vmem:[%s3181 + $0xe1] sm:$0xff]
      %v3266 = vld [vmem:[%s3181 + $0xf1] sm:$0xff]
      %v3267 = vld [vmem:[%s3181 + $0xf9] sm:$0xff]
      %v3268 = vld [vmem:[%s3181 + $0x109] sm:$0xff]
      %v3269 = vld [vmem:[%s3181 + $0x111] sm:$0xff]
      %v3270 = vld [vmem:[%s3181 + $0x121] sm:$0xff]
      %v3271 = vld [vmem:[%s3181 + $0x129] sm:$0xff]
      %v3272 = vld [vmem:[%s3181 + $0x139] sm:$0xff]
      %v3273 = vld [vmem:[%s3181 + $0x141] sm:$0xff]
      %v3274 = vld [vmem:[%s3181 + $0x151] sm:$0xff]
      %v3275 = vld [vmem:[%s3181 + $0x159] sm:$0xff]
      %v3276 = vld [vmem:[%s3181 + $0x169] sm:$0xff]
      %v3277 = vld [vmem:[%s3181 + $0x171] sm:$0xff]
      %3278 = vst [vmem:[#allocation4 + $0x38] sm:$0xff] %v3246
      %3279 = vst [vmem:[#allocation4 + $0x80] sm:$0xff] %v3247
      %3280 = vst [vmem:[#allocation4 + $0xc8] sm:$0xff] %v3248
      %3281 = vst [vmem:[#allocation4 + $0x110] sm:$0xff] %v3249
      %3282 = vst [vmem:[#allocation4 + $0x158] sm:$0xff] %v3250
      %3283 = vst [vmem:[#allocation4 + $0x1a0] sm:$0xff] %v3251
      %3284 = vst [vmem:[#allocation4 + $0x1e8] sm:$0xff] %v3252
      %3285 = vst [vmem:[#allocation4 + $0x230] sm:$0xff] %v3253
      %3286 = vst [vmem:[#allocation4 + $0x278] sm:$0xff] %v3254
      %3287 = vst [vmem:[#allocation4 + $0x2c0] sm:$0xff] %v3255
      %3288 = vst [vmem:[#allocation4 + $0x308] sm:$0xff] %v3256
      %3289 = vst [vmem:[#allocation4 + $0x350] sm:$0xff] %v3257
      %3290 = vst [vmem:[#allocation4 + $0x398] sm:$0xff] %v3258
      %3291 = vst [vmem:[#allocation4 + $0x3e0] sm:$0xff] %v3259
      %3292 = vst [vmem:[#allocation4 + $0x428] sm:$0xff] %v3260
      %3293 = vst [vmem:[#allocation4 + $0x470] sm:$0xff] %v3261
      %3294 = vst [vmem:[#allocation4 + $0x4b8] sm:$0xff] %v3262
      %3295 = vst [vmem:[#allocation4 + $0x500] sm:$0xff] %v3263
      %3296 = vst [vmem:[#allocation4 + $0x548] sm:$0xff] %v3264
      %3297 = vst [vmem:[#allocation4 + $0x590] sm:$0xff] %v3265
      %3298 = vst [vmem:[#allocation4 + $0x5d8] sm:$0xff] %v3266
      %3299 = vst [vmem:[#allocation4 + $0x620] sm:$0xff] %v3267
      %3300 = vst [vmem:[#allocation4 + $0x668] sm:$0xff] %v3268
      %3301 = vst [vmem:[#allocation4 + $0x6b0] sm:$0xff] %v3269
      %3302 = vst [vmem:[#allocation4 + $0x6f8] sm:$0xff] %v3270
      %3303 = vst [vmem:[#allocation4 + $0x740] sm:$0xff] %v3271
      %3304 = vst [vmem:[#allocation4 + $0x788] sm:$0xff] %v3272
      %3305 = vst [vmem:[#allocation4 + $0x7d0] sm:$0xff] %v3273
      %3306 = vst [vmem:[#allocation4 + $0x818] sm:$0xff] %v3274
      %3307 = vst [vmem:[#allocation4 + $0x860] sm:$0xff] %v3275
      %3308 = vst [vmem:[#allocation4 + $0x8a8] sm:$0xff] %v3276
      %3309 = vst [vmem:[#allocation4 + $0x8f0] sm:$0xff] %v3277
      %v3310 = vld [vmem:[%s3181 + $0x2] sm:$0xff]
      %v3311 = vld [vmem:[%s3181 + $0xa] sm:$0xff]
      %v3312 = vld [vmem:[%s3181 + $0x1a] sm:$0xff]
      %v3313 = vld [vmem:[%s3181 + $0x22] sm:$0xff]
      %v3314 = vld [vmem:[%s3181 + $0x32] sm:$0xff]
      %v3315 = vld [vmem:[%s3181 + $0x3a] sm:$0xff]
      %v3316 = vld [vmem:[%s3181 + $0x4a] sm:$0xff]
      %v3317 = vld [vmem:[%s3181 + $0x52] sm:$0xff]
      %v3318 = vld [vmem:[%s3181 + $0x62] sm:$0xff]
      %v3319 = vld [vmem:[%s3181 + $0x6a] sm:$0xff]
      %v3320 = vld [vmem:[%s3181 + $0x7a] sm:$0xff]
      %v3321 = vld [vmem:[%s3181 + $0x82] sm:$0xff]
      %v3322 = vld [vmem:[%s3181 + $0x92] sm:$0xff]
      %v3323 = vld [vmem:[%s3181 + $0x9a] sm:$0xff]
      %v3324 = vld [vmem:[%s3181 + $0xaa] sm:$0xff]
      %v3325 = vld [vmem:[%s3181 + $0xb2] sm:$0xff]
      %v3326 = vld [vmem:[%s3181 + $0xc2] sm:$0xff]
      %v3327 = vld [vmem:[%s3181 + $0xca] sm:$0xff]
      %v3328 = vld [vmem:[%s3181 + $0xda] sm:$0xff]
      %v3329 = vld [vmem:[%s3181 + $0xe2] sm:$0xff]
      %v3330 = vld [vmem:[%s3181 + $0xf2] sm:$0xff]
      %v3331 = vld [vmem:[%s3181 + $0xfa] sm:$0xff]
      %v3332 = vld [vmem:[%s3181 + $0x10a] sm:$0xff]
      %v3333 = vld [vmem:[%s3181 + $0x112] sm:$0xff]
      %v3334 = vld [vmem:[%s3181 + $0x122] sm:$0xff]
      %v3335 = vld [vmem:[%s3181 + $0x12a] sm:$0xff]
      %v3336 = vld [vmem:[%s3181 + $0x13a] sm:$0xff]
      %v3337 = vld [vmem:[%s3181 + $0x142] sm:$0xff]
      %v3338 = vld [vmem:[%s3181 + $0x152] sm:$0xff]
      %v3339 = vld [vmem:[%s3181 + $0x15a] sm:$0xff]
      %v3340 = vld [vmem:[%s3181 + $0x16a] sm:$0xff]
      %v3341 = vld [vmem:[%s3181 + $0x172] sm:$0xff]
      %3342 = vst [vmem:[#allocation4 + $0x40] sm:$0xff] %v3310
      %3343 = vst [vmem:[#allocation4 + $0x88] sm:$0xff] %v3311
      %3344 = vst [vmem:[#allocation4 + $0xd0] sm:$0xff] %v3312
      %3345 = vst [vmem:[#allocation4 + $0x118] sm:$0xff] %v3313
      %3346 = vst [vmem:[#allocation4 + $0x160] sm:$0xff] %v3314
      %3347 = vst [vmem:[#allocation4 + $0x1a8] sm:$0xff] %v3315
      %3348 = vst [vmem:[#allocation4 + $0x1f0] sm:$0xff] %v3316
      %3349 = vst [vmem:[#allocation4 + $0x238] sm:$0xff] %v3317
      %3350 = vst [vmem:[#allocation4 + $0x280] sm:$0xff] %v3318
      %3351 = vst [vmem:[#allocation4 + $0x2c8] sm:$0xff] %v3319
      %3352 = vst [vmem:[#allocation4 + $0x310] sm:$0xff] %v3320
      %3353 = vst [vmem:[#allocation4 + $0x358] sm:$0xff] %v3321
      %3354 = vst [vmem:[#allocation4 + $0x3a0] sm:$0xff] %v3322
      %3355 = vst [vmem:[#allocation4 + $0x3e8] sm:$0xff] %v3323
      %3356 = vst [vmem:[#allocation4 + $0x430] sm:$0xff] %v3324
      %3357 = vst [vmem:[#allocation4 + $0x478] sm:$0xff] %v3325
      %3358 = vst [vmem:[#allocation4 + $0x4c0] sm:$0xff] %v3326
      %3359 = vst [vmem:[#allocation4 + $0x508] sm:$0xff] %v3327
      %3360 = vst [vmem:[#allocation4 + $0x550] sm:$0xff] %v3328
      %3361 = vst [vmem:[#allocation4 + $0x598] sm:$0xff] %v3329
      %3362 = vst [vmem:[#allocation4 + $0x5e0] sm:$0xff] %v3330
      %3363 = vst [vmem:[#allocation4 + $0x628] sm:$0xff] %v3331
      %3364 = vst [vmem:[#allocation4 + $0x670] sm:$0xff] %v3332
      %3365 = vst [vmem:[#allocation4 + $0x6b8] sm:$0xff] %v3333
      %3366 = vst [vmem:[#allocation4 + $0x700] sm:$0xff] %v3334
      %3367 = vst [vmem:[#allocation4 + $0x748] sm:$0xff] %v3335
      %3368 = vst [vmem:[#allocation4 + $0x790] sm:$0xff] %v3336
      %3369 = vst [vmem:[#allocation4 + $0x7d8] sm:$0xff] %v3337
      %3370 = vst [vmem:[#allocation4 + $0x820] sm:$0xff] %v3338
      %3371 = vst [vmem:[#allocation4 + $0x868] sm:$0xff] %v3339
      %3372 = vst [vmem:[#allocation4 + $0x8b0] sm:$0xff] %v3340
      %3373 = vst [vmem:[#allocation4 + $0x8f8] sm:$0xff] %v3341
      %v3374 = vld [vmem:[#allocation4] sm:$0xff]
      %v3375 = vld [vmem:[#allocation4 + $0x8] sm:$0xff]
      %v3376 = vld [vmem:[#allocation4 + $0x10] sm:$0xff]
      %v3377 = vld [vmem:[#allocation4 + $0x18] sm:$0xff]
      %v3378 = vld [vmem:[#allocation4 + $0x20] sm:$0xff]
      %v3379 = vld [vmem:[#allocation4 + $0x28] sm:$0xff]
      %v3380 = vld [vmem:[#allocation4 + $0x30] sm:$0xff]
      %v3381 = vld [vmem:[#allocation4 + $0x38] sm:$0xff]
      %v3382 = vld [vmem:[#allocation4 + $0x40] sm:$0xff]
      %v3383 = vld [vmem:[#allocation4 + $0x48] sm:$0xff]
      %v3384 = vld [vmem:[#allocation4 + $0x50] sm:$0xff]
      %v3385 = vld [vmem:[#allocation4 + $0x58] sm:$0xff]
      %v3386 = vld [vmem:[#allocation4 + $0x60] sm:$0xff]
      %v3387 = vld [vmem:[#allocation4 + $0x68] sm:$0xff]
      %v3388 = vld [vmem:[#allocation4 + $0x70] sm:$0xff]
      %v3389 = vld [vmem:[#allocation4 + $0x78] sm:$0xff]
      %v3390 = vld [vmem:[#allocation4 + $0x80] sm:$0xff]
      %v3391 = vld [vmem:[#allocation4 + $0x88] sm:$0xff]
      %v3392 = vld [vmem:[#allocation4 + $0x90] sm:$0xff]
      %v3393 = vld [vmem:[#allocation4 + $0x98] sm:$0xff]
      %v3394 = vld [vmem:[#allocation4 + $0xa0] sm:$0xff]
      %v3395 = vld [vmem:[#allocation4 + $0xa8] sm:$0xff]
      %v3396 = vld [vmem:[#allocation4 + $0xb0] sm:$0xff]
      %v3397 = vld [vmem:[#allocation4 + $0xb8] sm:$0xff]
      %v3398 = vld [vmem:[#allocation4 + $0xc0] sm:$0xff]
      %v3399 = vld [vmem:[#allocation4 + $0xc8] sm:$0xff]
      %v3400 = vld [vmem:[#allocation4 + $0xd0] sm:$0xff]
      %v3401 = vld [vmem:[#allocation4 + $0xd8] sm:$0xff]
      %v3402 = vld [vmem:[#allocation4 + $0xe0] sm:$0xff]
      %v3403 = vld [vmem:[#allocation4 + $0xe8] sm:$0xff]
      %v3404 = vld [vmem:[#allocation4 + $0xf0] sm:$0xff]
      %v3405 = vld [vmem:[#allocation4 + $0xf8] sm:$0xff]
      %v3406 = vld [vmem:[#allocation4 + $0x100] sm:$0xff]
      %v3407 = vld [vmem:[#allocation4 + $0x108] sm:$0xff]
      %v3408 = vld [vmem:[#allocation4 + $0x110] sm:$0xff]
      %v3409 = vld [vmem:[#allocation4 + $0x118] sm:$0xff]
      %v3410 = vld [vmem:[#allocation4 + $0x120] sm:$0xff]
      %v3411 = vld [vmem:[#allocation4 + $0x128] sm:$0xff]
      %v3412 = vld [vmem:[#allocation4 + $0x130] sm:$0xff]
      %v3413 = vld [vmem:[#allocation4 + $0x138] sm:$0xff]
      %v3414 = vld [vmem:[#allocation4 + $0x140] sm:$0xff]
      %v3415 = vld [vmem:[#allocation4 + $0x148] sm:$0xff]
      %v3416 = vld [vmem:[#allocation4 + $0x150] sm:$0xff]
      %v3417 = vld [vmem:[#allocation4 + $0x158] sm:$0xff]
      %v3418 = vld [vmem:[#allocation4 + $0x160] sm:$0xff]
      %v3419 = vld [vmem:[#allocation4 + $0x168] sm:$0xff]
      %v3420 = vld [vmem:[#allocation4 + $0x170] sm:$0xff]
      %v3421 = vld [vmem:[#allocation4 + $0x178] sm:$0xff]
      %v3422 = vld [vmem:[#allocation4 + $0x180] sm:$0xff]
      %v3423 = vld [vmem:[#allocation4 + $0x188] sm:$0xff]
      %v3424 = vld [vmem:[#allocation4 + $0x190] sm:$0xff]
      %v3425 = vld [vmem:[#allocation4 + $0x198] sm:$0xff]
      %v3426 = vld [vmem:[#allocation4 + $0x1a0] sm:$0xff]
      %v3427 = vld [vmem:[#allocation4 + $0x1a8] sm:$0xff]
      %v3428 = vld [vmem:[#allocation4 + $0x1b0] sm:$0xff]
      %v3429 = vld [vmem:[#allocation4 + $0x1b8] sm:$0xff]
      %v3430 = vld [vmem:[#allocation4 + $0x1c0] sm:$0xff]
      %v3431 = vld [vmem:[#allocation4 + $0x1c8] sm:$0xff]
      %v3432 = vld [vmem:[#allocation4 + $0x1d0] sm:$0xff]
      %v3433 = vld [vmem:[#allocation4 + $0x1d8] sm:$0xff]
      %v3434 = vld [vmem:[#allocation4 + $0x1e0] sm:$0xff]
      %v3435 = vld [vmem:[#allocation4 + $0x1e8] sm:$0xff]
      %v3436 = vld [vmem:[#allocation4 + $0x1f0] sm:$0xff]
      %v3437 = vld [vmem:[#allocation4 + $0x1f8] sm:$0xff]
      %v3438 = vld [vmem:[#allocation4 + $0x200] sm:$0xff]
      %v3439 = vld [vmem:[#allocation4 + $0x208] sm:$0xff]
      %v3440 = vld [vmem:[#allocation4 + $0x210] sm:$0xff]
      %v3441 = vld [vmem:[#allocation4 + $0x218] sm:$0xff]
      %v3442 = vld [vmem:[#allocation4 + $0x220] sm:$0xff]
      %v3443 = vld [vmem:[#allocation4 + $0x228] sm:$0xff]
      %v3444 = vld [vmem:[#allocation4 + $0x230] sm:$0xff]
      %v3445 = vld [vmem:[#allocation4 + $0x238] sm:$0xff]
      %v3446 = vld [vmem:[#allocation4 + $0x240] sm:$0xff]
      %v3447 = vld [vmem:[#allocation4 + $0x248] sm:$0xff]
      %v3448 = vld [vmem:[#allocation4 + $0x250] sm:$0xff]
      %v3449 = vld [vmem:[#allocation4 + $0x258] sm:$0xff]
      %v3450 = vld [vmem:[#allocation4 + $0x260] sm:$0xff]
      %v3451 = vld [vmem:[#allocation4 + $0x268] sm:$0xff]
      %v3452 = vld [vmem:[#allocation4 + $0x270] sm:$0xff]
      %v3453 = vld [vmem:[#allocation4 + $0x278] sm:$0xff]
      %v3454 = vld [vmem:[#allocation4 + $0x280] sm:$0xff]
      %v3455 = vld [vmem:[#allocation4 + $0x288] sm:$0xff]
      %v3456 = vld [vmem:[#allocation4 + $0x290] sm:$0xff]
      %v3457 = vld [vmem:[#allocation4 + $0x298] sm:$0xff]
      %v3458 = vld [vmem:[#allocation4 + $0x2a0] sm:$0xff]
      %v3459 = vld [vmem:[#allocation4 + $0x2a8] sm:$0xff]
      %v3460 = vld [vmem:[#allocation4 + $0x2b0] sm:$0xff]
      %v3461 = vld [vmem:[#allocation4 + $0x2b8] sm:$0xff]
      %v3462 = vld [vmem:[#allocation4 + $0x2c0] sm:$0xff]
      %v3463 = vld [vmem:[#allocation4 + $0x2c8] sm:$0xff]
      %v3464 = vld [vmem:[#allocation4 + $0x2d0] sm:$0xff]
      %v3465 = vld [vmem:[#allocation4 + $0x2d8] sm:$0xff]
      %v3466 = vld [vmem:[#allocation4 + $0x2e0] sm:$0xff]
      %v3467 = vld [vmem:[#allocation4 + $0x2e8] sm:$0xff]
      %v3468 = vld [vmem:[#allocation4 + $0x2f0] sm:$0xff]
      %v3469 = vld [vmem:[#allocation4 + $0x2f8] sm:$0xff]
      %v3470 = vld [vmem:[#allocation4 + $0x300] sm:$0xff]
      %v3471 = vld [vmem:[#allocation4 + $0x308] sm:$0xff]
      %v3472 = vld [vmem:[#allocation4 + $0x310] sm:$0xff]
      %v3473 = vld [vmem:[#allocation4 + $0x318] sm:$0xff]
      %v3474 = vld [vmem:[#allocation4 + $0x320] sm:$0xff]
      %v3475 = vld [vmem:[#allocation4 + $0x328] sm:$0xff]
      %v3476 = vld [vmem:[#allocation4 + $0x330] sm:$0xff]
      %v3477 = vld [vmem:[#allocation4 + $0x338] sm:$0xff]
      %v3478 = vld [vmem:[#allocation4 + $0x340] sm:$0xff]
      %v3479 = vld [vmem:[#allocation4 + $0x348] sm:$0xff]
      %v3480 = vld [vmem:[#allocation4 + $0x350] sm:$0xff]
      %v3481 = vld [vmem:[#allocation4 + $0x358] sm:$0xff]
      %v3482 = vld [vmem:[#allocation4 + $0x360] sm:$0xff]
      %v3483 = vld [vmem:[#allocation4 + $0x368] sm:$0xff]
      %v3484 = vld [vmem:[#allocation4 + $0x370] sm:$0xff]
      %v3485 = vld [vmem:[#allocation4 + $0x378] sm:$0xff]
      %v3486 = vld [vmem:[#allocation4 + $0x380] sm:$0xff]
      %v3487 = vld [vmem:[#allocation4 + $0x388] sm:$0xff]
      %v3488 = vld [vmem:[#allocation4 + $0x390] sm:$0xff]
      %v3489 = vld [vmem:[#allocation4 + $0x398] sm:$0xff]
      %v3490 = vld [vmem:[#allocation4 + $0x3a0] sm:$0xff]
      %v3491 = vld [vmem:[#allocation4 + $0x3a8] sm:$0xff]
      %v3492 = vld [vmem:[#allocation4 + $0x3b0] sm:$0xff]
      %v3493 = vld [vmem:[#allocation4 + $0x3b8] sm:$0xff]
      %v3494 = vld [vmem:[#allocation4 + $0x3c0] sm:$0xff]
      %v3495 = vld [vmem:[#allocation4 + $0x3c8] sm:$0xff]
      %v3496 = vld [vmem:[#allocation4 + $0x3d0] sm:$0xff]
      %v3497 = vld [vmem:[#allocation4 + $0x3d8] sm:$0xff]
      %v3498 = vld [vmem:[#allocation4 + $0x3e0] sm:$0xff]
      %v3499 = vld [vmem:[#allocation4 + $0x3e8] sm:$0xff]
      %v3500 = vld [vmem:[#allocation4 + $0x3f0] sm:$0xff]
      %v3501 = vld [vmem:[#allocation4 + $0x3f8] sm:$0xff]
      %v3502 = vld [vmem:[#allocation4 + $0x400] sm:$0xff]
      %v3503 = vld [vmem:[#allocation4 + $0x408] sm:$0xff]
      %v3504 = vld [vmem:[#allocation4 + $0x410] sm:$0xff]
      %v3505 = vld [vmem:[#allocation4 + $0x418] sm:$0xff]
      %v3506 = vld [vmem:[#allocation4 + $0x420] sm:$0xff]
      %v3507 = vld [vmem:[#allocation4 + $0x428] sm:$0xff]
      %v3508 = vld [vmem:[#allocation4 + $0x430] sm:$0xff]
      %v3509 = vld [vmem:[#allocation4 + $0x438] sm:$0xff]
      %v3510 = vld [vmem:[#allocation4 + $0x440] sm:$0xff]
      %v3511 = vld [vmem:[#allocation4 + $0x448] sm:$0xff]
      %v3512 = vld [vmem:[#allocation4 + $0x450] sm:$0xff]
      %v3513 = vld [vmem:[#allocation4 + $0x458] sm:$0xff]
      %v3514 = vld [vmem:[#allocation4 + $0x460] sm:$0xff]
      %v3515 = vld [vmem:[#allocation4 + $0x468] sm:$0xff]
      %v3516 = vld [vmem:[#allocation4 + $0x470] sm:$0xff]
      %v3517 = vld [vmem:[#allocation4 + $0x478] sm:$0xff]
      %v3518 = vld [vmem:[#allocation4 + $0x480] sm:$0xff]
      %v3519 = vld [vmem:[#allocation4 + $0x488] sm:$0xff]
      %v3520 = vld [vmem:[#allocation4 + $0x490] sm:$0xff]
      %v3521 = vld [vmem:[#allocation4 + $0x498] sm:$0xff]
      %v3522 = vld [vmem:[#allocation4 + $0x4a0] sm:$0xff]
      %v3523 = vld [vmem:[#allocation4 + $0x4a8] sm:$0xff]
      %v3524 = vld [vmem:[#allocation4 + $0x4b0] sm:$0xff]
      %v3525 = vld [vmem:[#allocation4 + $0x4b8] sm:$0xff]
      %v3526 = vld [vmem:[#allocation4 + $0x4c0] sm:$0xff]
      %v3527 = vld [vmem:[#allocation4 + $0x4c8] sm:$0xff]
      %v3528 = vld [vmem:[#allocation4 + $0x4d0] sm:$0xff]
      %v3529 = vld [vmem:[#allocation4 + $0x4d8] sm:$0xff]
      %v3530 = vld [vmem:[#allocation4 + $0x4e0] sm:$0xff]
      %v3531 = vld [vmem:[#allocation4 + $0x4e8] sm:$0xff]
      %v3532 = vld [vmem:[#allocation4 + $0x4f0] sm:$0xff]
      %v3533 = vld [vmem:[#allocation4 + $0x4f8] sm:$0xff]
      %v3534 = vld [vmem:[#allocation4 + $0x500] sm:$0xff]
      %v3535 = vld [vmem:[#allocation4 + $0x508] sm:$0xff]
      %v3536 = vld [vmem:[#allocation4 + $0x510] sm:$0xff]
      %v3537 = vld [vmem:[#allocation4 + $0x518] sm:$0xff]
      %v3538 = vld [vmem:[#allocation4 + $0x520] sm:$0xff]
      %v3539 = vld [vmem:[#allocation4 + $0x528] sm:$0xff]
      %v3540 = vld [vmem:[#allocation4 + $0x530] sm:$0xff]
      %v3541 = vld [vmem:[#allocation4 + $0x538] sm:$0xff]
      %v3542 = vld [vmem:[#allocation4 + $0x540] sm:$0xff]
      %v3543 = vld [vmem:[#allocation4 + $0x548] sm:$0xff]
      %v3544 = vld [vmem:[#allocation4 + $0x550] sm:$0xff]
      %v3545 = vld [vmem:[#allocation4 + $0x558] sm:$0xff]
      %v3546 = vld [vmem:[#allocation4 + $0x560] sm:$0xff]
      %v3547 = vld [vmem:[#allocation4 + $0x568] sm:$0xff]
      %v3548 = vld [vmem:[#allocation4 + $0x570] sm:$0xff]
      %v3549 = vld [vmem:[#allocation4 + $0x578] sm:$0xff]
      %v3550 = vld [vmem:[#allocation4 + $0x580] sm:$0xff]
      %v3551 = vld [vmem:[#allocation4 + $0x588] sm:$0xff]
      %v3552 = vld [vmem:[#allocation4 + $0x590] sm:$0xff]
      %v3553 = vld [vmem:[#allocation4 + $0x598] sm:$0xff]
      %v3554 = vld [vmem:[#allocation4 + $0x5a0] sm:$0xff]
      %v3555 = vld [vmem:[#allocation4 + $0x5a8] sm:$0xff]
      %v3556 = vld [vmem:[#allocation4 + $0x5b0] sm:$0xff]
      %v3557 = vld [vmem:[#allocation4 + $0x5b8] sm:$0xff]
      %v3558 = vld [vmem:[#allocation4 + $0x5c0] sm:$0xff]
      %v3559 = vld [vmem:[#allocation4 + $0x5c8] sm:$0xff]
      %v3560 = vld [vmem:[#allocation4 + $0x5d0] sm:$0xff]
      %v3561 = vld [vmem:[#allocation4 + $0x5d8] sm:$0xff]
      %v3562 = vld [vmem:[#allocation4 + $0x5e0] sm:$0xff]
      %v3563 = vld [vmem:[#allocation4 + $0x5e8] sm:$0xff]
      %v3564 = vld [vmem:[#allocation4 + $0x5f0] sm:$0xff]
      %v3565 = vld [vmem:[#allocation4 + $0x5f8] sm:$0xff]
      %v3566 = vld [vmem:[#allocation4 + $0x600] sm:$0xff]
      %v3567 = vld [vmem:[#allocation4 + $0x608] sm:$0xff]
      %v3568 = vld [vmem:[#allocation4 + $0x610] sm:$0xff]
      %v3569 = vld [vmem:[#allocation4 + $0x618] sm:$0xff]
      %v3570 = vld [vmem:[#allocation4 + $0x620] sm:$0xff]
      %v3571 = vld [vmem:[#allocation4 + $0x628] sm:$0xff]
      %v3572 = vld [vmem:[#allocation4 + $0x630] sm:$0xff]
      %v3573 = vld [vmem:[#allocation4 + $0x638] sm:$0xff]
      %v3574 = vld [vmem:[#allocation4 + $0x640] sm:$0xff]
      %v3575 = vld [vmem:[#allocation4 + $0x648] sm:$0xff]
      %v3576 = vld [vmem:[#allocation4 + $0x650] sm:$0xff]
      %v3577 = vld [vmem:[#allocation4 + $0x658] sm:$0xff]
      %v3578 = vld [vmem:[#allocation4 + $0x660] sm:$0xff]
      %v3579 = vld [vmem:[#allocation4 + $0x668] sm:$0xff]
      %v3580 = vld [vmem:[#allocation4 + $0x670] sm:$0xff]
      %v3581 = vld [vmem:[#allocation4 + $0x678] sm:$0xff]
      %v3582 = vld [vmem:[#allocation4 + $0x680] sm:$0xff]
      %v3583 = vld [vmem:[#allocation4 + $0x688] sm:$0xff]
      %v3584 = vld [vmem:[#allocation4 + $0x690] sm:$0xff]
      %v3585 = vld [vmem:[#allocation4 + $0x698] sm:$0xff]
      %v3586 = vld [vmem:[#allocation4 + $0x6a0] sm:$0xff]
      %v3587 = vld [vmem:[#allocation4 + $0x6a8] sm:$0xff]
      %v3588 = vld [vmem:[#allocation4 + $0x6b0] sm:$0xff]
      %v3589 = vld [vmem:[#allocation4 + $0x6b8] sm:$0xff]
      %v3590 = vld [vmem:[#allocation4 + $0x6c0] sm:$0xff]
      %v3591 = vld [vmem:[#allocation4 + $0x6c8] sm:$0xff]
      %v3592 = vld [vmem:[#allocation4 + $0x6d0] sm:$0xff]
      %v3593 = vld [vmem:[#allocation4 + $0x6d8] sm:$0xff]
      %v3594 = vld [vmem:[#allocation4 + $0x6e0] sm:$0xff]
      %v3595 = vld [vmem:[#allocation4 + $0x6e8] sm:$0xff]
      %v3596 = vld [vmem:[#allocation4 + $0x6f0] sm:$0xff]
      %v3597 = vld [vmem:[#allocation4 + $0x6f8] sm:$0xff]
      %v3598 = vld [vmem:[#allocation4 + $0x700] sm:$0xff]
      %v3599 = vld [vmem:[#allocation4 + $0x708] sm:$0xff]
      %v3600 = vld [vmem:[#allocation4 + $0x710] sm:$0xff]
      %v3601 = vld [vmem:[#allocation4 + $0x718] sm:$0xff]
      %v3602 = vld [vmem:[#allocation4 + $0x720] sm:$0xff]
      %v3603 = vld [vmem:[#allocation4 + $0x728] sm:$0xff]
      %v3604 = vld [vmem:[#allocation4 + $0x730] sm:$0xff]
      %v3605 = vld [vmem:[#allocation4 + $0x738] sm:$0xff]
      %v3606 = vld [vmem:[#allocation4 + $0x740] sm:$0xff]
      %v3607 = vld [vmem:[#allocation4 + $0x748] sm:$0xff]
      %v3608 = vld [vmem:[#allocation4 + $0x750] sm:$0xff]
      %v3609 = vld [vmem:[#allocation4 + $0x758] sm:$0xff]
      %v3610 = vld [vmem:[#allocation4 + $0x760] sm:$0xff]
      %v3611 = vld [vmem:[#allocation4 + $0x768] sm:$0xff]
      %v3612 = vld [vmem:[#allocation4 + $0x770] sm:$0xff]
      %v3613 = vld [vmem:[#allocation4 + $0x778] sm:$0xff]
      %v3614 = vld [vmem:[#allocation4 + $0x780] sm:$0xff]
      %v3615 = vld [vmem:[#allocation4 + $0x788] sm:$0xff]
      %v3616 = vld [vmem:[#allocation4 + $0x790] sm:$0xff]
      %v3617 = vld [vmem:[#allocation4 + $0x798] sm:$0xff]
      %v3618 = vld [vmem:[#allocation4 + $0x7a0] sm:$0xff]
      %v3619 = vld [vmem:[#allocation4 + $0x7a8] sm:$0xff]
      %v3620 = vld [vmem:[#allocation4 + $0x7b0] sm:$0xff]
      %v3621 = vld [vmem:[#allocation4 + $0x7b8] sm:$0xff]
      %v3622 = vld [vmem:[#allocation4 + $0x7c0] sm:$0xff]
      %v3623 = vld [vmem:[#allocation4 + $0x7c8] sm:$0xff]
      %v3624 = vld [vmem:[#allocation4 + $0x7d0] sm:$0xff]
      %v3625 = vld [vmem:[#allocation4 + $0x7d8] sm:$0xff]
      %v3626 = vld [vmem:[#allocation4 + $0x7e0] sm:$0xff]
      %v3627 = vld [vmem:[#allocation4 + $0x7e8] sm:$0xff]
      %v3628 = vld [vmem:[#allocation4 + $0x7f0] sm:$0xff]
      %v3629 = vld [vmem:[#allocation4 + $0x7f8] sm:$0xff]
      %v3630 = vld [vmem:[#allocation4 + $0x800] sm:$0xff]
      %v3631 = vld [vmem:[#allocation4 + $0x808] sm:$0xff]
      %v3632 = vld [vmem:[#allocation4 + $0x810] sm:$0xff]
      %v3633 = vld [vmem:[#allocation4 + $0x818] sm:$0xff]
      %v3634 = vld [vmem:[#allocation4 + $0x820] sm:$0xff]
      %v3635 = vld [vmem:[#allocation4 + $0x828] sm:$0xff]
      %v3636 = vld [vmem:[#allocation4 + $0x830] sm:$0xff]
      %v3637 = vld [vmem:[#allocation4 + $0x838] sm:$0xff]
      %v3638 = vld [vmem:[#allocation4 + $0x840] sm:$0xff]
      %v3639 = vld [vmem:[#allocation4 + $0x848] sm:$0xff]
      %v3640 = vld [vmem:[#allocation4 + $0x850] sm:$0xff]
      %v3641 = vld [vmem:[#allocation4 + $0x858] sm:$0xff]
      %v3642 = vld [vmem:[#allocation4 + $0x860] sm:$0xff]
      %v3643 = vld [vmem:[#allocation4 + $0x868] sm:$0xff]
      %v3644 = vld [vmem:[#allocation4 + $0x870] sm:$0xff]
      %v3645 = vld [vmem:[#allocation4 + $0x878] sm:$0xff]
      %v3646 = vld [vmem:[#allocation4 + $0x880] sm:$0xff]
      %v3647 = vld [vmem:[#allocation4 + $0x888] sm:$0xff]
      %v3648 = vld [vmem:[#allocation4 + $0x890] sm:$0xff]
      %v3649 = vld [vmem:[#allocation4 + $0x898] sm:$0xff]
      %v3650 = vld [vmem:[#allocation4 + $0x8a0] sm:$0xff]
      %v3651 = vld [vmem:[#allocation4 + $0x8a8] sm:$0xff]
      %v3652 = vld [vmem:[#allocation4 + $0x8b0] sm:$0xff]
      %v3653 = vld [vmem:[#allocation4 + $0x8b8] sm:$0xff]
      %v3654 = vld [vmem:[#allocation4 + $0x8c0] sm:$0xff]
      %v3655 = vld [vmem:[#allocation4 + $0x8c8] sm:$0xff]
      %v3656 = vld [vmem:[#allocation4 + $0x8d0] sm:$0xff]
      %v3657 = vld [vmem:[#allocation4 + $0x8d8] sm:$0xff]
      %v3658 = vld [vmem:[#allocation4 + $0x8e0] sm:$0xff]
      %v3659 = vld [vmem:[#allocation4 + $0x8e8] sm:$0xff]
      %v3660 = vld [vmem:[#allocation4 + $0x8f0] sm:$0xff]
      %v3661 = vld [vmem:[#allocation4 + $0x8f8] sm:$0xff]
      %v3662 = vld [vmem:[%s5] sm:$0xff]
      %v3663 = vld [vmem:[%s5 + $0x8] sm:$0xff]
      %v3664 = vld [vmem:[%s5 + $0x10] sm:$0xff]
      %v3665 = vld [vmem:[%s5 + $0x18] sm:$0xff]
      %v3666 = vld [vmem:[%s5 + $0x20] sm:$0xff]
      %v3667 = vld [vmem:[%s5 + $0x28] sm:$0xff]
      %v3668 = vld [vmem:[%s5 + $0x30] sm:$0xff]
      %v3669 = vld [vmem:[%s5 + $0x38] sm:$0xff]
      %v3670 = vld [vmem:[%s5 + $0x40] sm:$0xff]
      %v3671 = vld [vmem:[%s5 + $0x48] sm:$0xff]
      %v3672 = vld [vmem:[%s5 + $0x50] sm:$0xff]
      %v3673 = vld [vmem:[%s5 + $0x58] sm:$0xff]
      %v3674 = vld [vmem:[%s5 + $0x60] sm:$0xff]
      %v3675 = vld [vmem:[%s5 + $0x68] sm:$0xff]
      %v3676 = vld [vmem:[%s5 + $0x70] sm:$0xff]
      %v3677 = vld [vmem:[%s5 + $0x78] sm:$0xff]
      %v3678 = vld [vmem:[%s5 + $0x80] sm:$0xff]
      %v3679 = vld [vmem:[%s5 + $0x88] sm:$0xff]
      %v3680 = vld [vmem:[%s5 + $0x90] sm:$0xff]
      %v3681 = vld [vmem:[%s5 + $0x98] sm:$0xff]
      %v3682 = vld [vmem:[%s5 + $0xa0] sm:$0xff]
      %v3683 = vld [vmem:[%s5 + $0xa8] sm:$0xff]
      %v3684 = vld [vmem:[%s5 + $0xb0] sm:$0xff]
      %v3685 = vld [vmem:[%s5 + $0xb8] sm:$0xff]
      %v3686 = vld [vmem:[%s5 + $0xc0] sm:$0xff]
      %v3687 = vld [vmem:[%s5 + $0xc8] sm:$0xff]
      %v3688 = vld [vmem:[%s5 + $0xd0] sm:$0xff]
      %v3689 = vld [vmem:[%s5 + $0xd8] sm:$0xff]
      %v3690 = vld [vmem:[%s5 + $0xe0] sm:$0xff]
      %v3691 = vld [vmem:[%s5 + $0xe8] sm:$0xff]
      %v3692 = vld [vmem:[%s5 + $0xf0] sm:$0xff]
      %v3693 = vld [vmem:[%s5 + $0xf8] sm:$0xff]
      %v3694 = vld [vmem:[%s5 + $0x100] sm:$0xff]
      %v3695 = vld [vmem:[%s5 + $0x108] sm:$0xff]
      %v3696 = vld [vmem:[%s5 + $0x110] sm:$0xff]
      %v3697 = vld [vmem:[%s5 + $0x118] sm:$0xff]
      %v3698 = vld [vmem:[%s5 + $0x120] sm:$0xff]
      %v3699 = vld [vmem:[%s5 + $0x128] sm:$0xff]
      %v3700 = vld [vmem:[%s5 + $0x130] sm:$0xff]
      %v3701 = vld [vmem:[%s5 + $0x138] sm:$0xff]
      %v3702 = vld [vmem:[%s5 + $0x140] sm:$0xff]
      %v3703 = vld [vmem:[%s5 + $0x148] sm:$0xff]
      %v3704 = vld [vmem:[%s5 + $0x150] sm:$0xff]
      %v3705 = vld [vmem:[%s5 + $0x158] sm:$0xff]
      %v3706 = vld [vmem:[%s5 + $0x160] sm:$0xff]
      %v3707 = vld [vmem:[%s5 + $0x168] sm:$0xff]
      %v3708 = vld [vmem:[%s5 + $0x170] sm:$0xff]
      %v3709 = vld [vmem:[%s5 + $0x178] sm:$0xff]
      %v3710 = vld [vmem:[%s5 + $0x180] sm:$0xff]
      %v3711 = vld [vmem:[%s5 + $0x188] sm:$0xff]
      %v3712 = vld [vmem:[%s5 + $0x190] sm:$0xff]
      %v3713 = vld [vmem:[%s5 + $0x198] sm:$0xff]
      %v3714 = vld [vmem:[%s5 + $0x1a0] sm:$0xff]
      %v3715 = vld [vmem:[%s5 + $0x1a8] sm:$0xff]
      %v3716 = vld [vmem:[%s5 + $0x1b0] sm:$0xff]
      %v3717 = vld [vmem:[%s5 + $0x1b8] sm:$0xff]
      %v3718 = vld [vmem:[%s5 + $0x1c0] sm:$0xff]
      %v3719 = vld [vmem:[%s5 + $0x1c8] sm:$0xff]
      %v3720 = vld [vmem:[%s5 + $0x1d0] sm:$0xff]
      %v3721 = vld [vmem:[%s5 + $0x1d8] sm:$0xff]
      %v3722 = vld [vmem:[%s5 + $0x1e0] sm:$0xff]
      %v3723 = vld [vmem:[%s5 + $0x1e8] sm:$0xff]
      %v3724 = vld [vmem:[%s5 + $0x1f0] sm:$0xff]
      %v3725 = vld [vmem:[%s5 + $0x1f8] sm:$0xff]
      %v3726 = vld [vmem:[%s5 + $0x200] sm:$0xff]
      %v3727 = vld [vmem:[%s5 + $0x208] sm:$0xff]
      %v3728 = vld [vmem:[%s5 + $0x210] sm:$0xff]
      %v3729 = vld [vmem:[%s5 + $0x218] sm:$0xff]
      %v3730 = vld [vmem:[%s5 + $0x220] sm:$0xff]
      %v3731 = vld [vmem:[%s5 + $0x228] sm:$0xff]
      %v3732 = vld [vmem:[%s5 + $0x230] sm:$0xff]
      %v3733 = vld [vmem:[%s5 + $0x238] sm:$0xff]
      %v3734 = vld [vmem:[%s5 + $0x240] sm:$0xff]
      %v3735 = vld [vmem:[%s5 + $0x248] sm:$0xff]
      %v3736 = vld [vmem:[%s5 + $0x250] sm:$0xff]
      %v3737 = vld [vmem:[%s5 + $0x258] sm:$0xff]
      %v3738 = vld [vmem:[%s5 + $0x260] sm:$0xff]
      %v3739 = vld [vmem:[%s5 + $0x268] sm:$0xff]
      %v3740 = vld [vmem:[%s5 + $0x270] sm:$0xff]
      %v3741 = vld [vmem:[%s5 + $0x278] sm:$0xff]
      %v3742 = vld [vmem:[%s5 + $0x280] sm:$0xff]
      %v3743 = vld [vmem:[%s5 + $0x288] sm:$0xff]
      %v3744 = vld [vmem:[%s5 + $0x290] sm:$0xff]
      %v3745 = vld [vmem:[%s5 + $0x298] sm:$0xff]
      %v3746 = vld [vmem:[%s5 + $0x2a0] sm:$0xff]
      %v3747 = vld [vmem:[%s5 + $0x2a8] sm:$0xff]
      %v3748 = vld [vmem:[%s5 + $0x2b0] sm:$0xff]
      %v3749 = vld [vmem:[%s5 + $0x2b8] sm:$0xff]
      %v3750 = vld [vmem:[%s5 + $0x2c0] sm:$0xff]
      %v3751 = vld [vmem:[%s5 + $0x2c8] sm:$0xff]
      %v3752 = vld [vmem:[%s5 + $0x2d0] sm:$0xff]
      %v3753 = vld [vmem:[%s5 + $0x2d8] sm:$0xff]
      %v3754 = vld [vmem:[%s5 + $0x2e0] sm:$0xff]
      %v3755 = vld [vmem:[%s5 + $0x2e8] sm:$0xff]
      %v3756 = vld [vmem:[%s5 + $0x2f0] sm:$0xff]
      %v3757 = vld [vmem:[%s5 + $0x2f8] sm:$0xff]
      %v3758 = vld [vmem:[%s5 + $0x300] sm:$0xff]
      %v3759 = vld [vmem:[%s5 + $0x308] sm:$0xff]
      %v3760 = vld [vmem:[%s5 + $0x310] sm:$0xff]
      %v3761 = vld [vmem:[%s5 + $0x318] sm:$0xff]
      %v3762 = vld [vmem:[%s5 + $0x320] sm:$0xff]
      %v3763 = vld [vmem:[%s5 + $0x328] sm:$0xff]
      %v3764 = vld [vmem:[%s5 + $0x330] sm:$0xff]
      %v3765 = vld [vmem:[%s5 + $0x338] sm:$0xff]
      %v3766 = vld [vmem:[%s5 + $0x340] sm:$0xff]
      %v3767 = vld [vmem:[%s5 + $0x348] sm:$0xff]
      %v3768 = vld [vmem:[%s5 + $0x350] sm:$0xff]
      %v3769 = vld [vmem:[%s5 + $0x358] sm:$0xff]
      %v3770 = vld [vmem:[%s5 + $0x360] sm:$0xff]
      %v3771 = vld [vmem:[%s5 + $0x368] sm:$0xff]
      %v3772 = vld [vmem:[%s5 + $0x370] sm:$0xff]
      %v3773 = vld [vmem:[%s5 + $0x378] sm:$0xff]
      %v3774 = vld [vmem:[%s5 + $0x380] sm:$0xff]
      %v3775 = vld [vmem:[%s5 + $0x388] sm:$0xff]
      %v3776 = vld [vmem:[%s5 + $0x390] sm:$0xff]
      %v3777 = vld [vmem:[%s5 + $0x398] sm:$0xff]
      %v3778 = vld [vmem:[%s5 + $0x3a0] sm:$0xff]
      %v3779 = vld [vmem:[%s5 + $0x3a8] sm:$0xff]
      %v3780 = vld [vmem:[%s5 + $0x3b0] sm:$0xff]
      %v3781 = vld [vmem:[%s5 + $0x3b8] sm:$0xff]
      %v3782 = vld [vmem:[%s5 + $0x3c0] sm:$0xff]
      %v3783 = vld [vmem:[%s5 + $0x3c8] sm:$0xff]
      %v3784 = vld [vmem:[%s5 + $0x3d0] sm:$0xff]
      %v3785 = vld [vmem:[%s5 + $0x3d8] sm:$0xff]
      %v3786 = vld [vmem:[%s5 + $0x3e0] sm:$0xff]
      %v3787 = vld [vmem:[%s5 + $0x3e8] sm:$0xff]
      %v3788 = vld [vmem:[%s5 + $0x3f0] sm:$0xff]
      %v3789 = vld [vmem:[%s5 + $0x3f8] sm:$0xff]
      %v3790 = vld [vmem:[%s5 + $0x400] sm:$0xff]
      %v3791 = vld [vmem:[%s5 + $0x408] sm:$0xff]
      %v3792 = vld [vmem:[%s5 + $0x410] sm:$0xff]
      %v3793 = vld [vmem:[%s5 + $0x418] sm:$0xff]
      %v3794 = vld [vmem:[%s5 + $0x420] sm:$0xff]
      %v3795 = vld [vmem:[%s5 + $0x428] sm:$0xff]
      %v3796 = vld [vmem:[%s5 + $0x430] sm:$0xff]
      %v3797 = vld [vmem:[%s5 + $0x438] sm:$0xff]
      %v3798 = vld [vmem:[%s5 + $0x440] sm:$0xff]
      %v3799 = vld [vmem:[%s5 + $0x448] sm:$0xff]
      %v3800 = vld [vmem:[%s5 + $0x450] sm:$0xff]
      %v3801 = vld [vmem:[%s5 + $0x458] sm:$0xff]
      %v3802 = vld [vmem:[%s5 + $0x460] sm:$0xff]
      %v3803 = vld [vmem:[%s5 + $0x468] sm:$0xff]
      %v3804 = vld [vmem:[%s5 + $0x470] sm:$0xff]
      %v3805 = vld [vmem:[%s5 + $0x478] sm:$0xff]
      %v3806 = vld [vmem:[%s6] sm:$0x1]
      %v3808 = vperm.slane %v3806, 0
      %3810 = vmatpush.msra.mxu0 %v3677
      %3811 = vmatpush.msra.mxu0 %v3676
      %3812 = vmatpush.msra.mxu0 %v3675
      %3813 = vmatpush.msra.mxu0 %v3674
      %3814 = vmatpush.msra.mxu0 %v3673
      %3815 = vmatpush.msra.mxu0 %v3672
      %3816 = vmatpush.msra.mxu0 %v3671
      %3817 = vmatpush.msra.mxu0 %v3670
      %3818 = vmatpush.msra.mxu0 %v3669
      %3819 = vmatpush.msra.mxu0 %v3668
      %3820 = vmatpush.msra.mxu0 %v3667
      %3821 = vmatpush.msra.mxu0 %v3666
      %3822 = vmatpush.msra.mxu0 %v3665
      %3823 = vmatpush.msra.mxu0 %v3664
      %3824 = vmatpush.msra.mxu0 %v3663
      %3825 = vmatpush.msra.mxu0 %v3662
      %3826 = vmatmul.f32.gmra.mxu0 %v3374
      %v3827 = vpop.f32.mrf.mxu0
      %v3828 = vadd.f32 %v3808, %v3827
      %3829 = vmatmul.f32.gmra.mxu0 %v3383
      %v3830 = vpop.f32.mrf.mxu0
      %v3831 = vadd.f32 %v3808, %v3830
      %3832 = vmatmul.f32.gmra.mxu0 %v3392
      %v3833 = vpop.f32.mrf.mxu0
      %v3834 = vadd.f32 %v3808, %v3833
      %3835 = vmatmul.f32.gmra.mxu0 %v3401
      %v3836 = vpop.f32.mrf.mxu0
      %v3837 = vadd.f32 %v3808, %v3836
      %3838 = vmatmul.f32.gmra.mxu0 %v3410
      %v3839 = vpop.f32.mrf.mxu0
      %v3840 = vadd.f32 %v3808, %v3839
      %3841 = vmatmul.f32.gmra.mxu0 %v3419
      %v3842 = vpop.f32.mrf.mxu0
      %v3843 = vadd.f32 %v3808, %v3842
      %3844 = vmatmul.f32.gmra.mxu0 %v3428
      %v3845 = vpop.f32.mrf.mxu0
      %v3846 = vadd.f32 %v3808, %v3845
      %3847 = vmatmul.f32.gmra.mxu0 %v3437
      %v3848 = vpop.f32.mrf.mxu0
      %v3849 = vadd.f32 %v3808, %v3848
      %3850 = vmatmul.f32.gmra.mxu0 %v3446
      %v3851 = vpop.f32.mrf.mxu0
      %v3852 = vadd.f32 %v3808, %v3851
      %3853 = vmatmul.f32.gmra.mxu0 %v3455
      %v3854 = vpop.f32.mrf.mxu0
      %v3855 = vadd.f32 %v3808, %v3854
      %3856 = vmatmul.f32.gmra.mxu0 %v3464
      %v3857 = vpop.f32.mrf.mxu0
      %v3858 = vadd.f32 %v3808, %v3857
      %3859 = vmatmul.f32.gmra.mxu0 %v3473
      %v3860 = vpop.f32.mrf.mxu0
      %v3861 = vadd.f32 %v3808, %v3860
      %3862 = vmatmul.f32.gmra.mxu0 %v3482
      %v3863 = vpop.f32.mrf.mxu0
      %v3864 = vadd.f32 %v3808, %v3863
      %3865 = vmatmul.f32.gmra.mxu0 %v3491
      %v3866 = vpop.f32.mrf.mxu0
      %v3867 = vadd.f32 %v3808, %v3866
      %3868 = vmatmul.f32.gmra.mxu0 %v3500
      %v3869 = vpop.f32.mrf.mxu0
      %v3870 = vadd.f32 %v3808, %v3869
      %3871 = vmatmul.f32.gmra.mxu0 %v3509
      %v3872 = vpop.f32.mrf.mxu0
      %v3873 = vadd.f32 %v3808, %v3872
      %3874 = vmatmul.f32.gmra.mxu0 %v3518
      %v3875 = vpop.f32.mrf.mxu0
      %v3876 = vadd.f32 %v3808, %v3875
      %3877 = vmatmul.f32.gmra.mxu0 %v3527
      %v3878 = vpop.f32.mrf.mxu0
      %v3879 = vadd.f32 %v3808, %v3878
      %3880 = vmatmul.f32.gmra.mxu0 %v3536
      %v3881 = vpop.f32.mrf.mxu0
      %v3882 = vadd.f32 %v3808, %v3881
      %3883 = vmatmul.f32.gmra.mxu0 %v3545
      %v3884 = vpop.f32.mrf.mxu0
      %v3885 = vadd.f32 %v3808, %v3884
      %3886 = vmatmul.f32.gmra.mxu0 %v3554
      %v3887 = vpop.f32.mrf.mxu0
      %v3888 = vadd.f32 %v3808, %v3887
      %3889 = vmatmul.f32.gmra.mxu0 %v3563
      %v3890 = vpop.f32.mrf.mxu0
      %v3891 = vadd.f32 %v3808, %v3890
      %3892 = vmatmul.f32.gmra.mxu0 %v3572
      %v3893 = vpop.f32.mrf.mxu0
      %v3894 = vadd.f32 %v3808, %v3893
      %3895 = vmatmul.f32.gmra.mxu0 %v3581
      %v3896 = vpop.f32.mrf.mxu0
      %v3897 = vadd.f32 %v3808, %v3896
      %3898 = vmatmul.f32.gmra.mxu0 %v3590
      %v3899 = vpop.f32.mrf.mxu0
      %v3900 = vadd.f32 %v3808, %v3899
      %3901 = vmatmul.f32.gmra.mxu0 %v3599
      %v3902 = vpop.f32.mrf.mxu0
      %v3903 = vadd.f32 %v3808, %v3902
      %3904 = vmatmul.f32.gmra.mxu0 %v3608
      %v3905 = vpop.f32.mrf.mxu0
      %v3906 = vadd.f32 %v3808, %v3905
      %3907 = vmatmul.f32.gmra.mxu0 %v3617
      %v3908 = vpop.f32.mrf.mxu0
      %v3909 = vadd.f32 %v3808, %v3908
      %3910 = vmatmul.f32.gmra.mxu0 %v3626
      %v3911 = vpop.f32.mrf.mxu0
      %v3912 = vadd.f32 %v3808, %v3911
      %3913 = vmatmul.f32.gmra.mxu0 %v3635
      %v3914 = vpop.f32.mrf.mxu0
      %v3915 = vadd.f32 %v3808, %v3914
      %3916 = vmatmul.f32.gmra.mxu0 %v3644
      %v3917 = vpop.f32.mrf.mxu0
      %v3918 = vadd.f32 %v3808, %v3917
      %3919 = vmatmul.f32.gmra.mxu0 %v3653
      %v3920 = vpop.f32.mrf.mxu0
      %v3921 = vadd.f32 %v3808, %v3920
      %3922 = vdwg.mxu0
      %3923 = vmatpush.msra.mxu0 %v3693
      %3924 = vmatpush.msra.mxu0 %v3692
      %3925 = vmatpush.msra.mxu0 %v3691
      %3926 = vmatpush.msra.mxu0 %v3690
      %3927 = vmatpush.msra.mxu0 %v3689
      %3928 = vmatpush.msra.mxu0 %v3688
      %3929 = vmatpush.msra.mxu0 %v3687
      %3930 = vmatpush.msra.mxu0 %v3686
      %3931 = vmatpush.msra.mxu0 %v3685
      %3932 = vmatpush.msra.mxu0 %v3684
      %3933 = vmatpush.msra.mxu0 %v3683
      %3934 = vmatpush.msra.mxu0 %v3682
      %3935 = vmatpush.msra.mxu0 %v3681
      %3936 = vmatpush.msra.mxu0 %v3680
      %3937 = vmatpush.msra.mxu0 %v3679
      %3938 = vmatpush.msra.mxu0 %v3678
      %3939 = vmatmul.f32.gmra.mxu0 %v3375
      %v3940 = vpop.f32.mrf.mxu0
      %v3941 = vadd.f32 %v3828, %v3940
      %3942 = vmatmul.f32.gmra.mxu0 %v3384
      %v3943 = vpop.f32.mrf.mxu0
      %v3944 = vadd.f32 %v3831, %v3943
      %3945 = vmatmul.f32.gmra.mxu0 %v3393
      %v3946 = vpop.f32.mrf.mxu0
      %v3947 = vadd.f32 %v3834, %v3946
      %3948 = vmatmul.f32.gmra.mxu0 %v3402
      %v3949 = vpop.f32.mrf.mxu0
      %v3950 = vadd.f32 %v3837, %v3949
      %3951 = vmatmul.f32.gmra.mxu0 %v3411
      %v3952 = vpop.f32.mrf.mxu0
      %v3953 = vadd.f32 %v3840, %v3952
      %3954 = vmatmul.f32.gmra.mxu0 %v3420
      %v3955 = vpop.f32.mrf.mxu0
      %v3956 = vadd.f32 %v3843, %v3955
      %3957 = vmatmul.f32.gmra.mxu0 %v3429
      %v3958 = vpop.f32.mrf.mxu0
      %v3959 = vadd.f32 %v3846, %v3958
      %3960 = vmatmul.f32.gmra.mxu0 %v3438
      %v3961 = vpop.f32.mrf.mxu0
      %v3962 = vadd.f32 %v3849, %v3961
      %3963 = vmatmul.f32.gmra.mxu0 %v3447
      %v3964 = vpop.f32.mrf.mxu0
      %v3965 = vadd.f32 %v3852, %v3964
      %3966 = vmatmul.f32.gmra.mxu0 %v3456
      %v3967 = vpop.f32.mrf.mxu0
      %v3968 = vadd.f32 %v3855, %v3967
      %3969 = vmatmul.f32.gmra.mxu0 %v3465
      %v3970 = vpop.f32.mrf.mxu0
      %v3971 = vadd.f32 %v3858, %v3970
      %3972 = vmatmul.f32.gmra.mxu0 %v3474
      %v3973 = vpop.f32.mrf.mxu0
      %v3974 = vadd.f32 %v3861, %v3973
      %3975 = vmatmul.f32.gmra.mxu0 %v3483
      %v3976 = vpop.f32.mrf.mxu0
      %v3977 = vadd.f32 %v3864, %v3976
      %3978 = vmatmul.f32.gmra.mxu0 %v3492
      %v3979 = vpop.f32.mrf.mxu0
      %v3980 = vadd.f32 %v3867, %v3979
      %3981 = vmatmul.f32.gmra.mxu0 %v3501
      %v3982 = vpop.f32.mrf.mxu0
      %v3983 = vadd.f32 %v3870, %v3982
      %3984 = vmatmul.f32.gmra.mxu0 %v3510
      %v3985 = vpop.f32.mrf.mxu0
      %v3986 = vadd.f32 %v3873, %v3985
      %3987 = vmatmul.f32.gmra.mxu0 %v3519
      %v3988 = vpop.f32.mrf.mxu0
      %v3989 = vadd.f32 %v3876, %v3988
      %3990 = vmatmul.f32.gmra.mxu0 %v3528
      %v3991 = vpop.f32.mrf.mxu0
      %v3992 = vadd.f32 %v3879, %v3991
      %3993 = vmatmul.f32.gmra.mxu0 %v3537
      %v3994 = vpop.f32.mrf.mxu0
      %v3995 = vadd.f32 %v3882, %v3994
      %3996 = vmatmul.f32.gmra.mxu0 %v3546
      %v3997 = vpop.f32.mrf.mxu0
      %v3998 = vadd.f32 %v3885, %v3997
      %3999 = vmatmul.f32.gmra.mxu0 %v3555
      %v4000 = vpop.f32.mrf.mxu0
      %v4001 = vadd.f32 %v3888, %v4000
      %4002 = vmatmul.f32.gmra.mxu0 %v3564
      %v4003 = vpop.f32.mrf.mxu0
      %v4004 = vadd.f32 %v3891, %v4003
      %4005 = vmatmul.f32.gmra.mxu0 %v3573
      %v4006 = vpop.f32.mrf.mxu0
      %v4007 = vadd.f32 %v3894, %v4006
      %4008 = vmatmul.f32.gmra.mxu0 %v3582
      %v4009 = vpop.f32.mrf.mxu0
      %v4010 = vadd.f32 %v3897, %v4009
      %4011 = vmatmul.f32.gmra.mxu0 %v3591
      %v4012 = vpop.f32.mrf.mxu0
      %v4013 = vadd.f32 %v3900, %v4012
      %4014 = vmatmul.f32.gmra.mxu0 %v3600
      %v4015 = vpop.f32.mrf.mxu0
      %v4016 = vadd.f32 %v3903, %v4015
      %4017 = vmatmul.f32.gmra.mxu0 %v3609
      %v4018 = vpop.f32.mrf.mxu0
      %v4019 = vadd.f32 %v3906, %v4018
      %4020 = vmatmul.f32.gmra.mxu0 %v3618
      %v4021 = vpop.f32.mrf.mxu0
      %v4022 = vadd.f32 %v3909, %v4021
      %4023 = vmatmul.f32.gmra.mxu0 %v3627
      %v4024 = vpop.f32.mrf.mxu0
      %v4025 = vadd.f32 %v3912, %v4024
      %4026 = vmatmul.f32.gmra.mxu0 %v3636
      %v4027 = vpop.f32.mrf.mxu0
      %v4028 = vadd.f32 %v3915, %v4027
      %4029 = vmatmul.f32.gmra.mxu0 %v3645
      %v4030 = vpop.f32.mrf.mxu0
      %v4031 = vadd.f32 %v3918, %v4030
      %4032 = vmatmul.f32.gmra.mxu0 %v3654
      %v4033 = vpop.f32.mrf.mxu0
      %v4034 = vadd.f32 %v3921, %v4033
      %4035 = vdwg.mxu0
      %4036 = vmatpush.msra.mxu0 %v3709
      %4037 = vmatpush.msra.mxu0 %v3708
      %4038 = vmatpush.msra.mxu0 %v3707
      %4039 = vmatpush.msra.mxu0 %v3706
      %4040 = vmatpush.msra.mxu0 %v3705
      %4041 = vmatpush.msra.mxu0 %v3704
      %4042 = vmatpush.msra.mxu0 %v3703
      %4043 = vmatpush.msra.mxu0 %v3702
      %4044 = vmatpush.msra.mxu0 %v3701
      %4045 = vmatpush.msra.mxu0 %v3700
      %4046 = vmatpush.msra.mxu0 %v3699
      %4047 = vmatpush.msra.mxu0 %v3698
      %4048 = vmatpush.msra.mxu0 %v3697
      %4049 = vmatpush.msra.mxu0 %v3696
      %4050 = vmatpush.msra.mxu0 %v3695
      %4051 = vmatpush.msra.mxu0 %v3694
      %4052 = vmatmul.f32.gmra.mxu0 %v3376
      %v4053 = vpop.f32.mrf.mxu0
      %v4054 = vadd.f32 %v3941, %v4053
      %4055 = vmatmul.f32.gmra.mxu0 %v3385
      %v4056 = vpop.f32.mrf.mxu0
      %v4057 = vadd.f32 %v3944, %v4056
      %4058 = vmatmul.f32.gmra.mxu0 %v3394
      %v4059 = vpop.f32.mrf.mxu0
      %v4060 = vadd.f32 %v3947, %v4059
      %4061 = vmatmul.f32.gmra.mxu0 %v3403
      %v4062 = vpop.f32.mrf.mxu0
      %v4063 = vadd.f32 %v3950, %v4062
      %4064 = vmatmul.f32.gmra.mxu0 %v3412
      %v4065 = vpop.f32.mrf.mxu0
      %v4066 = vadd.f32 %v3953, %v4065
      %4067 = vmatmul.f32.gmra.mxu0 %v3421
      %v4068 = vpop.f32.mrf.mxu0
      %v4069 = vadd.f32 %v3956, %v4068
      %4070 = vmatmul.f32.gmra.mxu0 %v3430
      %v4071 = vpop.f32.mrf.mxu0
      %v4072 = vadd.f32 %v3959, %v4071
      %4073 = vmatmul.f32.gmra.mxu0 %v3439
      %v4074 = vpop.f32.mrf.mxu0
      %v4075 = vadd.f32 %v3962, %v4074
      %4076 = vmatmul.f32.gmra.mxu0 %v3448
      %v4077 = vpop.f32.mrf.mxu0
      %v4078 = vadd.f32 %v3965, %v4077
      %4079 = vmatmul.f32.gmra.mxu0 %v3457
      %v4080 = vpop.f32.mrf.mxu0
      %v4081 = vadd.f32 %v3968, %v4080
      %4082 = vmatmul.f32.gmra.mxu0 %v3466
      %v4083 = vpop.f32.mrf.mxu0
      %v4084 = vadd.f32 %v3971, %v4083
      %4085 = vmatmul.f32.gmra.mxu0 %v3475
      %v4086 = vpop.f32.mrf.mxu0
      %v4087 = vadd.f32 %v3974, %v4086
      %4088 = vmatmul.f32.gmra.mxu0 %v3484
      %v4089 = vpop.f32.mrf.mxu0
      %v4090 = vadd.f32 %v3977, %v4089
      %4091 = vmatmul.f32.gmra.mxu0 %v3493
      %v4092 = vpop.f32.mrf.mxu0
      %v4093 = vadd.f32 %v3980, %v4092
      %4094 = vmatmul.f32.gmra.mxu0 %v3502
      %v4095 = vpop.f32.mrf.mxu0
      %v4096 = vadd.f32 %v3983, %v4095
      %4097 = vmatmul.f32.gmra.mxu0 %v3511
      %v4098 = vpop.f32.mrf.mxu0
      %v4099 = vadd.f32 %v3986, %v4098
      %4100 = vmatmul.f32.gmra.mxu0 %v3520
      %v4101 = vpop.f32.mrf.mxu0
      %v4102 = vadd.f32 %v3989, %v4101
      %4103 = vmatmul.f32.gmra.mxu0 %v3529
      %v4104 = vpop.f32.mrf.mxu0
      %v4105 = vadd.f32 %v3992, %v4104
      %4106 = vmatmul.f32.gmra.mxu0 %v3538
      %v4107 = vpop.f32.mrf.mxu0
      %v4108 = vadd.f32 %v3995, %v4107
      %4109 = vmatmul.f32.gmra.mxu0 %v3547
      %v4110 = vpop.f32.mrf.mxu0
      %v4111 = vadd.f32 %v3998, %v4110
      %4112 = vmatmul.f32.gmra.mxu0 %v3556
      %v4113 = vpop.f32.mrf.mxu0
      %v4114 = vadd.f32 %v4001, %v4113
      %4115 = vmatmul.f32.gmra.mxu0 %v3565
      %v4116 = vpop.f32.mrf.mxu0
      %v4117 = vadd.f32 %v4004, %v4116
      %4118 = vmatmul.f32.gmra.mxu0 %v3574
      %v4119 = vpop.f32.mrf.mxu0
      %v4120 = vadd.f32 %v4007, %v4119
      %4121 = vmatmul.f32.gmra.mxu0 %v3583
      %v4122 = vpop.f32.mrf.mxu0
      %v4123 = vadd.f32 %v4010, %v4122
      %4124 = vmatmul.f32.gmra.mxu0 %v3592
      %v4125 = vpop.f32.mrf.mxu0
      %v4126 = vadd.f32 %v4013, %v4125
      %4127 = vmatmul.f32.gmra.mxu0 %v3601
      %v4128 = vpop.f32.mrf.mxu0
      %v4129 = vadd.f32 %v4016, %v4128
      %4130 = vmatmul.f32.gmra.mxu0 %v3610
      %v4131 = vpop.f32.mrf.mxu0
      %v4132 = vadd.f32 %v4019, %v4131
      %4133 = vmatmul.f32.gmra.mxu0 %v3619
      %v4134 = vpop.f32.mrf.mxu0
      %v4135 = vadd.f32 %v4022, %v4134
      %4136 = vmatmul.f32.gmra.mxu0 %v3628
      %v4137 = vpop.f32.mrf.mxu0
      %v4138 = vadd.f32 %v4025, %v4137
      %4139 = vmatmul.f32.gmra.mxu0 %v3637
      %v4140 = vpop.f32.mrf.mxu0
      %v4141 = vadd.f32 %v4028, %v4140
      %4142 = vmatmul.f32.gmra.mxu0 %v3646
      %v4143 = vpop.f32.mrf.mxu0
      %v4144 = vadd.f32 %v4031, %v4143
      %4145 = vmatmul.f32.gmra.mxu0 %v3655
      %v4146 = vpop.f32.mrf.mxu0
      %v4147 = vadd.f32 %v4034, %v4146
      %4148 = vdwg.mxu0
      %4149 = vmatpush.msra.mxu0 %v3725
      %4150 = vmatpush.msra.mxu0 %v3724
      %4151 = vmatpush.msra.mxu0 %v3723
      %4152 = vmatpush.msra.mxu0 %v3722
      %4153 = vmatpush.msra.mxu0 %v3721
      %4154 = vmatpush.msra.mxu0 %v3720
      %4155 = vmatpush.msra.mxu0 %v3719
      %4156 = vmatpush.msra.mxu0 %v3718
      %4157 = vmatpush.msra.mxu0 %v3717
      %4158 = vmatpush.msra.mxu0 %v3716
      %4159 = vmatpush.msra.mxu0 %v3715
      %4160 = vmatpush.msra.mxu0 %v3714
      %4161 = vmatpush.msra.mxu0 %v3713
      %4162 = vmatpush.msra.mxu0 %v3712
      %4163 = vmatpush.msra.mxu0 %v3711
      %4164 = vmatpush.msra.mxu0 %v3710
      %4165 = vmatmul.f32.gmra.mxu0 %v3377
      %v4166 = vpop.f32.mrf.mxu0
      %v4167 = vadd.f32 %v4054, %v4166
      %4168 = vmatmul.f32.gmra.mxu0 %v3386
      %v4169 = vpop.f32.mrf.mxu0
      %v4170 = vadd.f32 %v4057, %v4169
      %4171 = vmatmul.f32.gmra.mxu0 %v3395
      %v4172 = vpop.f32.mrf.mxu0
      %v4173 = vadd.f32 %v4060, %v4172
      %4174 = vmatmul.f32.gmra.mxu0 %v3404
      %v4175 = vpop.f32.mrf.mxu0
      %v4176 = vadd.f32 %v4063, %v4175
      %4177 = vmatmul.f32.gmra.mxu0 %v3413
      %v4178 = vpop.f32.mrf.mxu0
      %v4179 = vadd.f32 %v4066, %v4178
      %4180 = vmatmul.f32.gmra.mxu0 %v3422
      %v4181 = vpop.f32.mrf.mxu0
      %v4182 = vadd.f32 %v4069, %v4181
      %4183 = vmatmul.f32.gmra.mxu0 %v3431
      %v4184 = vpop.f32.mrf.mxu0
      %v4185 = vadd.f32 %v4072, %v4184
      %4186 = vmatmul.f32.gmra.mxu0 %v3440
      %v4187 = vpop.f32.mrf.mxu0
      %v4188 = vadd.f32 %v4075, %v4187
      %4189 = vmatmul.f32.gmra.mxu0 %v3449
      %v4190 = vpop.f32.mrf.mxu0
      %v4191 = vadd.f32 %v4078, %v4190
      %4192 = vmatmul.f32.gmra.mxu0 %v3458
      %v4193 = vpop.f32.mrf.mxu0
      %v4194 = vadd.f32 %v4081, %v4193
      %4195 = vmatmul.f32.gmra.mxu0 %v3467
      %v4196 = vpop.f32.mrf.mxu0
      %v4197 = vadd.f32 %v4084, %v4196
      %4198 = vmatmul.f32.gmra.mxu0 %v3476
      %v4199 = vpop.f32.mrf.mxu0
      %v4200 = vadd.f32 %v4087, %v4199
      %4201 = vmatmul.f32.gmra.mxu0 %v3485
      %v4202 = vpop.f32.mrf.mxu0
      %v4203 = vadd.f32 %v4090, %v4202
      %4204 = vmatmul.f32.gmra.mxu0 %v3494
      %v4205 = vpop.f32.mrf.mxu0
      %v4206 = vadd.f32 %v4093, %v4205
      %4207 = vmatmul.f32.gmra.mxu0 %v3503
      %v4208 = vpop.f32.mrf.mxu0
      %v4209 = vadd.f32 %v4096, %v4208
      %4210 = vmatmul.f32.gmra.mxu0 %v3512
      %v4211 = vpop.f32.mrf.mxu0
      %v4212 = vadd.f32 %v4099, %v4211
      %4213 = vmatmul.f32.gmra.mxu0 %v3521
      %v4214 = vpop.f32.mrf.mxu0
      %v4215 = vadd.f32 %v4102, %v4214
      %4216 = vmatmul.f32.gmra.mxu0 %v3530
      %v4217 = vpop.f32.mrf.mxu0
      %v4218 = vadd.f32 %v4105, %v4217
      %4219 = vmatmul.f32.gmra.mxu0 %v3539
      %v4220 = vpop.f32.mrf.mxu0
      %v4221 = vadd.f32 %v4108, %v4220
      %4222 = vmatmul.f32.gmra.mxu0 %v3548
      %v4223 = vpop.f32.mrf.mxu0
      %v4224 = vadd.f32 %v4111, %v4223
      %4225 = vmatmul.f32.gmra.mxu0 %v3557
      %v4226 = vpop.f32.mrf.mxu0
      %v4227 = vadd.f32 %v4114, %v4226
      %4228 = vmatmul.f32.gmra.mxu0 %v3566
      %v4229 = vpop.f32.mrf.mxu0
      %v4230 = vadd.f32 %v4117, %v4229
      %4231 = vmatmul.f32.gmra.mxu0 %v3575
      %v4232 = vpop.f32.mrf.mxu0
      %v4233 = vadd.f32 %v4120, %v4232
      %4234 = vmatmul.f32.gmra.mxu0 %v3584
      %v4235 = vpop.f32.mrf.mxu0
      %v4236 = vadd.f32 %v4123, %v4235
      %4237 = vmatmul.f32.gmra.mxu0 %v3593
      %v4238 = vpop.f32.mrf.mxu0
      %v4239 = vadd.f32 %v4126, %v4238
      %4240 = vmatmul.f32.gmra.mxu0 %v3602
      %v4241 = vpop.f32.mrf.mxu0
      %v4242 = vadd.f32 %v4129, %v4241
      %4243 = vmatmul.f32.gmra.mxu0 %v3611
      %v4244 = vpop.f32.mrf.mxu0
      %v4245 = vadd.f32 %v4132, %v4244
      %4246 = vmatmul.f32.gmra.mxu0 %v3620
      %v4247 = vpop.f32.mrf.mxu0
      %v4248 = vadd.f32 %v4135, %v4247
      %4249 = vmatmul.f32.gmra.mxu0 %v3629
      %v4250 = vpop.f32.mrf.mxu0
      %v4251 = vadd.f32 %v4138, %v4250
      %4252 = vmatmul.f32.gmra.mxu0 %v3638
      %v4253 = vpop.f32.mrf.mxu0
      %v4254 = vadd.f32 %v4141, %v4253
      %4255 = vmatmul.f32.gmra.mxu0 %v3647
      %v4256 = vpop.f32.mrf.mxu0
      %v4257 = vadd.f32 %v4144, %v4256
      %4258 = vmatmul.f32.gmra.mxu0 %v3656
      %v4259 = vpop.f32.mrf.mxu0
      %v4260 = vadd.f32 %v4147, %v4259
      %4261 = vdwg.mxu0
      %4262 = vmatpush.msra.mxu0 %v3741
      %4263 = vmatpush.msra.mxu0 %v3740
      %4264 = vmatpush.msra.mxu0 %v3739
      %4265 = vmatpush.msra.mxu0 %v3738
      %4266 = vmatpush.msra.mxu0 %v3737
      %4267 = vmatpush.msra.mxu0 %v3736
      %4268 = vmatpush.msra.mxu0 %v3735
      %4269 = vmatpush.msra.mxu0 %v3734
      %4270 = vmatpush.msra.mxu0 %v3733
      %4271 = vmatpush.msra.mxu0 %v3732
      %4272 = vmatpush.msra.mxu0 %v3731
      %4273 = vmatpush.msra.mxu0 %v3730
      %4274 = vmatpush.msra.mxu0 %v3729
      %4275 = vmatpush.msra.mxu0 %v3728
      %4276 = vmatpush.msra.mxu0 %v3727
      %4277 = vmatpush.msra.mxu0 %v3726
      %4278 = vmatmul.f32.gmra.mxu0 %v3378
      %v4279 = vpop.f32.mrf.mxu0
      %v4280 = vadd.f32 %v4167, %v4279
      %4281 = vmatmul.f32.gmra.mxu0 %v3387
      %v4282 = vpop.f32.mrf.mxu0
      %v4283 = vadd.f32 %v4170, %v4282
      %4284 = vmatmul.f32.gmra.mxu0 %v3396
      %v4285 = vpop.f32.mrf.mxu0
      %v4286 = vadd.f32 %v4173, %v4285
      %4287 = vmatmul.f32.gmra.mxu0 %v3405
      %v4288 = vpop.f32.mrf.mxu0
      %v4289 = vadd.f32 %v4176, %v4288
      %4290 = vmatmul.f32.gmra.mxu0 %v3414
      %v4291 = vpop.f32.mrf.mxu0
      %v4292 = vadd.f32 %v4179, %v4291
      %4293 = vmatmul.f32.gmra.mxu0 %v3423
      %v4294 = vpop.f32.mrf.mxu0
      %v4295 = vadd.f32 %v4182, %v4294
      %4296 = vmatmul.f32.gmra.mxu0 %v3432
      %v4297 = vpop.f32.mrf.mxu0
      %v4298 = vadd.f32 %v4185, %v4297
      %4299 = vmatmul.f32.gmra.mxu0 %v3441
      %v4300 = vpop.f32.mrf.mxu0
      %v4301 = vadd.f32 %v4188, %v4300
      %4302 = vmatmul.f32.gmra.mxu0 %v3450
      %v4303 = vpop.f32.mrf.mxu0
      %v4304 = vadd.f32 %v4191, %v4303
      %4305 = vmatmul.f32.gmra.mxu0 %v3459
      %v4306 = vpop.f32.mrf.mxu0
      %v4307 = vadd.f32 %v4194, %v4306
      %4308 = vmatmul.f32.gmra.mxu0 %v3468
      %v4309 = vpop.f32.mrf.mxu0
      %v4310 = vadd.f32 %v4197, %v4309
      %4311 = vmatmul.f32.gmra.mxu0 %v3477
      %v4312 = vpop.f32.mrf.mxu0
      %v4313 = vadd.f32 %v4200, %v4312
      %4314 = vmatmul.f32.gmra.mxu0 %v3486
      %v4315 = vpop.f32.mrf.mxu0
      %v4316 = vadd.f32 %v4203, %v4315
      %4317 = vmatmul.f32.gmra.mxu0 %v3495
      %v4318 = vpop.f32.mrf.mxu0
      %v4319 = vadd.f32 %v4206, %v4318
      %4320 = vmatmul.f32.gmra.mxu0 %v3504
      %v4321 = vpop.f32.mrf.mxu0
      %v4322 = vadd.f32 %v4209, %v4321
      %4323 = vmatmul.f32.gmra.mxu0 %v3513
      %v4324 = vpop.f32.mrf.mxu0
      %v4325 = vadd.f32 %v4212, %v4324
      %4326 = vmatmul.f32.gmra.mxu0 %v3522
      %v4327 = vpop.f32.mrf.mxu0
      %v4328 = vadd.f32 %v4215, %v4327
      %4329 = vmatmul.f32.gmra.mxu0 %v3531
      %v4330 = vpop.f32.mrf.mxu0
      %v4331 = vadd.f32 %v4218, %v4330
      %4332 = vmatmul.f32.gmra.mxu0 %v3540
      %v4333 = vpop.f32.mrf.mxu0
      %v4334 = vadd.f32 %v4221, %v4333
      %4335 = vmatmul.f32.gmra.mxu0 %v3549
      %v4336 = vpop.f32.mrf.mxu0
      %v4337 = vadd.f32 %v4224, %v4336
      %4338 = vmatmul.f32.gmra.mxu0 %v3558
      %v4339 = vpop.f32.mrf.mxu0
      %v4340 = vadd.f32 %v4227, %v4339
      %4341 = vmatmul.f32.gmra.mxu0 %v3567
      %v4342 = vpop.f32.mrf.mxu0
      %v4343 = vadd.f32 %v4230, %v4342
      %4344 = vmatmul.f32.gmra.mxu0 %v3576
      %v4345 = vpop.f32.mrf.mxu0
      %v4346 = vadd.f32 %v4233, %v4345
      %4347 = vmatmul.f32.gmra.mxu0 %v3585
      %v4348 = vpop.f32.mrf.mxu0
      %v4349 = vadd.f32 %v4236, %v4348
      %4350 = vmatmul.f32.gmra.mxu0 %v3594
      %v4351 = vpop.f32.mrf.mxu0
      %v4352 = vadd.f32 %v4239, %v4351
      %4353 = vmatmul.f32.gmra.mxu0 %v3603
      %v4354 = vpop.f32.mrf.mxu0
      %v4355 = vadd.f32 %v4242, %v4354
      %4356 = vmatmul.f32.gmra.mxu0 %v3612
      %v4357 = vpop.f32.mrf.mxu0
      %v4358 = vadd.f32 %v4245, %v4357
      %4359 = vmatmul.f32.gmra.mxu0 %v3621
      %v4360 = vpop.f32.mrf.mxu0
      %v4361 = vadd.f32 %v4248, %v4360
      %4362 = vmatmul.f32.gmra.mxu0 %v3630
      %v4363 = vpop.f32.mrf.mxu0
      %v4364 = vadd.f32 %v4251, %v4363
      %4365 = vmatmul.f32.gmra.mxu0 %v3639
      %v4366 = vpop.f32.mrf.mxu0
      %v4367 = vadd.f32 %v4254, %v4366
      %4368 = vmatmul.f32.gmra.mxu0 %v3648
      %v4369 = vpop.f32.mrf.mxu0
      %v4370 = vadd.f32 %v4257, %v4369
      %4371 = vmatmul.f32.gmra.mxu0 %v3657
      %v4372 = vpop.f32.mrf.mxu0
      %v4373 = vadd.f32 %v4260, %v4372
      %4374 = vdwg.mxu0
      %4375 = vmatpush.msra.mxu0 %v3757
      %4376 = vmatpush.msra.mxu0 %v3756
      %4377 = vmatpush.msra.mxu0 %v3755
      %4378 = vmatpush.msra.mxu0 %v3754
      %4379 = vmatpush.msra.mxu0 %v3753
      %4380 = vmatpush.msra.mxu0 %v3752
      %4381 = vmatpush.msra.mxu0 %v3751
      %4382 = vmatpush.msra.mxu0 %v3750
      %4383 = vmatpush.msra.mxu0 %v3749
      %4384 = vmatpush.msra.mxu0 %v3748
      %4385 = vmatpush.msra.mxu0 %v3747
      %4386 = vmatpush.msra.mxu0 %v3746
      %4387 = vmatpush.msra.mxu0 %v3745
      %4388 = vmatpush.msra.mxu0 %v3744
      %4389 = vmatpush.msra.mxu0 %v3743
      %4390 = vmatpush.msra.mxu0 %v3742
      %4391 = vmatmul.f32.gmra.mxu0 %v3379
      %v4392 = vpop.f32.mrf.mxu0
      %v4393 = vadd.f32 %v4280, %v4392
      %4394 = vmatmul.f32.gmra.mxu0 %v3388
      %v4395 = vpop.f32.mrf.mxu0
      %v4396 = vadd.f32 %v4283, %v4395
      %4397 = vmatmul.f32.gmra.mxu0 %v3397
      %v4398 = vpop.f32.mrf.mxu0
      %v4399 = vadd.f32 %v4286, %v4398
      %4400 = vmatmul.f32.gmra.mxu0 %v3406
      %v4401 = vpop.f32.mrf.mxu0
      %v4402 = vadd.f32 %v4289, %v4401
      %4403 = vmatmul.f32.gmra.mxu0 %v3415
      %v4404 = vpop.f32.mrf.mxu0
      %v4405 = vadd.f32 %v4292, %v4404
      %4406 = vmatmul.f32.gmra.mxu0 %v3424
      %v4407 = vpop.f32.mrf.mxu0
      %v4408 = vadd.f32 %v4295, %v4407
      %4409 = vmatmul.f32.gmra.mxu0 %v3433
      %v4410 = vpop.f32.mrf.mxu0
      %v4411 = vadd.f32 %v4298, %v4410
      %4412 = vmatmul.f32.gmra.mxu0 %v3442
      %v4413 = vpop.f32.mrf.mxu0
      %v4414 = vadd.f32 %v4301, %v4413
      %4415 = vmatmul.f32.gmra.mxu0 %v3451
      %v4416 = vpop.f32.mrf.mxu0
      %v4417 = vadd.f32 %v4304, %v4416
      %4418 = vmatmul.f32.gmra.mxu0 %v3460
      %v4419 = vpop.f32.mrf.mxu0
      %v4420 = vadd.f32 %v4307, %v4419
      %4421 = vmatmul.f32.gmra.mxu0 %v3469
      %v4422 = vpop.f32.mrf.mxu0
      %v4423 = vadd.f32 %v4310, %v4422
      %4424 = vmatmul.f32.gmra.mxu0 %v3478
      %v4425 = vpop.f32.mrf.mxu0
      %v4426 = vadd.f32 %v4313, %v4425
      %4427 = vmatmul.f32.gmra.mxu0 %v3487
      %v4428 = vpop.f32.mrf.mxu0
      %v4429 = vadd.f32 %v4316, %v4428
      %4430 = vmatmul.f32.gmra.mxu0 %v3496
      %v4431 = vpop.f32.mrf.mxu0
      %v4432 = vadd.f32 %v4319, %v4431
      %4433 = vmatmul.f32.gmra.mxu0 %v3505
      %v4434 = vpop.f32.mrf.mxu0
      %v4435 = vadd.f32 %v4322, %v4434
      %4436 = vmatmul.f32.gmra.mxu0 %v3514
      %v4437 = vpop.f32.mrf.mxu0
      %v4438 = vadd.f32 %v4325, %v4437
      %4439 = vmatmul.f32.gmra.mxu0 %v3523
      %v4440 = vpop.f32.mrf.mxu0
      %v4441 = vadd.f32 %v4328, %v4440
      %4442 = vmatmul.f32.gmra.mxu0 %v3532
      %v4443 = vpop.f32.mrf.mxu0
      %v4444 = vadd.f32 %v4331, %v4443
      %4445 = vmatmul.f32.gmra.mxu0 %v3541
      %v4446 = vpop.f32.mrf.mxu0
      %v4447 = vadd.f32 %v4334, %v4446
      %4448 = vmatmul.f32.gmra.mxu0 %v3550
      %v4449 = vpop.f32.mrf.mxu0
      %v4450 = vadd.f32 %v4337, %v4449
      %4451 = vmatmul.f32.gmra.mxu0 %v3559
      %v4452 = vpop.f32.mrf.mxu0
      %v4453 = vadd.f32 %v4340, %v4452
      %4454 = vmatmul.f32.gmra.mxu0 %v3568
      %v4455 = vpop.f32.mrf.mxu0
      %v4456 = vadd.f32 %v4343, %v4455
      %4457 = vmatmul.f32.gmra.mxu0 %v3577
      %v4458 = vpop.f32.mrf.mxu0
      %v4459 = vadd.f32 %v4346, %v4458
      %4460 = vmatmul.f32.gmra.mxu0 %v3586
      %v4461 = vpop.f32.mrf.mxu0
      %v4462 = vadd.f32 %v4349, %v4461
      %4463 = vmatmul.f32.gmra.mxu0 %v3595
      %v4464 = vpop.f32.mrf.mxu0
      %v4465 = vadd.f32 %v4352, %v4464
      %4466 = vmatmul.f32.gmra.mxu0 %v3604
      %v4467 = vpop.f32.mrf.mxu0
      %v4468 = vadd.f32 %v4355, %v4467
      %4469 = vmatmul.f32.gmra.mxu0 %v3613
      %v4470 = vpop.f32.mrf.mxu0
      %v4471 = vadd.f32 %v4358, %v4470
      %4472 = vmatmul.f32.gmra.mxu0 %v3622
      %v4473 = vpop.f32.mrf.mxu0
      %v4474 = vadd.f32 %v4361, %v4473
      %4475 = vmatmul.f32.gmra.mxu0 %v3631
      %v4476 = vpop.f32.mrf.mxu0
      %v4477 = vadd.f32 %v4364, %v4476
      %4478 = vmatmul.f32.gmra.mxu0 %v3640
      %v4479 = vpop.f32.mrf.mxu0
      %v4480 = vadd.f32 %v4367, %v4479
      %4481 = vmatmul.f32.gmra.mxu0 %v3649
      %v4482 = vpop.f32.mrf.mxu0
      %v4483 = vadd.f32 %v4370, %v4482
      %4484 = vmatmul.f32.gmra.mxu0 %v3658
      %v4485 = vpop.f32.mrf.mxu0
      %v4486 = vadd.f32 %v4373, %v4485
      %4487 = vdwg.mxu0
      %4488 = vmatpush.msra.mxu0 %v3773
      %4489 = vmatpush.msra.mxu0 %v3772
      %4490 = vmatpush.msra.mxu0 %v3771
      %4491 = vmatpush.msra.mxu0 %v3770
      %4492 = vmatpush.msra.mxu0 %v3769
      %4493 = vmatpush.msra.mxu0 %v3768
      %4494 = vmatpush.msra.mxu0 %v3767
      %4495 = vmatpush.msra.mxu0 %v3766
      %4496 = vmatpush.msra.mxu0 %v3765
      %4497 = vmatpush.msra.mxu0 %v3764
      %4498 = vmatpush.msra.mxu0 %v3763
      %4499 = vmatpush.msra.mxu0 %v3762
      %4500 = vmatpush.msra.mxu0 %v3761
      %4501 = vmatpush.msra.mxu0 %v3760
      %4502 = vmatpush.msra.mxu0 %v3759
      %4503 = vmatpush.msra.mxu0 %v3758
      %4504 = vmatmul.f32.gmra.mxu0 %v3380
      %v4505 = vpop.f32.mrf.mxu0
      %v4506 = vadd.f32 %v4393, %v4505
      %4507 = vmatmul.f32.gmra.mxu0 %v3389
      %v4508 = vpop.f32.mrf.mxu0
      %v4509 = vadd.f32 %v4396, %v4508
      %4510 = vmatmul.f32.gmra.mxu0 %v3398
      %v4511 = vpop.f32.mrf.mxu0
      %v4512 = vadd.f32 %v4399, %v4511
      %4513 = vmatmul.f32.gmra.mxu0 %v3407
      %v4514 = vpop.f32.mrf.mxu0
      %v4515 = vadd.f32 %v4402, %v4514
      %4516 = vmatmul.f32.gmra.mxu0 %v3416
      %v4517 = vpop.f32.mrf.mxu0
      %v4518 = vadd.f32 %v4405, %v4517
      %4519 = vmatmul.f32.gmra.mxu0 %v3425
      %v4520 = vpop.f32.mrf.mxu0
      %v4521 = vadd.f32 %v4408, %v4520
      %4522 = vmatmul.f32.gmra.mxu0 %v3434
      %v4523 = vpop.f32.mrf.mxu0
      %v4524 = vadd.f32 %v4411, %v4523
      %4525 = vmatmul.f32.gmra.mxu0 %v3443
      %v4526 = vpop.f32.mrf.mxu0
      %v4527 = vadd.f32 %v4414, %v4526
      %4528 = vmatmul.f32.gmra.mxu0 %v3452
      %v4529 = vpop.f32.mrf.mxu0
      %v4530 = vadd.f32 %v4417, %v4529
      %4531 = vmatmul.f32.gmra.mxu0 %v3461
      %v4532 = vpop.f32.mrf.mxu0
      %v4533 = vadd.f32 %v4420, %v4532
      %4534 = vmatmul.f32.gmra.mxu0 %v3470
      %v4535 = vpop.f32.mrf.mxu0
      %v4536 = vadd.f32 %v4423, %v4535
      %4537 = vmatmul.f32.gmra.mxu0 %v3479
      %v4538 = vpop.f32.mrf.mxu0
      %v4539 = vadd.f32 %v4426, %v4538
      %4540 = vmatmul.f32.gmra.mxu0 %v3488
      %v4541 = vpop.f32.mrf.mxu0
      %v4542 = vadd.f32 %v4429, %v4541
      %4543 = vmatmul.f32.gmra.mxu0 %v3497
      %v4544 = vpop.f32.mrf.mxu0
      %v4545 = vadd.f32 %v4432, %v4544
      %4546 = vmatmul.f32.gmra.mxu0 %v3506
      %v4547 = vpop.f32.mrf.mxu0
      %v4548 = vadd.f32 %v4435, %v4547
      %4549 = vmatmul.f32.gmra.mxu0 %v3515
      %v4550 = vpop.f32.mrf.mxu0
      %v4551 = vadd.f32 %v4438, %v4550
      %4552 = vmatmul.f32.gmra.mxu0 %v3524
      %v4553 = vpop.f32.mrf.mxu0
      %v4554 = vadd.f32 %v4441, %v4553
      %4555 = vmatmul.f32.gmra.mxu0 %v3533
      %v4556 = vpop.f32.mrf.mxu0
      %v4557 = vadd.f32 %v4444, %v4556
      %4558 = vmatmul.f32.gmra.mxu0 %v3542
      %v4559 = vpop.f32.mrf.mxu0
      %v4560 = vadd.f32 %v4447, %v4559
      %4561 = vmatmul.f32.gmra.mxu0 %v3551
      %v4562 = vpop.f32.mrf.mxu0
      %v4563 = vadd.f32 %v4450, %v4562
      %4564 = vmatmul.f32.gmra.mxu0 %v3560
      %v4565 = vpop.f32.mrf.mxu0
      %v4566 = vadd.f32 %v4453, %v4565
      %4567 = vmatmul.f32.gmra.mxu0 %v3569
      %v4568 = vpop.f32.mrf.mxu0
      %v4569 = vadd.f32 %v4456, %v4568
      %4570 = vmatmul.f32.gmra.mxu0 %v3578
      %v4571 = vpop.f32.mrf.mxu0
      %v4572 = vadd.f32 %v4459, %v4571
      %4573 = vmatmul.f32.gmra.mxu0 %v3587
      %v4574 = vpop.f32.mrf.mxu0
      %v4575 = vadd.f32 %v4462, %v4574
      %4576 = vmatmul.f32.gmra.mxu0 %v3596
      %v4577 = vpop.f32.mrf.mxu0
      %v4578 = vadd.f32 %v4465, %v4577
      %4579 = vmatmul.f32.gmra.mxu0 %v3605
      %v4580 = vpop.f32.mrf.mxu0
      %v4581 = vadd.f32 %v4468, %v4580
      %4582 = vmatmul.f32.gmra.mxu0 %v3614
      %v4583 = vpop.f32.mrf.mxu0
      %v4584 = vadd.f32 %v4471, %v4583
      %4585 = vmatmul.f32.gmra.mxu0 %v3623
      %v4586 = vpop.f32.mrf.mxu0
      %v4587 = vadd.f32 %v4474, %v4586
      %4588 = vmatmul.f32.gmra.mxu0 %v3632
      %v4589 = vpop.f32.mrf.mxu0
      %v4590 = vadd.f32 %v4477, %v4589
      %4591 = vmatmul.f32.gmra.mxu0 %v3641
      %v4592 = vpop.f32.mrf.mxu0
      %v4593 = vadd.f32 %v4480, %v4592
      %4594 = vmatmul.f32.gmra.mxu0 %v3650
      %v4595 = vpop.f32.mrf.mxu0
      %v4596 = vadd.f32 %v4483, %v4595
      %4597 = vmatmul.f32.gmra.mxu0 %v3659
      %v4598 = vpop.f32.mrf.mxu0
      %v4599 = vadd.f32 %v4486, %v4598
      %4600 = vdwg.mxu0
      %4601 = vmatpush.msra.mxu0 %v3789
      %4602 = vmatpush.msra.mxu0 %v3788
      %4603 = vmatpush.msra.mxu0 %v3787
      %4604 = vmatpush.msra.mxu0 %v3786
      %4605 = vmatpush.msra.mxu0 %v3785
      %4606 = vmatpush.msra.mxu0 %v3784
      %4607 = vmatpush.msra.mxu0 %v3783
      %4608 = vmatpush.msra.mxu0 %v3782
      %4609 = vmatpush.msra.mxu0 %v3781
      %4610 = vmatpush.msra.mxu0 %v3780
      %4611 = vmatpush.msra.mxu0 %v3779
      %4612 = vmatpush.msra.mxu0 %v3778
      %4613 = vmatpush.msra.mxu0 %v3777
      %4614 = vmatpush.msra.mxu0 %v3776
      %4615 = vmatpush.msra.mxu0 %v3775
      %4616 = vmatpush.msra.mxu0 %v3774
      %4617 = vmatmul.f32.gmra.mxu0 %v3381
      %v4618 = vpop.f32.mrf.mxu0
      %v4619 = vadd.f32 %v4506, %v4618
      %4620 = vmatmul.f32.gmra.mxu0 %v3390
      %v4621 = vpop.f32.mrf.mxu0
      %v4622 = vadd.f32 %v4509, %v4621
      %4623 = vmatmul.f32.gmra.mxu0 %v3399
      %v4624 = vpop.f32.mrf.mxu0
      %v4625 = vadd.f32 %v4512, %v4624
      %4626 = vmatmul.f32.gmra.mxu0 %v3408
      %v4627 = vpop.f32.mrf.mxu0
      %v4628 = vadd.f32 %v4515, %v4627
      %4629 = vmatmul.f32.gmra.mxu0 %v3417
      %v4630 = vpop.f32.mrf.mxu0
      %v4631 = vadd.f32 %v4518, %v4630
      %4632 = vmatmul.f32.gmra.mxu0 %v3426
      %v4633 = vpop.f32.mrf.mxu0
      %v4634 = vadd.f32 %v4521, %v4633
      %4635 = vmatmul.f32.gmra.mxu0 %v3435
      %v4636 = vpop.f32.mrf.mxu0
      %v4637 = vadd.f32 %v4524, %v4636
      %4638 = vmatmul.f32.gmra.mxu0 %v3444
      %v4639 = vpop.f32.mrf.mxu0
      %v4640 = vadd.f32 %v4527, %v4639
      %4641 = vmatmul.f32.gmra.mxu0 %v3453
      %v4642 = vpop.f32.mrf.mxu0
      %v4643 = vadd.f32 %v4530, %v4642
      %4644 = vmatmul.f32.gmra.mxu0 %v3462
      %v4645 = vpop.f32.mrf.mxu0
      %v4646 = vadd.f32 %v4533, %v4645
      %4647 = vmatmul.f32.gmra.mxu0 %v3471
      %v4648 = vpop.f32.mrf.mxu0
      %v4649 = vadd.f32 %v4536, %v4648
      %4650 = vmatmul.f32.gmra.mxu0 %v3480
      %v4651 = vpop.f32.mrf.mxu0
      %v4652 = vadd.f32 %v4539, %v4651
      %4653 = vmatmul.f32.gmra.mxu0 %v3489
      %v4654 = vpop.f32.mrf.mxu0
      %v4655 = vadd.f32 %v4542, %v4654
      %4656 = vmatmul.f32.gmra.mxu0 %v3498
      %v4657 = vpop.f32.mrf.mxu0
      %v4658 = vadd.f32 %v4545, %v4657
      %4659 = vmatmul.f32.gmra.mxu0 %v3507
      %v4660 = vpop.f32.mrf.mxu0
      %v4661 = vadd.f32 %v4548, %v4660
      %4662 = vmatmul.f32.gmra.mxu0 %v3516
      %v4663 = vpop.f32.mrf.mxu0
      %v4664 = vadd.f32 %v4551, %v4663
      %4665 = vmatmul.f32.gmra.mxu0 %v3525
      %v4666 = vpop.f32.mrf.mxu0
      %v4667 = vadd.f32 %v4554, %v4666
      %4668 = vmatmul.f32.gmra.mxu0 %v3534
      %v4669 = vpop.f32.mrf.mxu0
      %v4670 = vadd.f32 %v4557, %v4669
      %4671 = vmatmul.f32.gmra.mxu0 %v3543
      %v4672 = vpop.f32.mrf.mxu0
      %v4673 = vadd.f32 %v4560, %v4672
      %4674 = vmatmul.f32.gmra.mxu0 %v3552
      %v4675 = vpop.f32.mrf.mxu0
      %v4676 = vadd.f32 %v4563, %v4675
      %4677 = vmatmul.f32.gmra.mxu0 %v3561
      %v4678 = vpop.f32.mrf.mxu0
      %v4679 = vadd.f32 %v4566, %v4678
      %4680 = vmatmul.f32.gmra.mxu0 %v3570
      %v4681 = vpop.f32.mrf.mxu0
      %v4682 = vadd.f32 %v4569, %v4681
      %4683 = vmatmul.f32.gmra.mxu0 %v3579
      %v4684 = vpop.f32.mrf.mxu0
      %v4685 = vadd.f32 %v4572, %v4684
      %4686 = vmatmul.f32.gmra.mxu0 %v3588
      %v4687 = vpop.f32.mrf.mxu0
      %v4688 = vadd.f32 %v4575, %v4687
      %4689 = vmatmul.f32.gmra.mxu0 %v3597
      %v4690 = vpop.f32.mrf.mxu0
      %v4691 = vadd.f32 %v4578, %v4690
      %4692 = vmatmul.f32.gmra.mxu0 %v3606
      %v4693 = vpop.f32.mrf.mxu0
      %v4694 = vadd.f32 %v4581, %v4693
      %4695 = vmatmul.f32.gmra.mxu0 %v3615
      %v4696 = vpop.f32.mrf.mxu0
      %v4697 = vadd.f32 %v4584, %v4696
      %4698 = vmatmul.f32.gmra.mxu0 %v3624
      %v4699 = vpop.f32.mrf.mxu0
      %v4700 = vadd.f32 %v4587, %v4699
      %4701 = vmatmul.f32.gmra.mxu0 %v3633
      %v4702 = vpop.f32.mrf.mxu0
      %v4703 = vadd.f32 %v4590, %v4702
      %4704 = vmatmul.f32.gmra.mxu0 %v3642
      %v4705 = vpop.f32.mrf.mxu0
      %v4706 = vadd.f32 %v4593, %v4705
      %4707 = vmatmul.f32.gmra.mxu0 %v3651
      %v4708 = vpop.f32.mrf.mxu0
      %v4709 = vadd.f32 %v4596, %v4708
      %4710 = vmatmul.f32.gmra.mxu0 %v3660
      %v4711 = vpop.f32.mrf.mxu0
      %v4712 = vadd.f32 %v4599, %v4711
      %4713 = vdwg.mxu0
      %4714 = vmatpush.msra.mxu0 %v3805
      %4715 = vmatpush.msra.mxu0 %v3804
      %4716 = vmatpush.msra.mxu0 %v3803
      %4717 = vmatpush.msra.mxu0 %v3802
      %4718 = vmatpush.msra.mxu0 %v3801
      %4719 = vmatpush.msra.mxu0 %v3800
      %4720 = vmatpush.msra.mxu0 %v3799
      %4721 = vmatpush.msra.mxu0 %v3798
      %4722 = vmatpush.msra.mxu0 %v3797
      %4723 = vmatpush.msra.mxu0 %v3796
      %4724 = vmatpush.msra.mxu0 %v3795
      %4725 = vmatpush.msra.mxu0 %v3794
      %4726 = vmatpush.msra.mxu0 %v3793
      %4727 = vmatpush.msra.mxu0 %v3792
      %4728 = vmatpush.msra.mxu0 %v3791
      %4729 = vmatpush.msra.mxu0 %v3790
      %4730 = vmatmul.f32.gmra.mxu0 %v3382
      %v4731 = vpop.f32.mrf.mxu0
      %v4732 = vadd.f32 %v4619, %v4731
      %4733 = vmatmul.f32.gmra.mxu0 %v3391
      %v4734 = vpop.f32.mrf.mxu0
      %v4735 = vadd.f32 %v4622, %v4734
      %4736 = vmatmul.f32.gmra.mxu0 %v3400
      %v4737 = vpop.f32.mrf.mxu0
      %v4738 = vadd.f32 %v4625, %v4737
      %4739 = vmatmul.f32.gmra.mxu0 %v3409
      %v4740 = vpop.f32.mrf.mxu0
      %v4741 = vadd.f32 %v4628, %v4740
      %4742 = vmatmul.f32.gmra.mxu0 %v3418
      %v4743 = vpop.f32.mrf.mxu0
      %v4744 = vadd.f32 %v4631, %v4743
      %4745 = vmatmul.f32.gmra.mxu0 %v3427
      %v4746 = vpop.f32.mrf.mxu0
      %v4747 = vadd.f32 %v4634, %v4746
      %4748 = vmatmul.f32.gmra.mxu0 %v3436
      %v4749 = vpop.f32.mrf.mxu0
      %v4750 = vadd.f32 %v4637, %v4749
      %4751 = vmatmul.f32.gmra.mxu0 %v3445
      %v4752 = vpop.f32.mrf.mxu0
      %v4753 = vadd.f32 %v4640, %v4752
      %4754 = vmatmul.f32.gmra.mxu0 %v3454
      %v4755 = vpop.f32.mrf.mxu0
      %v4756 = vadd.f32 %v4643, %v4755
      %4757 = vmatmul.f32.gmra.mxu0 %v3463
      %v4758 = vpop.f32.mrf.mxu0
      %v4759 = vadd.f32 %v4646, %v4758
      %4760 = vmatmul.f32.gmra.mxu0 %v3472
      %v4761 = vpop.f32.mrf.mxu0
      %v4762 = vadd.f32 %v4649, %v4761
      %4763 = vmatmul.f32.gmra.mxu0 %v3481
      %v4764 = vpop.f32.mrf.mxu0
      %v4765 = vadd.f32 %v4652, %v4764
      %4766 = vmatmul.f32.gmra.mxu0 %v3490
      %v4767 = vpop.f32.mrf.mxu0
      %v4768 = vadd.f32 %v4655, %v4767
      %4769 = vmatmul.f32.gmra.mxu0 %v3499
      %v4770 = vpop.f32.mrf.mxu0
      %v4771 = vadd.f32 %v4658, %v4770
      %4772 = vmatmul.f32.gmra.mxu0 %v3508
      %v4773 = vpop.f32.mrf.mxu0
      %v4774 = vadd.f32 %v4661, %v4773
      %4775 = vmatmul.f32.gmra.mxu0 %v3517
      %v4776 = vpop.f32.mrf.mxu0
      %v4777 = vadd.f32 %v4664, %v4776
      %4778 = vmatmul.f32.gmra.mxu0 %v3526
      %v4779 = vpop.f32.mrf.mxu0
      %v4780 = vadd.f32 %v4667, %v4779
      %4781 = vmatmul.f32.gmra.mxu0 %v3535
      %v4782 = vpop.f32.mrf.mxu0
      %v4783 = vadd.f32 %v4670, %v4782
      %4784 = vmatmul.f32.gmra.mxu0 %v3544
      %v4785 = vpop.f32.mrf.mxu0
      %v4786 = vadd.f32 %v4673, %v4785
      %4787 = vmatmul.f32.gmra.mxu0 %v3553
      %v4788 = vpop.f32.mrf.mxu0
      %v4789 = vadd.f32 %v4676, %v4788
      %4790 = vmatmul.f32.gmra.mxu0 %v3562
      %v4791 = vpop.f32.mrf.mxu0
      %v4792 = vadd.f32 %v4679, %v4791
      %4793 = vmatmul.f32.gmra.mxu0 %v3571
      %v4794 = vpop.f32.mrf.mxu0
      %v4795 = vadd.f32 %v4682, %v4794
      %4796 = vmatmul.f32.gmra.mxu0 %v3580
      %v4797 = vpop.f32.mrf.mxu0
      %v4798 = vadd.f32 %v4685, %v4797
      %4799 = vmatmul.f32.gmra.mxu0 %v3589
      %v4800 = vpop.f32.mrf.mxu0
      %v4801 = vadd.f32 %v4688, %v4800
      %4802 = vmatmul.f32.gmra.mxu0 %v3598
      %v4803 = vpop.f32.mrf.mxu0
      %v4804 = vadd.f32 %v4691, %v4803
      %4805 = vmatmul.f32.gmra.mxu0 %v3607
      %v4806 = vpop.f32.mrf.mxu0
      %v4807 = vadd.f32 %v4694, %v4806
      %4808 = vmatmul.f32.gmra.mxu0 %v3616
      %v4809 = vpop.f32.mrf.mxu0
      %v4810 = vadd.f32 %v4697, %v4809
      %4811 = vmatmul.f32.gmra.mxu0 %v3625
      %v4812 = vpop.f32.mrf.mxu0
      %v4813 = vadd.f32 %v4700, %v4812
      %4814 = vmatmul.f32.gmra.mxu0 %v3634
      %v4815 = vpop.f32.mrf.mxu0
      %v4816 = vadd.f32 %v4703, %v4815
      %4817 = vmatmul.f32.gmra.mxu0 %v3643
      %v4818 = vpop.f32.mrf.mxu0
      %v4819 = vadd.f32 %v4706, %v4818
      %4820 = vmatmul.f32.gmra.mxu0 %v3652
      %v4821 = vpop.f32.mrf.mxu0
      %v4822 = vadd.f32 %v4709, %v4821
      %4823 = vmatmul.f32.gmra.mxu0 %v3661
      %v4824 = vpop.f32.mrf.mxu0
      %v4825 = vadd.f32 %v4712, %v4824
      %4826 = vdwg.mxu0
      %v4827 = vmax.f32 %v4732, 0.0
      %v4828 = vmax.f32 %v4735, 0.0
      %v4829 = vmax.f32 %v4738, 0.0
      %v4830 = vmax.f32 %v4741, 0.0
      %v4831 = vmax.f32 %v4744, 0.0
      %v4832 = vmax.f32 %v4747, 0.0
      %v4833 = vmax.f32 %v4750, 0.0
      %v4834 = vmax.f32 %v4753, 0.0
      %v4835 = vmax.f32 %v4756, 0.0
      %v4836 = vmax.f32 %v4759, 0.0
      %v4837 = vmax.f32 %v4762, 0.0
      %v4838 = vmax.f32 %v4765, 0.0
      %v4839 = vmax.f32 %v4768, 0.0
      %v4840 = vmax.f32 %v4771, 0.0
      %v4841 = vmax.f32 %v4774, 0.0
      %v4842 = vmax.f32 %v4777, 0.0
      %v4843 = vmax.f32 %v4780, 0.0
      %v4844 = vmax.f32 %v4783, 0.0
      %v4845 = vmax.f32 %v4786, 0.0
      %v4846 = vmax.f32 %v4789, 0.0
      %v4847 = vmax.f32 %v4792, 0.0
      %v4848 = vmax.f32 %v4795, 0.0
      %v4849 = vmax.f32 %v4798, 0.0
      %v4850 = vmax.f32 %v4801, 0.0
      %v4851 = vmax.f32 %v4804, 0.0
      %v4852 = vmax.f32 %v4807, 0.0
      %v4853 = vmax.f32 %v4810, 0.0
      %v4854 = vmax.f32 %v4813, 0.0
      %v4855 = vmax.f32 %v4816, 0.0
      %v4856 = vmax.f32 %v4819, 0.0
      %v4857 = vmax.f32 %v4822, 0.0
      %v4858 = vmax.f32 %v4825, 0.0
      %4859 = vxpose.xlu0.b32.start [1/16] %v4827, 128
      %4860 = vxpose.xlu0.b32.cont [2/16] %v4828, 128
      %4861 = vxpose.xlu0.b32.cont [3/16] %v4829, 128
      %4862 = vxpose.xlu0.b32.cont [4/16] %v4830, 128
      %4863 = vxpose.xlu0.b32.cont [5/16] %v4831, 128
      %4864 = vxpose.xlu0.b32.cont [6/16] %v4832, 128
      %4865 = vxpose.xlu0.b32.cont [7/16] %v4833, 128
      %4866 = vxpose.xlu0.b32.cont [8/16] %v4834, 128
      %4867 = vxpose.xlu0.b32.cont [9/16] %v4835, 128
      %4868 = vxpose.xlu0.b32.cont [10/16] %v4836, 128
      %4869 = vxpose.xlu0.b32.cont [11/16] %v4837, 128
      %4870 = vxpose.xlu0.b32.cont [12/16] %v4838, 128
      %4871 = vxpose.xlu0.b32.cont [13/16] %v4839, 128
      %4872 = vxpose.xlu0.b32.cont [14/16] %v4840, 128
      %4873 = vxpose.xlu0.b32.cont [15/16] %v4841, 128
      %4874 = vxpose.xlu0.b32.end [16/16] %v4842, 128
      %v4875 = vpop.trf.xlu0
      %v4876 = vpop.trf.xlu0
      %v4877 = vpop.trf.xlu0
      %v4878 = vpop.trf.xlu0
      %v4879 = vpop.trf.xlu0
      %v4880 = vpop.trf.xlu0
      %v4881 = vpop.trf.xlu0
      %v4882 = vpop.trf.xlu0
      %v4883 = vpop.trf.xlu0
      %v4884 = vpop.trf.xlu0
      %v4885 = vpop.trf.xlu0
      %v4886 = vpop.trf.xlu0
      %v4887 = vpop.trf.xlu0
      %v4888 = vpop.trf.xlu0
      %v4889 = vpop.trf.xlu0
      %v4890 = vpop.trf.xlu0
      %4891 = vxpose.xlu0.b32.start [1/16] %v4843, 128
      %4892 = vxpose.xlu0.b32.cont [2/16] %v4844, 128
      %4893 = vxpose.xlu0.b32.cont [3/16] %v4845, 128
      %4894 = vxpose.xlu0.b32.cont [4/16] %v4846, 128
      %4895 = vxpose.xlu0.b32.cont [5/16] %v4847, 128
      %4896 = vxpose.xlu0.b32.cont [6/16] %v4848, 128
      %4897 = vxpose.xlu0.b32.cont [7/16] %v4849, 128
      %4898 = vxpose.xlu0.b32.cont [8/16] %v4850, 128
      %4899 = vxpose.xlu0.b32.cont [9/16] %v4851, 128
      %4900 = vxpose.xlu0.b32.cont [10/16] %v4852, 128
      %4901 = vxpose.xlu0.b32.cont [11/16] %v4853, 128
      %4902 = vxpose.xlu0.b32.cont [12/16] %v4854, 128
      %4903 = vxpose.xlu0.b32.cont [13/16] %v4855, 128
      %4904 = vxpose.xlu0.b32.cont [14/16] %v4856, 128
      %4905 = vxpose.xlu0.b32.cont [15/16] %v4857, 128
      %4906 = vxpose.xlu0.b32.end [16/16] %v4858, 128
      %v4907 = vpop.trf.xlu0
      %v4908 = vpop.trf.xlu0
      %v4909 = vpop.trf.xlu0
      %v4910 = vpop.trf.xlu0
      %v4911 = vpop.trf.xlu0
      %v4912 = vpop.trf.xlu0
      %v4913 = vpop.trf.xlu0
      %v4914 = vpop.trf.xlu0
      %v4915 = vpop.trf.xlu0
      %v4916 = vpop.trf.xlu0
      %v4917 = vpop.trf.xlu0
      %v4918 = vpop.trf.xlu0
      %v4919 = vpop.trf.xlu0
      %v4920 = vpop.trf.xlu0
      %v4921 = vpop.trf.xlu0
      %v4922 = vpop.trf.xlu0
      %v4925 = vrot.slane %v4907, 4
      %vm4926 = vcmask 1043456
      %v4927 = vsel %vm4926, %v4875, %v4925
      %4929 = vst [vmem:[%s278] sm:$0x77] %v4927
      %p4930 = scmp.lt.s32.totalorder %s18, 1
      %s4931 = scalar_select %p4930, %s18, 1
      %s4932 = smul.addr %s4931, 2
      %s4933 = smul.addr %s4932, 4
      %s4934 = scalar_lea.vmem %s7, %s4933
      // Predicated region
      $region49: #{net_forward.1} parent=47 // pred_check
        %p4935 = pneg %p188
      $region50: #{net_forward.1} parent=47 // pred_check_branch
        %4937 = sbr.rel (%p4935) target = $region52
      $region51: #{net_forward.1} parent=47 // pred_region
        _
      $region52: #{net_forward.1} parent=47 // pred_fallthru
        _
    $region48: #{net_forward.1} parent=5 // pred_fallthru
      _
    %p4938 = scmp.le.s32.totalorder 2, %s13
    // Predicated region
    $region53: #{net_forward.1} parent=5 // pred_check
      %p4939 = pneg %p4938
    $region54: #{net_forward.1} parent=5 // pred_check_branch
      %4941 = sbr.rel (%p4939) target = $region56
    $region55: #{net_forward.1} parent=5 // pred_region
      %s4942 = ssub.s32 %s13, 2
      // Predicated region
      $region57: #{net_forward.1} parent=55 // pred_check
        %p4943 = pneg %p194
      $region58: #{net_forward.1} parent=55 // pred_check_branch
        %4945 = sbr.rel (%p4943) target = $region60
      $region59: #{net_forward.1} parent=55 // pred_region
        %p4946 = scmp.lt.s32.totalorder %s19, 1
        %s4947 = scalar_select %p4946, %s19, 1
        %s4948 = smul.addr %s4947, 2
        %s4949 = smul.addr %s4948, 4
        %s4950 = scalar_lea.vmem %s7, %s4949
      $region60: #{net_forward.1} parent=55 // pred_fallthru
        _
    $region56: #{net_forward.1} parent=5 // pred_fallthru
      _
  $region6: #{net_forward.1} parent=0 // loop_footer
    %s17 = sadd.s32 1, %s13
  $region7: #{net_forward.1} parent=0 // loop_footer_branch
    %12 = sbr.rel target = $region3
  $region8: #{net_forward.1} parent=0 // loop_exit
    _

</llo_original>
